<compile_context>
chip_gen: v7x
topology: tpu7x:2x2x1
jax: 0.10.0
libtpu: 0.0.40
codegen_flags: <defaults>
</compile_context>

<pallas_src>
import functools

import jax
import jax.numpy as jnp
from jax import lax
from jax.experimental import pallas as pl
from jax.experimental.pallas import tpu as pltpu


NEG_BIG = 1e30
_VMEM = pl.BlockSpec(memory_space=pltpu.MemorySpace.VMEM)


# ----------------------------- Pallas kernel -------------------------------

def _model_ppi_kernel(x_ref, adj_ref,
                      w1_ref, a1_ref, b1_ref,
                      w2_ref, a2_ref, b2_ref,
                      w3_ref, a3_ref, b3_ref,
                      out0_ref, out1_ref,
                      h_scr,
                      *, heads, hd, num_classes, negative_slope):
    """Fused 3-layer GAT + pairwise softmax.

    x_ref:   (N, Fin) f32 node features
    adj_ref: (N, N)   bf16 {0,1} dst x src adjacency (self-loops included)
    w*_ref:  (Fin_l, heads_l*hd_l)   bf16 linear weights
    a*_ref:  (heads_l*hd_l, 2*heads_l) bf16 block-diag attention matrix
             (col h = a_dst_h, col heads_l+h = a_src_h)
    b*_ref:  (1, out_dim_l) f32 bias rows
    out0/out1: (N, C) f32 pair softmax (index 0 / index 1 of each pair)
    h_scr:   (N, heads*hd) f32 scratch reused by conv1 and conv2
    """
    # Additive mask shared by all layers/heads: 0 on edges, -1e30 elsewhere.
    adj = adj_ref[...].astype(jnp.float32)
    add_mask = (adj - 1.0) * jnp.float32(NEG_BIG)                 # (N, N)

    def gat_layer(x_f32, w_ref, a_ref, n_heads, head_dim, out_scr):
        # Linear transform for all heads at once (bf16 MXU, f32 accumulate).
        h_all = jnp.dot(x_f32.astype(jnp.bfloat16), w_ref[...],
                        preferred_element_type=jnp.float32)       # (N, H*hd)
        hb = h_all.astype(jnp.bfloat16)
        # Batched attention logits: E[:, h] = e_dst_h ; E[:, H+h] = e_src_h.
        e = jnp.dot(hb, a_ref[...],
                    preferred_element_type=jnp.float32)           # (N, 2H)
        e_dst = e[:, :n_heads]                                    # (N, H)
        e_src_t = e[:, n_heads:].T                                # (H, N) one XLU transpose

        last = None
        for h in range(n_heads):                                  # static, small
            raw = e_dst[:, h:h + 1] + e_src_t[h:h + 1, :]         # (Ndst, Nsrc)
            s = jnp.maximum(raw, negative_slope * raw)            # LeakyReLU(0.2)
            s = s + add_mask                                      # mask non-edges
            s = s - jnp.max(s, axis=1, keepdims=True)
            p = jnp.exp(s)                                        # masked -> exactly 0
            inv = pl.reciprocal(jnp.sum(p, axis=1, keepdims=True), approx=True)
            alpha = (p * inv).astype(jnp.bfloat16)                # (N, N)
            o_h = jnp.dot(alpha, hb[:, h * head_dim:(h + 1) * head_dim],
                          preferred_element_type=jnp.float32)     # (N, hd)
            if out_scr is not None:
                out_scr[:, h * head_dim:(h + 1) * head_dim] = o_h
            else:
                last = o_h
        if out_scr is not None:
            return out_scr[...]
        return last                                               # n_heads == 1

    x = x_ref[...].astype(jnp.float32)

    # conv1 (+bias, ReLU); dropout = identity in eval mode.
    h1 = gat_layer(x, w1_ref, a1_ref, heads, hd, h_scr)
    h1 = jnp.maximum(h1 + b1_ref[...], 0.0)
    # conv2 (+bias, ReLU); scratch is safely reused (read happens before writes).
    h2 = gat_layer(h1, w2_ref, a2_ref, heads, hd, h_scr)
    h2 = jnp.maximum(h2 + b2_ref[...], 0.0)
    # conv3: heads=1, concat=False (mean over a single head == identity).
    z = gat_layer(h2, w3_ref, a3_ref, 1, 2 * num_classes, None)
    z = jnp.maximum(z + b3_ref[...], 0.0)                         # (N, 2C) permuted layout

    # Fused pairwise softmax. conv3 columns were permuted in glue code to
    # [pair-index-0 classes ... | pair-index-1 classes ...], so the pair
    # members live in two contiguous lane slabs.
    left = z[:, :num_classes]
    right = z[:, num_classes:]
    m = jnp.maximum(left, right)
    el = jnp.exp(left - m)
    er = jnp.exp(right - m)
    denom = el + er
    out0_ref[...] = el / denom
    out1_ref[...] = er / denom


# ------------------------------ JAX glue ------------------------------------

def init_gat_params(key, in_dim, out_per_head, heads, concat):
    """Deterministic glorot-ish init; shapes mirror PyG GATConv parameters."""
    k_w, k_s, k_d, k_b = jax.random.split(key, 4)
    out_dim = heads * out_per_head if concat else out_per_head
    scale_w = jnp.sqrt(2.0 / (in_dim + heads * out_per_head))
    w = scale_w * jax.random.normal(k_w, (in_dim, heads * out_per_head),
                                    jnp.float32)
    scale_a = jnp.sqrt(2.0 / (1 + out_per_head))
    a_src = scale_a * jax.random.normal(k_s, (heads, out_per_head), jnp.float32)
    a_dst = scale_a * jax.random.normal(k_d, (heads, out_per_head), jnp.float32)
    bias = 0.01 * jax.random.normal(k_b, (out_dim,), jnp.float32)
    return dict(w=w, a_src=a_src, a_dst=a_dst, bias=bias)


def pack_layer(p, heads, out_per_head, col_perm=None):
    """Kernel operands: bf16 W, bf16 block-diag attention matrix A, f32 bias row."""
    hd = out_per_head
    w = p["w"]
    bias = p["bias"]
    a = jnp.zeros((heads * hd, 2 * heads), jnp.float32)
    for h in range(heads):
        a = a.at[h * hd:(h + 1) * hd, h].set(p["a_dst"][h])
        a = a.at[h * hd:(h + 1) * hd, heads + h].set(p["a_src"][h])
    if col_perm is not None:
        # Permute output features: columns of W, rows of A, bias entries.
        w = w[:, col_perm]
        a = a[col_perm, :]
        bias = bias[col_perm]
    return (w.astype(jnp.bfloat16), a.astype(jnp.bfloat16),
            bias.reshape(1, -1).astype(jnp.float32))


def model_ppi_forward(x, adj_bf16, kparams, *, num_classes, hdim=64, n_heads=8):
    n = x.shape[0]
    hd = hdim // n_heads
    w1, a1, b1 = kparams["conv1"]
    w2, a2, b2 = kparams["conv2"]
    w3, a3, b3 = kparams["conv3"]
    kernel = functools.partial(_model_ppi_kernel, heads=n_heads, hd=hd,
                               num_classes=num_classes, negative_slope=0.2)
    out0, out1 = pl.pallas_call(
        kernel,
        out_shape=(jax.ShapeDtypeStruct((n, num_classes), jnp.float32),
                   jax.ShapeDtypeStruct((n, num_classes), jnp.float32)),
        in_specs=[_VMEM] * 11,
        out_specs=(_VMEM, _VMEM),
        scratch_shapes=[pltpu.VMEM((n, hdim), jnp.float32)],
        compiler_params=pltpu.CompilerParams(
            vmem_limit_bytes=32 * 1024 * 1024),
    )(x, adj_bf16, w1, a1, b1, w2, a2, b2, w3, a3, b3)
    # (N, C) index-0 probs + (N, C) index-1 probs -> (N, C, 2), matching
    # x.reshape(N, -1, 2) followed by softmax(dim=-1) in the reference.
    return jnp.stack([out0, out1], axis=-1)


# ---------------------------------- main -------------------------------------

if __name__ == "__main__":
    NUM_FEATURES = 16
    NUM_CLASSES = 4
    HDIM = 64
    N_HEADS = 8
    N_NODES = 16
    N_EDGES = 40

    key = jax.random.PRNGKey(0)
    k_x, k_src, k_dst, k1, k2, k3 = jax.random.split(key, 6)

    x = jax.random.normal(k_x, (N_NODES, NUM_FEATURES), jnp.float32)

    # edge_index (2, E): row 0 = source nodes, row 1 = destination nodes.
    src = jax.random.randint(k_src, (N_EDGES,), 0, N_NODES)
    dst = jax.random.randint(k_dst, (N_EDGES,), 0, N_NODES)
    edge_index = jnp.stack([src, dst])

    # Dense adjacency mask (dst x src) + self loops (GATConv default),
    # stored as bf16 {0,1} (exact) to halve the dominant DMA / VMEM footprint.
    adj = jnp.zeros((N_NODES, N_NODES), jnp.float32)
    adj = adj.at[edge_index[1], edge_index[0]].set(1.0)
    adj = jnp.maximum(adj, jnp.eye(N_NODES, dtype=jnp.float32))
    adj_bf16 = adj.astype(jnp.bfloat16)

    params = {
        "conv1": init_gat_params(k1, NUM_FEATURES, HDIM // N_HEADS,
                                 N_HEADS, concat=True),
        "conv2": init_gat_params(k2, HDIM, HDIM // N_HEADS,
                                 N_HEADS, concat=True),
        "conv3": init_gat_params(k3, HDIM, NUM_CLASSES * 2,
                                 1, concat=False),
    }

    # Permute conv3's output features to [even columns | odd columns] so the
    # pairwise softmax inside the kernel works on two contiguous lane slabs.
    perm = jnp.array([2 * c for c in range(NUM_CLASSES)] +
                     [2 * c + 1 for c in range(NUM_CLASSES)], jnp.int32)
    kparams = {
        "conv1": pack_layer(params["conv1"], N_HEADS, HDIM // N_HEADS),
        "conv2": pack_layer(params["conv2"], N_HEADS, HDIM // N_HEADS),
        "conv3": pack_layer(params["conv3"], 1, NUM_CLASSES * 2, col_perm=perm),
    }

    out = model_ppi_forward(x, adj_bf16, kparams,
                            num_classes=NUM_CLASSES, hdim=HDIM,
                            n_heads=N_HEADS)
    out = jax.block_until_ready(out)

    assert out.shape == (N_NODES, NUM_CLASSES, 2)
    assert bool(jnp.allclose(out.sum(axis=-1), 1.0, atol=1e-5))
    print("KERNEL_OK")
</pallas_src>

<mosaic_0001>
module attributes {stable_mosaic.version = 11 : i64} {
  func.func @_model_ppi_kernel(%arg0: memref<16x16xf32, #tpu.memory_space<vmem>>, %arg1: memref<16x16xbf16, #tpu.memory_space<vmem>>, %arg2: memref<16x64xbf16, #tpu.memory_space<vmem>>, %arg3: memref<64x16xbf16, #tpu.memory_space<vmem>>, %arg4: memref<1x64xf32, #tpu.memory_space<vmem>>, %arg5: memref<64x64xbf16, #tpu.memory_space<vmem>>, %arg6: memref<64x16xbf16, #tpu.memory_space<vmem>>, %arg7: memref<1x64xf32, #tpu.memory_space<vmem>>, %arg8: memref<64x8xbf16, #tpu.memory_space<vmem>>, %arg9: memref<8x2xbf16, #tpu.memory_space<vmem>>, %arg10: memref<1x8xf32, #tpu.memory_space<vmem>>, %arg11: memref<16x4xf32, #tpu.memory_space<vmem>>, %arg12: memref<16x4xf32, #tpu.memory_space<vmem>>, %arg13: memref<16x64xf32, #tpu.memory_space<vmem>>) attributes {dimension_semantics = [], scalar_prefetch = 0 : i64, scratch_operands = 1 : i64, tpu.core_type = #tpu.core_type<tc>} {
    %c0 = arith.constant 0 : index
    %c0_0 = arith.constant 0 : index
    %0 = vector.load %arg1[%c0, %c0_0] : memref<16x16xbf16, #tpu.memory_space<vmem>>, vector<16x16xbf16>
    %1 = arith.extf %0 : vector<16x16xbf16> to vector<16x16xf32>
    %cst = arith.constant 1.000000e+00 : f32
    %2 = vector.broadcast %cst : f32 to vector<16x16xf32>
    %3 = arith.subf %1, %2 : vector<16x16xf32>
    %cst_1 = arith.constant 1.000000e+30 : f32
    %4 = vector.broadcast %cst_1 : f32 to vector<16x16xf32>
    %5 = arith.mulf %3, %4 : vector<16x16xf32>
    %c0_2 = arith.constant 0 : index
    %c0_3 = arith.constant 0 : index
    %6 = vector.load %arg0[%c0_2, %c0_3] : memref<16x16xf32, #tpu.memory_space<vmem>>, vector<16x16xf32>
    %7 = arith.truncf %6 : vector<16x16xf32> to vector<16x16xbf16>
    %c0_4 = arith.constant 0 : index
    %c0_5 = arith.constant 0 : index
    %8 = vector.load %arg2[%c0_4, %c0_5] : memref<16x64xbf16, #tpu.memory_space<vmem>>, vector<16x64xbf16>
    %cst_6 = arith.constant dense<0.000000e+00> : vector<16x64xf32>
    %9 = tpu.matmul %7, %8, %cst_6 {dimension_numbers = #tpu.dot_dimension_numbers<[1], [0], [0], [1], [0, 0, 1, 1], [], []>} : vector<16x16xbf16>, vector<16x64xbf16>, vector<16x64xf32> -> vector<16x64xf32>
    %10 = arith.truncf %9 : vector<16x64xf32> to vector<16x64xbf16>
    %c0_7 = arith.constant 0 : index
    %c0_8 = arith.constant 0 : index
    %11 = vector.load %arg3[%c0_7, %c0_8] : memref<64x16xbf16, #tpu.memory_space<vmem>>, vector<64x16xbf16>
    %cst_9 = arith.constant dense<0.000000e+00> : vector<16x16xf32>
    %12 = tpu.matmul %10, %11, %cst_9 {dimension_numbers = #tpu.dot_dimension_numbers<[1], [0], [0], [1], [0, 0, 1, 1], [], []>} : vector<16x64xbf16>, vector<64x16xbf16>, vector<16x16xf32> -> vector<16x16xf32>
    %13 = vector.extract_strided_slice %12 {offsets = [0, 0], sizes = [16, 8], strides = [1, 1]} : vector<16x16xf32> to vector<16x8xf32>
    %14 = vector.extract_strided_slice %12 {offsets = [0, 8], sizes = [16, 8], strides = [1, 1]} : vector<16x16xf32> to vector<16x8xf32>
    %15 = tpu.transpose %14, [1, 0] : vector<16x8xf32> -> vector<8x16xf32>
    %16 = vector.extract_strided_slice %13 {offsets = [0, 0], sizes = [16, 1], strides = [1, 1]} : vector<16x8xf32> to vector<16x1xf32>
    %17 = vector.extract_strided_slice %15 {offsets = [0, 0], sizes = [1, 16], strides = [1, 1]} : vector<8x16xf32> to vector<1x16xf32>
    %18 = vector.broadcast %16 : vector<16x1xf32> to vector<16x16xf32>
    %19 = vector.broadcast %17 : vector<1x16xf32> to vector<16x16xf32>
    %20 = arith.addf %18, %19 : vector<16x16xf32>
    %cst_10 = arith.constant 2.000000e-01 : f32
    %21 = vector.broadcast %cst_10 : f32 to vector<16x16xf32>
    %22 = arith.mulf %21, %20 : vector<16x16xf32>
    %23 = arith.maximumf %20, %22 : vector<16x16xf32>
    %24 = arith.addf %23, %5 : vector<16x16xf32>
    %cst_11 = arith.constant dense<0xFF800000> : vector<16xf32>
    %25 = vector.multi_reduction <maximumf>, %24, %cst_11 [1] : vector<16x16xf32> to vector<16xf32>
    %26 = vector.shape_cast %25 : vector<16xf32> to vector<16x1xf32>
    %27 = vector.broadcast %26 : vector<16x1xf32> to vector<16x16xf32>
    %28 = arith.subf %24, %27 : vector<16x16xf32>
    %29 = math.exp %28 : vector<16x16xf32>
    %cst_12 = arith.constant dense<0.000000e+00> : vector<16xf32>
    %30 = vector.multi_reduction <add>, %29, %cst_12 [1] : vector<16x16xf32> to vector<16xf32>
    %31 = vector.shape_cast %30 : vector<16xf32> to vector<16x1xf32>
    %32 = tpu.reciprocal %31 {approx = true} : vector<16x1xf32> -> vector<16x1xf32>
    %33 = vector.broadcast %32 : vector<16x1xf32> to vector<16x16xf32>
    %34 = arith.mulf %29, %33 : vector<16x16xf32>
    %35 = arith.truncf %34 : vector<16x16xf32> to vector<16x16xbf16>
    %36 = vector.extract_strided_slice %10 {offsets = [0, 0], sizes = [16, 8], strides = [1, 1]} : vector<16x64xbf16> to vector<16x8xbf16>
    %cst_13 = arith.constant dense<0.000000e+00> : vector<16x8xf32>
    %37 = tpu.matmul %35, %36, %cst_13 {dimension_numbers = #tpu.dot_dimension_numbers<[1], [0], [0], [1], [0, 0, 1, 1], [], []>} : vector<16x16xbf16>, vector<16x8xbf16>, vector<16x8xf32> -> vector<16x8xf32>
    %c0_14 = arith.constant 0 : index
    %c0_15 = arith.constant 0 : index
    %38 = vector.load %arg13[%c0_14, %c0_15] : memref<16x64xf32, #tpu.memory_space<vmem>>, vector<16x8xf32>
    tpu.vector_store %arg13[%c0_14, %c0_15], %37 {strides = array<i32>} : memref<16x64xf32, #tpu.memory_space<vmem>>, vector<16x8xf32>,
    %39 = vector.extract_strided_slice %13 {offsets = [0, 1], sizes = [16, 1], strides = [1, 1]} : vector<16x8xf32> to vector<16x1xf32>
    %40 = vector.extract_strided_slice %15 {offsets = [1, 0], sizes = [1, 16], strides = [1, 1]} : vector<8x16xf32> to vector<1x16xf32>
    %41 = vector.broadcast %39 : vector<16x1xf32> to vector<16x16xf32>
    %42 = vector.broadcast %40 : vector<1x16xf32> to vector<16x16xf32>
    %43 = arith.addf %41, %42 : vector<16x16xf32>
    %cst_16 = arith.constant 2.000000e-01 : f32
    %44 = vector.broadcast %cst_16 : f32 to vector<16x16xf32>
    %45 = arith.mulf %44, %43 : vector<16x16xf32>
    %46 = arith.maximumf %43, %45 : vector<16x16xf32>
    %47 = arith.addf %46, %5 : vector<16x16xf32>
    %cst_17 = arith.constant dense<0xFF800000> : vector<16xf32>
    %48 = vector.multi_reduction <maximumf>, %47, %cst_17 [1] : vector<16x16xf32> to vector<16xf32>
    %49 = vector.shape_cast %48 : vector<16xf32> to vector<16x1xf32>
    %50 = vector.broadcast %49 : vector<16x1xf32> to vector<16x16xf32>
    %51 = arith.subf %47, %50 : vector<16x16xf32>
    %52 = math.exp %51 : vector<16x16xf32>
    %cst_18 = arith.constant dense<0.000000e+00> : vector<16xf32>
    %53 = vector.multi_reduction <add>, %52, %cst_18 [1] : vector<16x16xf32> to vector<16xf32>
    %54 = vector.shape_cast %53 : vector<16xf32> to vector<16x1xf32>
    %55 = tpu.reciprocal %54 {approx = true} : vector<16x1xf32> -> vector<16x1xf32>
    %56 = vector.broadcast %55 : vector<16x1xf32> to vector<16x16xf32>
    %57 = arith.mulf %52, %56 : vector<16x16xf32>
    %58 = arith.truncf %57 : vector<16x16xf32> to vector<16x16xbf16>
    %59 = vector.extract_strided_slice %10 {offsets = [0, 8], sizes = [16, 8], strides = [1, 1]} : vector<16x64xbf16> to vector<16x8xbf16>
    %cst_19 = arith.constant dense<0.000000e+00> : vector<16x8xf32>
    %60 = tpu.matmul %58, %59, %cst_19 {dimension_numbers = #tpu.dot_dimension_numbers<[1], [0], [0], [1], [0, 0, 1, 1], [], []>} : vector<16x16xbf16>, vector<16x8xbf16>, vector<16x8xf32> -> vector<16x8xf32>
    %c0_20 = arith.constant 0 : index
    %c8 = arith.constant 8 : index
    %61 = vector.load %arg13[%c0_20, %c8] : memref<16x64xf32, #tpu.memory_space<vmem>>, vector<16x8xf32>
    tpu.vector_store %arg13[%c0_20, %c8], %60 {strides = array<i32>} : memref<16x64xf32, #tpu.memory_space<vmem>>, vector<16x8xf32>,
    %62 = vector.extract_strided_slice %13 {offsets = [0, 2], sizes = [16, 1], strides = [1, 1]} : vector<16x8xf32> to vector<16x1xf32>
    %63 = vector.extract_strided_slice %15 {offsets = [2, 0], sizes = [1, 16], strides = [1, 1]} : vector<8x16xf32> to vector<1x16xf32>
    %64 = vector.broadcast %62 : vector<16x1xf32> to vector<16x16xf32>
    %65 = vector.broadcast %63 : vector<1x16xf32> to vector<16x16xf32>
    %66 = arith.addf %64, %65 : vector<16x16xf32>
    %cst_21 = arith.constant 2.000000e-01 : f32
    %67 = vector.broadcast %cst_21 : f32 to vector<16x16xf32>
    %68 = arith.mulf %67, %66 : vector<16x16xf32>
    %69 = arith.maximumf %66, %68 : vector<16x16xf32>
    %70 = arith.addf %69, %5 : vector<16x16xf32>
    %cst_22 = arith.constant dense<0xFF800000> : vector<16xf32>
    %71 = vector.multi_reduction <maximumf>, %70, %cst_22 [1] : vector<16x16xf32> to vector<16xf32>
    %72 = vector.shape_cast %71 : vector<16xf32> to vector<16x1xf32>
    %73 = vector.broadcast %72 : vector<16x1xf32> to vector<16x16xf32>
    %74 = arith.subf %70, %73 : vector<16x16xf32>
    %75 = math.exp %74 : vector<16x16xf32>
    %cst_23 = arith.constant dense<0.000000e+00> : vector<16xf32>
    %76 = vector.multi_reduction <add>, %75, %cst_23 [1] : vector<16x16xf32> to vector<16xf32>
    %77 = vector.shape_cast %76 : vector<16xf32> to vector<16x1xf32>
    %78 = tpu.reciprocal %77 {approx = true} : vector<16x1xf32> -> vector<16x1xf32>
    %79 = vector.broadcast %78 : vector<16x1xf32> to vector<16x16xf32>
    %80 = arith.mulf %75, %79 : vector<16x16xf32>
    %81 = arith.truncf %80 : vector<16x16xf32> to vector<16x16xbf16>
    %82 = vector.extract_strided_slice %10 {offsets = [0, 16], sizes = [16, 8], strides = [1, 1]} : vector<16x64xbf16> to vector<16x8xbf16>
    %cst_24 = arith.constant dense<0.000000e+00> : vector<16x8xf32>
    %83 = tpu.matmul %81, %82, %cst_24 {dimension_numbers = #tpu.dot_dimension_numbers<[1], [0], [0], [1], [0, 0, 1, 1], [], []>} : vector<16x16xbf16>, vector<16x8xbf16>, vector<16x8xf32> -> vector<16x8xf32>
    %c0_25 = arith.constant 0 : index
    %c16 = arith.constant 16 : index
    %84 = vector.load %arg13[%c0_25, %c16] : memref<16x64xf32, #tpu.memory_space<vmem>>, vector<16x8xf32>
    tpu.vector_store %arg13[%c0_25, %c16], %83 {strides = array<i32>} : memref<16x64xf32, #tpu.memory_space<vmem>>, vector<16x8xf32>,
    %85 = vector.extract_strided_slice %13 {offsets = [0, 3], sizes = [16, 1], strides = [1, 1]} : vector<16x8xf32> to vector<16x1xf32>
    %86 = vector.extract_strided_slice %15 {offsets = [3, 0], sizes = [1, 16], strides = [1, 1]} : vector<8x16xf32> to vector<1x16xf32>
    %87 = vector.broadcast %85 : vector<16x1xf32> to vector<16x16xf32>
    %88 = vector.broadcast %86 : vector<1x16xf32> to vector<16x16xf32>
    %89 = arith.addf %87, %88 : vector<16x16xf32>
    %cst_26 = arith.constant 2.000000e-01 : f32
    %90 = vector.broadcast %cst_26 : f32 to vector<16x16xf32>
    %91 = arith.mulf %90, %89 : vector<16x16xf32>
    %92 = arith.maximumf %89, %91 : vector<16x16xf32>
    %93 = arith.addf %92, %5 : vector<16x16xf32>
    %cst_27 = arith.constant dense<0xFF800000> : vector<16xf32>
    %94 = vector.multi_reduction <maximumf>, %93, %cst_27 [1] : vector<16x16xf32> to vector<16xf32>
    %95 = vector.shape_cast %94 : vector<16xf32> to vector<16x1xf32>
    %96 = vector.broadcast %95 : vector<16x1xf32> to vector<16x16xf32>
    %97 = arith.subf %93, %96 : vector<16x16xf32>
    %98 = math.exp %97 : vector<16x16xf32>
    %cst_28 = arith.constant dense<0.000000e+00> : vector<16xf32>
    %99 = vector.multi_reduction <add>, %98, %cst_28 [1] : vector<16x16xf32> to vector<16xf32>
    %100 = vector.shape_cast %99 : vector<16xf32> to vector<16x1xf32>
    %101 = tpu.reciprocal %100 {approx = true} : vector<16x1xf32> -> vector<16x1xf32>
    %102 = vector.broadcast %101 : vector<16x1xf32> to vector<16x16xf32>
    %103 = arith.mulf %98, %102 : vector<16x16xf32>
    %104 = arith.truncf %103 : vector<16x16xf32> to vector<16x16xbf16>
    %105 = vector.extract_strided_slice %10 {offsets = [0, 24], sizes = [16, 8], strides = [1, 1]} : vector<16x64xbf16> to vector<16x8xbf16>
    %cst_29 = arith.constant dense<0.000000e+00> : vector<16x8xf32>
    %106 = tpu.matmul %104, %105, %cst_29 {dimension_numbers = #tpu.dot_dimension_numbers<[1], [0], [0], [1], [0, 0, 1, 1], [], []>} : vector<16x16xbf16>, vector<16x8xbf16>, vector<16x8xf32> -> vector<16x8xf32>
    %c0_30 = arith.constant 0 : index
    %c24 = arith.constant 24 : index
    %107 = vector.load %arg13[%c0_30, %c24] : memref<16x64xf32, #tpu.memory_space<vmem>>, vector<16x8xf32>
    tpu.vector_store %arg13[%c0_30, %c24], %106 {strides = array<i32>} : memref<16x64xf32, #tpu.memory_space<vmem>>, vector<16x8xf32>,
    %108 = vector.extract_strided_slice %13 {offsets = [0, 4], sizes = [16, 1], strides = [1, 1]} : vector<16x8xf32> to vector<16x1xf32>
    %109 = vector.extract_strided_slice %15 {offsets = [4, 0], sizes = [1, 16], strides = [1, 1]} : vector<8x16xf32> to vector<1x16xf32>
    %110 = vector.broadcast %108 : vector<16x1xf32> to vector<16x16xf32>
    %111 = vector.broadcast %109 : vector<1x16xf32> to vector<16x16xf32>
    %112 = arith.addf %110, %111 : vector<16x16xf32>
    %cst_31 = arith.constant 2.000000e-01 : f32
    %113 = vector.broadcast %cst_31 : f32 to vector<16x16xf32>
    %114 = arith.mulf %113, %112 : vector<16x16xf32>
    %115 = arith.maximumf %112, %114 : vector<16x16xf32>
    %116 = arith.addf %115, %5 : vector<16x16xf32>
    %cst_32 = arith.constant dense<0xFF800000> : vector<16xf32>
    %117 = vector.multi_reduction <maximumf>, %116, %cst_32 [1] : vector<16x16xf32> to vector<16xf32>
    %118 = vector.shape_cast %117 : vector<16xf32> to vector<16x1xf32>
    %119 = vector.broadcast %118 : vector<16x1xf32> to vector<16x16xf32>
    %120 = arith.subf %116, %119 : vector<16x16xf32>
    %121 = math.exp %120 : vector<16x16xf32>
    %cst_33 = arith.constant dense<0.000000e+00> : vector<16xf32>
    %122 = vector.multi_reduction <add>, %121, %cst_33 [1] : vector<16x16xf32> to vector<16xf32>
    %123 = vector.shape_cast %122 : vector<16xf32> to vector<16x1xf32>
    %124 = tpu.reciprocal %123 {approx = true} : vector<16x1xf32> -> vector<16x1xf32>
    %125 = vector.broadcast %124 : vector<16x1xf32> to vector<16x16xf32>
    %126 = arith.mulf %121, %125 : vector<16x16xf32>
    %127 = arith.truncf %126 : vector<16x16xf32> to vector<16x16xbf16>
    %128 = vector.extract_strided_slice %10 {offsets = [0, 32], sizes = [16, 8], strides = [1, 1]} : vector<16x64xbf16> to vector<16x8xbf16>
    %cst_34 = arith.constant dense<0.000000e+00> : vector<16x8xf32>
    %129 = tpu.matmul %127, %128, %cst_34 {dimension_numbers = #tpu.dot_dimension_numbers<[1], [0], [0], [1], [0, 0, 1, 1], [], []>} : vector<16x16xbf16>, vector<16x8xbf16>, vector<16x8xf32> -> vector<16x8xf32>
    %c0_35 = arith.constant 0 : index
    %c32 = arith.constant 32 : index
    %130 = vector.load %arg13[%c0_35, %c32] : memref<16x64xf32, #tpu.memory_space<vmem>>, vector<16x8xf32>
    tpu.vector_store %arg13[%c0_35, %c32], %129 {strides = array<i32>} : memref<16x64xf32, #tpu.memory_space<vmem>>, vector<16x8xf32>,
    %131 = vector.extract_strided_slice %13 {offsets = [0, 5], sizes = [16, 1], strides = [1, 1]} : vector<16x8xf32> to vector<16x1xf32>
    %132 = vector.extract_strided_slice %15 {offsets = [5, 0], sizes = [1, 16], strides = [1, 1]} : vector<8x16xf32> to vector<1x16xf32>
    %133 = vector.broadcast %131 : vector<16x1xf32> to vector<16x16xf32>
    %134 = vector.broadcast %132 : vector<1x16xf32> to vector<16x16xf32>
    %135 = arith.addf %133, %134 : vector<16x16xf32>
    %cst_36 = arith.constant 2.000000e-01 : f32
    %136 = vector.broadcast %cst_36 : f32 to vector<16x16xf32>
    %137 = arith.mulf %136, %135 : vector<16x16xf32>
    %138 = arith.maximumf %135, %137 : vector<16x16xf32>
    %139 = arith.addf %138, %5 : vector<16x16xf32>
    %cst_37 = arith.constant dense<0xFF800000> : vector<16xf32>
    %140 = vector.multi_reduction <maximumf>, %139, %cst_37 [1] : vector<16x16xf32> to vector<16xf32>
    %141 = vector.shape_cast %140 : vector<16xf32> to vector<16x1xf32>
    %142 = vector.broadcast %141 : vector<16x1xf32> to vector<16x16xf32>
    %143 = arith.subf %139, %142 : vector<16x16xf32>
    %144 = math.exp %143 : vector<16x16xf32>
    %cst_38 = arith.constant dense<0.000000e+00> : vector<16xf32>
    %145 = vector.multi_reduction <add>, %144, %cst_38 [1] : vector<16x16xf32> to vector<16xf32>
    %146 = vector.shape_cast %145 : vector<16xf32> to vector<16x1xf32>
    %147 = tpu.reciprocal %146 {approx = true} : vector<16x1xf32> -> vector<16x1xf32>
    %148 = vector.broadcast %147 : vector<16x1xf32> to vector<16x16xf32>
    %149 = arith.mulf %144, %148 : vector<16x16xf32>
    %150 = arith.truncf %149 : vector<16x16xf32> to vector<16x16xbf16>
    %151 = vector.extract_strided_slice %10 {offsets = [0, 40], sizes = [16, 8], strides = [1, 1]} : vector<16x64xbf16> to vector<16x8xbf16>
    %cst_39 = arith.constant dense<0.000000e+00> : vector<16x8xf32>
    %152 = tpu.matmul %150, %151, %cst_39 {dimension_numbers = #tpu.dot_dimension_numbers<[1], [0], [0], [1], [0, 0, 1, 1], [], []>} : vector<16x16xbf16>, vector<16x8xbf16>, vector<16x8xf32> -> vector<16x8xf32>
    %c0_40 = arith.constant 0 : index
    %c40 = arith.constant 40 : index
    %153 = vector.load %arg13[%c0_40, %c40] : memref<16x64xf32, #tpu.memory_space<vmem>>, vector<16x8xf32>
    tpu.vector_store %arg13[%c0_40, %c40], %152 {strides = array<i32>} : memref<16x64xf32, #tpu.memory_space<vmem>>, vector<16x8xf32>,
    %154 = vector.extract_strided_slice %13 {offsets = [0, 6], sizes = [16, 1], strides = [1, 1]} : vector<16x8xf32> to vector<16x1xf32>
    %155 = vector.extract_strided_slice %15 {offsets = [6, 0], sizes = [1, 16], strides = [1, 1]} : vector<8x16xf32> to vector<1x16xf32>
    %156 = vector.broadcast %154 : vector<16x1xf32> to vector<16x16xf32>
    %157 = vector.broadcast %155 : vector<1x16xf32> to vector<16x16xf32>
    %158 = arith.addf %156, %157 : vector<16x16xf32>
    %cst_41 = arith.constant 2.000000e-01 : f32
    %159 = vector.broadcast %cst_41 : f32 to vector<16x16xf32>
    %160 = arith.mulf %159, %158 : vector<16x16xf32>
    %161 = arith.maximumf %158, %160 : vector<16x16xf32>
    %162 = arith.addf %161, %5 : vector<16x16xf32>
    %cst_42 = arith.constant dense<0xFF800000> : vector<16xf32>
    %163 = vector.multi_reduction <maximumf>, %162, %cst_42 [1] : vector<16x16xf32> to vector<16xf32>
    %164 = vector.shape_cast %163 : vector<16xf32> to vector<16x1xf32>
    %165 = vector.broadcast %164 : vector<16x1xf32> to vector<16x16xf32>
    %166 = arith.subf %162, %165 : vector<16x16xf32>
    %167 = math.exp %166 : vector<16x16xf32>
    %cst_43 = arith.constant dense<0.000000e+00> : vector<16xf32>
    %168 = vector.multi_reduction <add>, %167, %cst_43 [1] : vector<16x16xf32> to vector<16xf32>
    %169 = vector.shape_cast %168 : vector<16xf32> to vector<16x1xf32>
    %170 = tpu.reciprocal %169 {approx = true} : vector<16x1xf32> -> vector<16x1xf32>
    %171 = vector.broadcast %170 : vector<16x1xf32> to vector<16x16xf32>
    %172 = arith.mulf %167, %171 : vector<16x16xf32>
    %173 = arith.truncf %172 : vector<16x16xf32> to vector<16x16xbf16>
    %174 = vector.extract_strided_slice %10 {offsets = [0, 48], sizes = [16, 8], strides = [1, 1]} : vector<16x64xbf16> to vector<16x8xbf16>
    %cst_44 = arith.constant dense<0.000000e+00> : vector<16x8xf32>
    %175 = tpu.matmul %173, %174, %cst_44 {dimension_numbers = #tpu.dot_dimension_numbers<[1], [0], [0], [1], [0, 0, 1, 1], [], []>} : vector<16x16xbf16>, vector<16x8xbf16>, vector<16x8xf32> -> vector<16x8xf32>
    %c0_45 = arith.constant 0 : index
    %c48 = arith.constant 48 : index
    %176 = vector.load %arg13[%c0_45, %c48] : memref<16x64xf32, #tpu.memory_space<vmem>>, vector<16x8xf32>
    tpu.vector_store %arg13[%c0_45, %c48], %175 {strides = array<i32>} : memref<16x64xf32, #tpu.memory_space<vmem>>, vector<16x8xf32>,
    %177 = vector.extract_strided_slice %13 {offsets = [0, 7], sizes = [16, 1], strides = [1, 1]} : vector<16x8xf32> to vector<16x1xf32>
    %178 = vector.extract_strided_slice %15 {offsets = [7, 0], sizes = [1, 16], strides = [1, 1]} : vector<8x16xf32> to vector<1x16xf32>
    %179 = vector.broadcast %177 : vector<16x1xf32> to vector<16x16xf32>
    %180 = vector.broadcast %178 : vector<1x16xf32> to vector<16x16xf32>
    %181 = arith.addf %179, %180 : vector<16x16xf32>
    %cst_46 = arith.constant 2.000000e-01 : f32
    %182 = vector.broadcast %cst_46 : f32 to vector<16x16xf32>
    %183 = arith.mulf %182, %181 : vector<16x16xf32>
    %184 = arith.maximumf %181, %183 : vector<16x16xf32>
    %185 = arith.addf %184, %5 : vector<16x16xf32>
    %cst_47 = arith.constant dense<0xFF800000> : vector<16xf32>
    %186 = vector.multi_reduction <maximumf>, %185, %cst_47 [1] : vector<16x16xf32> to vector<16xf32>
    %187 = vector.shape_cast %186 : vector<16xf32> to vector<16x1xf32>
    %188 = vector.broadcast %187 : vector<16x1xf32> to vector<16x16xf32>
    %189 = arith.subf %185, %188 : vector<16x16xf32>
    %190 = math.exp %189 : vector<16x16xf32>
    %cst_48 = arith.constant dense<0.000000e+00> : vector<16xf32>
    %191 = vector.multi_reduction <add>, %190, %cst_48 [1] : vector<16x16xf32> to vector<16xf32>
    %192 = vector.shape_cast %191 : vector<16xf32> to vector<16x1xf32>
    %193 = tpu.reciprocal %192 {approx = true} : vector<16x1xf32> -> vector<16x1xf32>
    %194 = vector.broadcast %193 : vector<16x1xf32> to vector<16x16xf32>
    %195 = arith.mulf %190, %194 : vector<16x16xf32>
    %196 = arith.truncf %195 : vector<16x16xf32> to vector<16x16xbf16>
    %197 = vector.extract_strided_slice %10 {offsets = [0, 56], sizes = [16, 8], strides = [1, 1]} : vector<16x64xbf16> to vector<16x8xbf16>
    %cst_49 = arith.constant dense<0.000000e+00> : vector<16x8xf32>
    %198 = tpu.matmul %196, %197, %cst_49 {dimension_numbers = #tpu.dot_dimension_numbers<[1], [0], [0], [1], [0, 0, 1, 1], [], []>} : vector<16x16xbf16>, vector<16x8xbf16>, vector<16x8xf32> -> vector<16x8xf32>
    %c0_50 = arith.constant 0 : index
    %c56 = arith.constant 56 : index
    %199 = vector.load %arg13[%c0_50, %c56] : memref<16x64xf32, #tpu.memory_space<vmem>>, vector<16x8xf32>
    tpu.vector_store %arg13[%c0_50, %c56], %198 {strides = array<i32>} : memref<16x64xf32, #tpu.memory_space<vmem>>, vector<16x8xf32>,
    %c0_51 = arith.constant 0 : index
    %c0_52 = arith.constant 0 : index
    %200 = vector.load %arg13[%c0_51, %c0_52] : memref<16x64xf32, #tpu.memory_space<vmem>>, vector<16x64xf32>
    %c0_53 = arith.constant 0 : index
    %c0_54 = arith.constant 0 : index
    %201 = vector.load %arg4[%c0_53, %c0_54] : memref<1x64xf32, #tpu.memory_space<vmem>>, vector<1x64xf32>
    %202 = vector.broadcast %201 : vector<1x64xf32> to vector<16x64xf32>
    %203 = arith.addf %200, %202 : vector<16x64xf32>
    %cst_55 = arith.constant 0.000000e+00 : f32
    %204 = vector.broadcast %cst_55 : f32 to vector<16x64xf32>
    %205 = arith.maximumf %203, %204 : vector<16x64xf32>
    %206 = arith.truncf %205 : vector<16x64xf32> to vector<16x64xbf16>
    %c0_56 = arith.constant 0 : index
    %c0_57 = arith.constant 0 : index
    %207 = vector.load %arg5[%c0_56, %c0_57] : memref<64x64xbf16, #tpu.memory_space<vmem>>, vector<64x64xbf16>
    %cst_58 = arith.constant dense<0.000000e+00> : vector<16x64xf32>
    %208 = tpu.matmul %206, %207, %cst_58 {dimension_numbers = #tpu.dot_dimension_numbers<[1], [0], [0], [1], [0, 0, 1, 1], [], []>} : vector<16x64xbf16>, vector<64x64xbf16>, vector<16x64xf32> -> vector<16x64xf32>
    %209 = arith.truncf %208 : vector<16x64xf32> to vector<16x64xbf16>
    %c0_59 = arith.constant 0 : index
    %c0_60 = arith.constant 0 : index
    %210 = vector.load %arg6[%c0_59, %c0_60] : memref<64x16xbf16, #tpu.memory_space<vmem>>, vector<64x16xbf16>
    %cst_61 = arith.constant dense<0.000000e+00> : vector<16x16xf32>
    %211 = tpu.matmul %209, %210, %cst_61 {dimension_numbers = #tpu.dot_dimension_numbers<[1], [0], [0], [1], [0, 0, 1, 1], [], []>} : vector<16x64xbf16>, vector<64x16xbf16>, vector<16x16xf32> -> vector<16x16xf32>
    %212 = vector.extract_strided_slice %211 {offsets = [0, 0], sizes = [16, 8], strides = [1, 1]} : vector<16x16xf32> to vector<16x8xf32>
    %213 = vector.extract_strided_slice %211 {offsets = [0, 8], sizes = [16, 8], strides = [1, 1]} : vector<16x16xf32> to vector<16x8xf32>
    %214 = tpu.transpose %213, [1, 0] : vector<16x8xf32> -> vector<8x16xf32>
    %215 = vector.extract_strided_slice %212 {offsets = [0, 0], sizes = [16, 1], strides = [1, 1]} : vector<16x8xf32> to vector<16x1xf32>
    %216 = vector.extract_strided_slice %214 {offsets = [0, 0], sizes = [1, 16], strides = [1, 1]} : vector<8x16xf32> to vector<1x16xf32>
    %217 = vector.broadcast %215 : vector<16x1xf32> to vector<16x16xf32>
    %218 = vector.broadcast %216 : vector<1x16xf32> to vector<16x16xf32>
    %219 = arith.addf %217, %218 : vector<16x16xf32>
    %cst_62 = arith.constant 2.000000e-01 : f32
    %220 = vector.broadcast %cst_62 : f32 to vector<16x16xf32>
    %221 = arith.mulf %220, %219 : vector<16x16xf32>
    %222 = arith.maximumf %219, %221 : vector<16x16xf32>
    %223 = arith.addf %222, %5 : vector<16x16xf32>
    %cst_63 = arith.constant dense<0xFF800000> : vector<16xf32>
    %224 = vector.multi_reduction <maximumf>, %223, %cst_63 [1] : vector<16x16xf32> to vector<16xf32>
    %225 = vector.shape_cast %224 : vector<16xf32> to vector<16x1xf32>
    %226 = vector.broadcast %225 : vector<16x1xf32> to vector<16x16xf32>
    %227 = arith.subf %223, %226 : vector<16x16xf32>
    %228 = math.exp %227 : vector<16x16xf32>
    %cst_64 = arith.constant dense<0.000000e+00> : vector<16xf32>
    %229 = vector.multi_reduction <add>, %228, %cst_64 [1] : vector<16x16xf32> to vector<16xf32>
    %230 = vector.shape_cast %229 : vector<16xf32> to vector<16x1xf32>
    %231 = tpu.reciprocal %230 {approx = true} : vector<16x1xf32> -> vector<16x1xf32>
    %232 = vector.broadcast %231 : vector<16x1xf32> to vector<16x16xf32>
    %233 = arith.mulf %228, %232 : vector<16x16xf32>
    %234 = arith.truncf %233 : vector<16x16xf32> to vector<16x16xbf16>
    %235 = vector.extract_strided_slice %209 {offsets = [0, 0], sizes = [16, 8], strides = [1, 1]} : vector<16x64xbf16> to vector<16x8xbf16>
    %cst_65 = arith.constant dense<0.000000e+00> : vector<16x8xf32>
    %236 = tpu.matmul %234, %235, %cst_65 {dimension_numbers = #tpu.dot_dimension_numbers<[1], [0], [0], [1], [0, 0, 1, 1], [], []>} : vector<16x16xbf16>, vector<16x8xbf16>, vector<16x8xf32> -> vector<16x8xf32>
    %c0_66 = arith.constant 0 : index
    %c0_67 = arith.constant 0 : index
    %237 = vector.load %arg13[%c0_66, %c0_67] : memref<16x64xf32, #tpu.memory_space<vmem>>, vector<16x8xf32>
    tpu.vector_store %arg13[%c0_66, %c0_67], %236 {strides = array<i32>} : memref<16x64xf32, #tpu.memory_space<vmem>>, vector<16x8xf32>,
    %238 = vector.extract_strided_slice %212 {offsets = [0, 1], sizes = [16, 1], strides = [1, 1]} : vector<16x8xf32> to vector<16x1xf32>
    %239 = vector.extract_strided_slice %214 {offsets = [1, 0], sizes = [1, 16], strides = [1, 1]} : vector<8x16xf32> to vector<1x16xf32>
    %240 = vector.broadcast %238 : vector<16x1xf32> to vector<16x16xf32>
    %241 = vector.broadcast %239 : vector<1x16xf32> to vector<16x16xf32>
    %242 = arith.addf %240, %241 : vector<16x16xf32>
    %cst_68 = arith.constant 2.000000e-01 : f32
    %243 = vector.broadcast %cst_68 : f32 to vector<16x16xf32>
    %244 = arith.mulf %243, %242 : vector<16x16xf32>
    %245 = arith.maximumf %242, %244 : vector<16x16xf32>
    %246 = arith.addf %245, %5 : vector<16x16xf32>
    %cst_69 = arith.constant dense<0xFF800000> : vector<16xf32>
    %247 = vector.multi_reduction <maximumf>, %246, %cst_69 [1] : vector<16x16xf32> to vector<16xf32>
    %248 = vector.shape_cast %247 : vector<16xf32> to vector<16x1xf32>
    %249 = vector.broadcast %248 : vector<16x1xf32> to vector<16x16xf32>
    %250 = arith.subf %246, %249 : vector<16x16xf32>
    %251 = math.exp %250 : vector<16x16xf32>
    %cst_70 = arith.constant dense<0.000000e+00> : vector<16xf32>
    %252 = vector.multi_reduction <add>, %251, %cst_70 [1] : vector<16x16xf32> to vector<16xf32>
    %253 = vector.shape_cast %252 : vector<16xf32> to vector<16x1xf32>
    %254 = tpu.reciprocal %253 {approx = true} : vector<16x1xf32> -> vector<16x1xf32>
    %255 = vector.broadcast %254 : vector<16x1xf32> to vector<16x16xf32>
    %256 = arith.mulf %251, %255 : vector<16x16xf32>
    %257 = arith.truncf %256 : vector<16x16xf32> to vector<16x16xbf16>
    %258 = vector.extract_strided_slice %209 {offsets = [0, 8], sizes = [16, 8], strides = [1, 1]} : vector<16x64xbf16> to vector<16x8xbf16>
    %cst_71 = arith.constant dense<0.000000e+00> : vector<16x8xf32>
    %259 = tpu.matmul %257, %258, %cst_71 {dimension_numbers = #tpu.dot_dimension_numbers<[1], [0], [0], [1], [0, 0, 1, 1], [], []>} : vector<16x16xbf16>, vector<16x8xbf16>, vector<16x8xf32> -> vector<16x8xf32>
    %c0_72 = arith.constant 0 : index
    %c8_73 = arith.constant 8 : index
    %260 = vector.load %arg13[%c0_72, %c8_73] : memref<16x64xf32, #tpu.memory_space<vmem>>, vector<16x8xf32>
    tpu.vector_store %arg13[%c0_72, %c8_73], %259 {strides = array<i32>} : memref<16x64xf32, #tpu.memory_space<vmem>>, vector<16x8xf32>,
    %261 = vector.extract_strided_slice %212 {offsets = [0, 2], sizes = [16, 1], strides = [1, 1]} : vector<16x8xf32> to vector<16x1xf32>
    %262 = vector.extract_strided_slice %214 {offsets = [2, 0], sizes = [1, 16], strides = [1, 1]} : vector<8x16xf32> to vector<1x16xf32>
    %263 = vector.broadcast %261 : vector<16x1xf32> to vector<16x16xf32>
    %264 = vector.broadcast %262 : vector<1x16xf32> to vector<16x16xf32>
    %265 = arith.addf %263, %264 : vector<16x16xf32>
    %cst_74 = arith.constant 2.000000e-01 : f32
    %266 = vector.broadcast %cst_74 : f32 to vector<16x16xf32>
    %267 = arith.mulf %266, %265 : vector<16x16xf32>
    %268 = arith.maximumf %265, %267 : vector<16x16xf32>
    %269 = arith.addf %268, %5 : vector<16x16xf32>
    %cst_75 = arith.constant dense<0xFF800000> : vector<16xf32>
    %270 = vector.multi_reduction <maximumf>, %269, %cst_75 [1] : vector<16x16xf32> to vector<16xf32>
    %271 = vector.shape_cast %270 : vector<16xf32> to vector<16x1xf32>
    %272 = vector.broadcast %271 : vector<16x1xf32> to vector<16x16xf32>
    %273 = arith.subf %269, %272 : vector<16x16xf32>
    %274 = math.exp %273 : vector<16x16xf32>
    %cst_76 = arith.constant dense<0.000000e+00> : vector<16xf32>
    %275 = vector.multi_reduction <add>, %274, %cst_76 [1] : vector<16x16xf32> to vector<16xf32>
    %276 = vector.shape_cast %275 : vector<16xf32> to vector<16x1xf32>
    %277 = tpu.reciprocal %276 {approx = true} : vector<16x1xf32> -> vector<16x1xf32>
    %278 = vector.broadcast %277 : vector<16x1xf32> to vector<16x16xf32>
    %279 = arith.mulf %274, %278 : vector<16x16xf32>
    %280 = arith.truncf %279 : vector<16x16xf32> to vector<16x16xbf16>
    %281 = vector.extract_strided_slice %209 {offsets = [0, 16], sizes = [16, 8], strides = [1, 1]} : vector<16x64xbf16> to vector<16x8xbf16>
    %cst_77 = arith.constant dense<0.000000e+00> : vector<16x8xf32>
    %282 = tpu.matmul %280, %281, %cst_77 {dimension_numbers = #tpu.dot_dimension_numbers<[1], [0], [0], [1], [0, 0, 1, 1], [], []>} : vector<16x16xbf16>, vector<16x8xbf16>, vector<16x8xf32> -> vector<16x8xf32>
    %c0_78 = arith.constant 0 : index
    %c16_79 = arith.constant 16 : index
    %283 = vector.load %arg13[%c0_78, %c16_79] : memref<16x64xf32, #tpu.memory_space<vmem>>, vector<16x8xf32>
    tpu.vector_store %arg13[%c0_78, %c16_79], %282 {strides = array<i32>} : memref<16x64xf32, #tpu.memory_space<vmem>>, vector<16x8xf32>,
    %284 = vector.extract_strided_slice %212 {offsets = [0, 3], sizes = [16, 1], strides = [1, 1]} : vector<16x8xf32> to vector<16x1xf32>
    %285 = vector.extract_strided_slice %214 {offsets = [3, 0], sizes = [1, 16], strides = [1, 1]} : vector<8x16xf32> to vector<1x16xf32>
    %286 = vector.broadcast %284 : vector<16x1xf32> to vector<16x16xf32>
    %287 = vector.broadcast %285 : vector<1x16xf32> to vector<16x16xf32>
    %288 = arith.addf %286, %287 : vector<16x16xf32>
    %cst_80 = arith.constant 2.000000e-01 : f32
    %289 = vector.broadcast %cst_80 : f32 to vector<16x16xf32>
    %290 = arith.mulf %289, %288 : vector<16x16xf32>
    %291 = arith.maximumf %288, %290 : vector<16x16xf32>
    %292 = arith.addf %291, %5 : vector<16x16xf32>
    %cst_81 = arith.constant dense<0xFF800000> : vector<16xf32>
    %293 = vector.multi_reduction <maximumf>, %292, %cst_81 [1] : vector<16x16xf32> to vector<16xf32>
    %294 = vector.shape_cast %293 : vector<16xf32> to vector<16x1xf32>
    %295 = vector.broadcast %294 : vector<16x1xf32> to vector<16x16xf32>
    %296 = arith.subf %292, %295 : vector<16x16xf32>
    %297 = math.exp %296 : vector<16x16xf32>
    %cst_82 = arith.constant dense<0.000000e+00> : vector<16xf32>
    %298 = vector.multi_reduction <add>, %297, %cst_82 [1] : vector<16x16xf32> to vector<16xf32>
    %299 = vector.shape_cast %298 : vector<16xf32> to vector<16x1xf32>
    %300 = tpu.reciprocal %299 {approx = true} : vector<16x1xf32> -> vector<16x1xf32>
    %301 = vector.broadcast %300 : vector<16x1xf32> to vector<16x16xf32>
    %302 = arith.mulf %297, %301 : vector<16x16xf32>
    %303 = arith.truncf %302 : vector<16x16xf32> to vector<16x16xbf16>
    %304 = vector.extract_strided_slice %209 {offsets = [0, 24], sizes = [16, 8], strides = [1, 1]} : vector<16x64xbf16> to vector<16x8xbf16>
    %cst_83 = arith.constant dense<0.000000e+00> : vector<16x8xf32>
    %305 = tpu.matmul %303, %304, %cst_83 {dimension_numbers = #tpu.dot_dimension_numbers<[1], [0], [0], [1], [0, 0, 1, 1], [], []>} : vector<16x16xbf16>, vector<16x8xbf16>, vector<16x8xf32> -> vector<16x8xf32>
    %c0_84 = arith.constant 0 : index
    %c24_85 = arith.constant 24 : index
    %306 = vector.load %arg13[%c0_84, %c24_85] : memref<16x64xf32, #tpu.memory_space<vmem>>, vector<16x8xf32>
    tpu.vector_store %arg13[%c0_84, %c24_85], %305 {strides = array<i32>} : memref<16x64xf32, #tpu.memory_space<vmem>>, vector<16x8xf32>,
    %307 = vector.extract_strided_slice %212 {offsets = [0, 4], sizes = [16, 1], strides = [1, 1]} : vector<16x8xf32> to vector<16x1xf32>
    %308 = vector.extract_strided_slice %214 {offsets = [4, 0], sizes = [1, 16], strides = [1, 1]} : vector<8x16xf32> to vector<1x16xf32>
    %309 = vector.broadcast %307 : vector<16x1xf32> to vector<16x16xf32>
    %310 = vector.broadcast %308 : vector<1x16xf32> to vector<16x16xf32>
    %311 = arith.addf %309, %310 : vector<16x16xf32>
    %cst_86 = arith.constant 2.000000e-01 : f32
    %312 = vector.broadcast %cst_86 : f32 to vector<16x16xf32>
    %313 = arith.mulf %312, %311 : vector<16x16xf32>
    %314 = arith.maximumf %311, %313 : vector<16x16xf32>
    %315 = arith.addf %314, %5 : vector<16x16xf32>
    %cst_87 = arith.constant dense<0xFF800000> : vector<16xf32>
    %316 = vector.multi_reduction <maximumf>, %315, %cst_87 [1] : vector<16x16xf32> to vector<16xf32>
    %317 = vector.shape_cast %316 : vector<16xf32> to vector<16x1xf32>
    %318 = vector.broadcast %317 : vector<16x1xf32> to vector<16x16xf32>
    %319 = arith.subf %315, %318 : vector<16x16xf32>
    %320 = math.exp %319 : vector<16x16xf32>
    %cst_88 = arith.constant dense<0.000000e+00> : vector<16xf32>
    %321 = vector.multi_reduction <add>, %320, %cst_88 [1] : vector<16x16xf32> to vector<16xf32>
    %322 = vector.shape_cast %321 : vector<16xf32> to vector<16x1xf32>
    %323 = tpu.reciprocal %322 {approx = true} : vector<16x1xf32> -> vector<16x1xf32>
    %324 = vector.broadcast %323 : vector<16x1xf32> to vector<16x16xf32>
    %325 = arith.mulf %320, %324 : vector<16x16xf32>
    %326 = arith.truncf %325 : vector<16x16xf32> to vector<16x16xbf16>
    %327 = vector.extract_strided_slice %209 {offsets = [0, 32], sizes = [16, 8], strides = [1, 1]} : vector<16x64xbf16> to vector<16x8xbf16>
    %cst_89 = arith.constant dense<0.000000e+00> : vector<16x8xf32>
    %328 = tpu.matmul %326, %327, %cst_89 {dimension_numbers = #tpu.dot_dimension_numbers<[1], [0], [0], [1], [0, 0, 1, 1], [], []>} : vector<16x16xbf16>, vector<16x8xbf16>, vector<16x8xf32> -> vector<16x8xf32>
    %c0_90 = arith.constant 0 : index
    %c32_91 = arith.constant 32 : index
    %329 = vector.load %arg13[%c0_90, %c32_91] : memref<16x64xf32, #tpu.memory_space<vmem>>, vector<16x8xf32>
    tpu.vector_store %arg13[%c0_90, %c32_91], %328 {strides = array<i32>} : memref<16x64xf32, #tpu.memory_space<vmem>>, vector<16x8xf32>,
    %330 = vector.extract_strided_slice %212 {offsets = [0, 5], sizes = [16, 1], strides = [1, 1]} : vector<16x8xf32> to vector<16x1xf32>
    %331 = vector.extract_strided_slice %214 {offsets = [5, 0], sizes = [1, 16], strides = [1, 1]} : vector<8x16xf32> to vector<1x16xf32>
    %332 = vector.broadcast %330 : vector<16x1xf32> to vector<16x16xf32>
    %333 = vector.broadcast %331 : vector<1x16xf32> to vector<16x16xf32>
    %334 = arith.addf %332, %333 : vector<16x16xf32>
    %cst_92 = arith.constant 2.000000e-01 : f32
    %335 = vector.broadcast %cst_92 : f32 to vector<16x16xf32>
    %336 = arith.mulf %335, %334 : vector<16x16xf32>
    %337 = arith.maximumf %334, %336 : vector<16x16xf32>
    %338 = arith.addf %337, %5 : vector<16x16xf32>
    %cst_93 = arith.constant dense<0xFF800000> : vector<16xf32>
    %339 = vector.multi_reduction <maximumf>, %338, %cst_93 [1] : vector<16x16xf32> to vector<16xf32>
    %340 = vector.shape_cast %339 : vector<16xf32> to vector<16x1xf32>
    %341 = vector.broadcast %340 : vector<16x1xf32> to vector<16x16xf32>
    %342 = arith.subf %338, %341 : vector<16x16xf32>
    %343 = math.exp %342 : vector<16x16xf32>
    %cst_94 = arith.constant dense<0.000000e+00> : vector<16xf32>
    %344 = vector.multi_reduction <add>, %343, %cst_94 [1] : vector<16x16xf32> to vector<16xf32>
    %345 = vector.shape_cast %344 : vector<16xf32> to vector<16x1xf32>
    %346 = tpu.reciprocal %345 {approx = true} : vector<16x1xf32> -> vector<16x1xf32>
    %347 = vector.broadcast %346 : vector<16x1xf32> to vector<16x16xf32>
    %348 = arith.mulf %343, %347 : vector<16x16xf32>
    %349 = arith.truncf %348 : vector<16x16xf32> to vector<16x16xbf16>
    %350 = vector.extract_strided_slice %209 {offsets = [0, 40], sizes = [16, 8], strides = [1, 1]} : vector<16x64xbf16> to vector<16x8xbf16>
    %cst_95 = arith.constant dense<0.000000e+00> : vector<16x8xf32>
    %351 = tpu.matmul %349, %350, %cst_95 {dimension_numbers = #tpu.dot_dimension_numbers<[1], [0], [0], [1], [0, 0, 1, 1], [], []>} : vector<16x16xbf16>, vector<16x8xbf16>, vector<16x8xf32> -> vector<16x8xf32>
    %c0_96 = arith.constant 0 : index
    %c40_97 = arith.constant 40 : index
    %352 = vector.load %arg13[%c0_96, %c40_97] : memref<16x64xf32, #tpu.memory_space<vmem>>, vector<16x8xf32>
    tpu.vector_store %arg13[%c0_96, %c40_97], %351 {strides = array<i32>} : memref<16x64xf32, #tpu.memory_space<vmem>>, vector<16x8xf32>,
    %353 = vector.extract_strided_slice %212 {offsets = [0, 6], sizes = [16, 1], strides = [1, 1]} : vector<16x8xf32> to vector<16x1xf32>
    %354 = vector.extract_strided_slice %214 {offsets = [6, 0], sizes = [1, 16], strides = [1, 1]} : vector<8x16xf32> to vector<1x16xf32>
    %355 = vector.broadcast %353 : vector<16x1xf32> to vector<16x16xf32>
    %356 = vector.broadcast %354 : vector<1x16xf32> to vector<16x16xf32>
    %357 = arith.addf %355, %356 : vector<16x16xf32>
    %cst_98 = arith.constant 2.000000e-01 : f32
    %358 = vector.broadcast %cst_98 : f32 to vector<16x16xf32>
    %359 = arith.mulf %358, %357 : vector<16x16xf32>
    %360 = arith.maximumf %357, %359 : vector<16x16xf32>
    %361 = arith.addf %360, %5 : vector<16x16xf32>
    %cst_99 = arith.constant dense<0xFF800000> : vector<16xf32>
    %362 = vector.multi_reduction <maximumf>, %361, %cst_99 [1] : vector<16x16xf32> to vector<16xf32>
    %363 = vector.shape_cast %362 : vector<16xf32> to vector<16x1xf32>
    %364 = vector.broadcast %363 : vector<16x1xf32> to vector<16x16xf32>
    %365 = arith.subf %361, %364 : vector<16x16xf32>
    %366 = math.exp %365 : vector<16x16xf32>
    %cst_100 = arith.constant dense<0.000000e+00> : vector<16xf32>
    %367 = vector.multi_reduction <add>, %366, %cst_100 [1] : vector<16x16xf32> to vector<16xf32>
    %368 = vector.shape_cast %367 : vector<16xf32> to vector<16x1xf32>
    %369 = tpu.reciprocal %368 {approx = true} : vector<16x1xf32> -> vector<16x1xf32>
    %370 = vector.broadcast %369 : vector<16x1xf32> to vector<16x16xf32>
    %371 = arith.mulf %366, %370 : vector<16x16xf32>
    %372 = arith.truncf %371 : vector<16x16xf32> to vector<16x16xbf16>
    %373 = vector.extract_strided_slice %209 {offsets = [0, 48], sizes = [16, 8], strides = [1, 1]} : vector<16x64xbf16> to vector<16x8xbf16>
    %cst_101 = arith.constant dense<0.000000e+00> : vector<16x8xf32>
    %374 = tpu.matmul %372, %373, %cst_101 {dimension_numbers = #tpu.dot_dimension_numbers<[1], [0], [0], [1], [0, 0, 1, 1], [], []>} : vector<16x16xbf16>, vector<16x8xbf16>, vector<16x8xf32> -> vector<16x8xf32>
    %c0_102 = arith.constant 0 : index
    %c48_103 = arith.constant 48 : index
    %375 = vector.load %arg13[%c0_102, %c48_103] : memref<16x64xf32, #tpu.memory_space<vmem>>, vector<16x8xf32>
    tpu.vector_store %arg13[%c0_102, %c48_103], %374 {strides = array<i32>} : memref<16x64xf32, #tpu.memory_space<vmem>>, vector<16x8xf32>,
    %376 = vector.extract_strided_slice %212 {offsets = [0, 7], sizes = [16, 1], strides = [1, 1]} : vector<16x8xf32> to vector<16x1xf32>
    %377 = vector.extract_strided_slice %214 {offsets = [7, 0], sizes = [1, 16], strides = [1, 1]} : vector<8x16xf32> to vector<1x16xf32>
    %378 = vector.broadcast %376 : vector<16x1xf32> to vector<16x16xf32>
    %379 = vector.broadcast %377 : vector<1x16xf32> to vector<16x16xf32>
    %380 = arith.addf %378, %379 : vector<16x16xf32>
    %cst_104 = arith.constant 2.000000e-01 : f32
    %381 = vector.broadcast %cst_104 : f32 to vector<16x16xf32>
    %382 = arith.mulf %381, %380 : vector<16x16xf32>
    %383 = arith.maximumf %380, %382 : vector<16x16xf32>
    %384 = arith.addf %383, %5 : vector<16x16xf32>
    %cst_105 = arith.constant dense<0xFF800000> : vector<16xf32>
    %385 = vector.multi_reduction <maximumf>, %384, %cst_105 [1] : vector<16x16xf32> to vector<16xf32>
    %386 = vector.shape_cast %385 : vector<16xf32> to vector<16x1xf32>
    %387 = vector.broadcast %386 : vector<16x1xf32> to vector<16x16xf32>
    %388 = arith.subf %384, %387 : vector<16x16xf32>
    %389 = math.exp %388 : vector<16x16xf32>
    %cst_106 = arith.constant dense<0.000000e+00> : vector<16xf32>
    %390 = vector.multi_reduction <add>, %389, %cst_106 [1] : vector<16x16xf32> to vector<16xf32>
    %391 = vector.shape_cast %390 : vector<16xf32> to vector<16x1xf32>
    %392 = tpu.reciprocal %391 {approx = true} : vector<16x1xf32> -> vector<16x1xf32>
    %393 = vector.broadcast %392 : vector<16x1xf32> to vector<16x16xf32>
    %394 = arith.mulf %389, %393 : vector<16x16xf32>
    %395 = arith.truncf %394 : vector<16x16xf32> to vector<16x16xbf16>
    %396 = vector.extract_strided_slice %209 {offsets = [0, 56], sizes = [16, 8], strides = [1, 1]} : vector<16x64xbf16> to vector<16x8xbf16>
    %cst_107 = arith.constant dense<0.000000e+00> : vector<16x8xf32>
    %397 = tpu.matmul %395, %396, %cst_107 {dimension_numbers = #tpu.dot_dimension_numbers<[1], [0], [0], [1], [0, 0, 1, 1], [], []>} : vector<16x16xbf16>, vector<16x8xbf16>, vector<16x8xf32> -> vector<16x8xf32>
    %c0_108 = arith.constant 0 : index
    %c56_109 = arith.constant 56 : index
    %398 = vector.load %arg13[%c0_108, %c56_109] : memref<16x64xf32, #tpu.memory_space<vmem>>, vector<16x8xf32>
    tpu.vector_store %arg13[%c0_108, %c56_109], %397 {strides = array<i32>} : memref<16x64xf32, #tpu.memory_space<vmem>>, vector<16x8xf32>,
    %c0_110 = arith.constant 0 : index
    %c0_111 = arith.constant 0 : index
    %399 = vector.load %arg13[%c0_110, %c0_111] : memref<16x64xf32, #tpu.memory_space<vmem>>, vector<16x64xf32>
    %c0_112 = arith.constant 0 : index
    %c0_113 = arith.constant 0 : index
    %400 = vector.load %arg7[%c0_112, %c0_113] : memref<1x64xf32, #tpu.memory_space<vmem>>, vector<1x64xf32>
    %401 = vector.broadcast %400 : vector<1x64xf32> to vector<16x64xf32>
    %402 = arith.addf %399, %401 : vector<16x64xf32>
    %cst_114 = arith.constant 0.000000e+00 : f32
    %403 = vector.broadcast %cst_114 : f32 to vector<16x64xf32>
    %404 = arith.maximumf %402, %403 : vector<16x64xf32>
    %405 = arith.truncf %404 : vector<16x64xf32> to vector<16x64xbf16>
    %c0_115 = arith.constant 0 : index
    %c0_116 = arith.constant 0 : index
    %406 = vector.load %arg8[%c0_115, %c0_116] : memref<64x8xbf16, #tpu.memory_space<vmem>>, vector<64x8xbf16>
    %cst_117 = arith.constant dense<0.000000e+00> : vector<16x8xf32>
    %407 = tpu.matmul %405, %406, %cst_117 {dimension_numbers = #tpu.dot_dimension_numbers<[1], [0], [0], [1], [0, 0, 1, 1], [], []>} : vector<16x64xbf16>, vector<64x8xbf16>, vector<16x8xf32> -> vector<16x8xf32>
    %408 = arith.truncf %407 : vector<16x8xf32> to vector<16x8xbf16>
    %c0_118 = arith.constant 0 : index
    %c0_119 = arith.constant 0 : index
    %409 = vector.load %arg9[%c0_118, %c0_119] : memref<8x2xbf16, #tpu.memory_space<vmem>>, vector<8x2xbf16>
    %cst_120 = arith.constant dense<0.000000e+00> : vector<16x2xf32>
    %410 = tpu.matmul %408, %409, %cst_120 {dimension_numbers = #tpu.dot_dimension_numbers<[1], [0], [0], [1], [0, 0, 1, 1], [], []>} : vector<16x8xbf16>, vector<8x2xbf16>, vector<16x2xf32> -> vector<16x2xf32>
    %411 = vector.extract_strided_slice %410 {offsets = [0, 0], sizes = [16, 1], strides = [1, 1]} : vector<16x2xf32> to vector<16x1xf32>
    %412 = vector.extract_strided_slice %410 {offsets = [0, 1], sizes = [16, 1], strides = [1, 1]} : vector<16x2xf32> to vector<16x1xf32>
    %413 = tpu.transpose %412, [1, 0] : vector<16x1xf32> -> vector<1x16xf32>
    %414 = vector.broadcast %411 : vector<16x1xf32> to vector<16x16xf32>
    %415 = vector.broadcast %413 : vector<1x16xf32> to vector<16x16xf32>
    %416 = arith.addf %414, %415 : vector<16x16xf32>
    %cst_121 = arith.constant 2.000000e-01 : f32
    %417 = vector.broadcast %cst_121 : f32 to vector<16x16xf32>
    %418 = arith.mulf %417, %416 : vector<16x16xf32>
    %419 = arith.maximumf %416, %418 : vector<16x16xf32>
    %420 = arith.addf %419, %5 : vector<16x16xf32>
    %cst_122 = arith.constant dense<0xFF800000> : vector<16xf32>
    %421 = vector.multi_reduction <maximumf>, %420, %cst_122 [1] : vector<16x16xf32> to vector<16xf32>
    %422 = vector.shape_cast %421 : vector<16xf32> to vector<16x1xf32>
    %423 = vector.broadcast %422 : vector<16x1xf32> to vector<16x16xf32>
    %424 = arith.subf %420, %423 : vector<16x16xf32>
    %425 = math.exp %424 : vector<16x16xf32>
    %cst_123 = arith.constant dense<0.000000e+00> : vector<16xf32>
    %426 = vector.multi_reduction <add>, %425, %cst_123 [1] : vector<16x16xf32> to vector<16xf32>
    %427 = vector.shape_cast %426 : vector<16xf32> to vector<16x1xf32>
    %428 = tpu.reciprocal %427 {approx = true} : vector<16x1xf32> -> vector<16x1xf32>
    %429 = vector.broadcast %428 : vector<16x1xf32> to vector<16x16xf32>
    %430 = arith.mulf %425, %429 : vector<16x16xf32>
    %431 = arith.truncf %430 : vector<16x16xf32> to vector<16x16xbf16>
    %cst_124 = arith.constant dense<0.000000e+00> : vector<16x8xf32>
    %432 = tpu.matmul %431, %408, %cst_124 {dimension_numbers = #tpu.dot_dimension_numbers<[1], [0], [0], [1], [0, 0, 1, 1], [], []>} : vector<16x16xbf16>, vector<16x8xbf16>, vector<16x8xf32> -> vector<16x8xf32>
    %c0_125 = arith.constant 0 : index
    %c0_126 = arith.constant 0 : index
    %433 = vector.load %arg10[%c0_125, %c0_126] : memref<1x8xf32, #tpu.memory_space<vmem>>, vector<1x8xf32>
    %434 = vector.broadcast %433 : vector<1x8xf32> to vector<16x8xf32>
    %435 = arith.addf %432, %434 : vector<16x8xf32>
    %cst_127 = arith.constant 0.000000e+00 : f32
    %436 = vector.broadcast %cst_127 : f32 to vector<16x8xf32>
    %437 = arith.maximumf %435, %436 : vector<16x8xf32>
    %438 = vector.extract_strided_slice %437 {offsets = [0, 0], sizes = [16, 4], strides = [1, 1]} : vector<16x8xf32> to vector<16x4xf32>
    %439 = vector.extract_strided_slice %437 {offsets = [0, 4], sizes = [16, 4], strides = [1, 1]} : vector<16x8xf32> to vector<16x4xf32>
    %440 = arith.maximumf %438, %439 : vector<16x4xf32>
    %441 = arith.subf %438, %440 : vector<16x4xf32>
    %442 = math.exp %441 : vector<16x4xf32>
    %443 = arith.subf %439, %440 : vector<16x4xf32>
    %444 = math.exp %443 : vector<16x4xf32>
    %445 = arith.addf %442, %444 : vector<16x4xf32>
    %446 = arith.divf %442, %445 : vector<16x4xf32>
    %c0_128 = arith.constant 0 : index
    %c0_129 = arith.constant 0 : index
    %447 = vector.load %arg11[%c0_128, %c0_129] : memref<16x4xf32, #tpu.memory_space<vmem>>, vector<16x4xf32>
    tpu.vector_store %arg11[%c0_128, %c0_129], %446 {strides = array<i32>} : memref<16x4xf32, #tpu.memory_space<vmem>>, vector<16x4xf32>,
    %448 = arith.divf %444, %445 : vector<16x4xf32>
    %c0_130 = arith.constant 0 : index
    %c0_131 = arith.constant 0 : index
    %449 = vector.load %arg12[%c0_130, %c0_131] : memref<16x4xf32, #tpu.memory_space<vmem>>, vector<16x4xf32>
    tpu.vector_store %arg12[%c0_130, %c0_131], %448 {strides = array<i32>} : memref<16x4xf32, #tpu.memory_space<vmem>>, vector<16x4xf32>,
    return
  }
}

</mosaic_0001>

<llo_original>
// kernel: tpu_custom_call.1
$region0: #{tpu_custom_call.1}
  #allocation0 [shape = 'u32[]', space=smem, size = 0x4, offset = 0x4, fixed_abs, tag = 'smem constant byte address 0x4 - core index']
  #allocation1 [shape = 'u32[144,128]{1,0:T(1,128)}', space=vmem, size = 0x12000, scoped, tag = 'internal scratch']
  #allocation2 [shape = 'f32[16,64]{1,0:T(8,128)}', space=vmem, size = 0x2000, scoped, tag = 'scratch operand']
  %s0 = inlined_call_operand.vmem [shape: f32[16,16], index: 0, kind: input, shape index: {}]
  %s1 = inlined_call_operand.vmem [shape: bf16[16,16], index: 1, kind: input, shape index: {}]
  %s2 = inlined_call_operand.vmem [shape: bf16[16,64], index: 2, kind: input, shape index: {}]
  %s3 = inlined_call_operand.vmem [shape: bf16[64,16], index: 3, kind: input, shape index: {}]
  %s4 = inlined_call_operand.vmem [shape: f32[1,64], index: 4, kind: input, shape index: {}]
  %s5 = inlined_call_operand.vmem [shape: bf16[64,64], index: 5, kind: input, shape index: {}]
  %s6 = inlined_call_operand.vmem [shape: bf16[64,16], index: 6, kind: input, shape index: {}]
  %s7 = inlined_call_operand.vmem [shape: f32[1,64], index: 7, kind: input, shape index: {}]
  %s8 = inlined_call_operand.vmem [shape: bf16[64,8], index: 8, kind: input, shape index: {}]
  %s9 = inlined_call_operand.vmem [shape: bf16[8,2], index: 9, kind: input, shape index: {}]
  %s10 = inlined_call_operand.vmem [shape: f32[1,8], index: 10, kind: input, shape index: {}]
  %s11 = inlined_call_operand.vmem [shape: f32[16,4], index: 11, kind: output, shape index: {0}]
  %s12 = inlined_call_operand.vmem [shape: f32[16,4], index: 12, kind: output, shape index: {1}]
  %13 = xla_tuple %s11, %s12
  %s14 = sld [smem:[#allocation0]]
  $region62: #{tpu_custom_call.1} parent=0
    _
  %s16 = ssub.s32 1, %s14
  %s17 = scalar_select 0, %s16, %s14
  // Predicated region
  $region2: #{tpu_custom_call.1} parent=0 // pred_check
    _
  $region3: #{tpu_custom_call.1} parent=0 // pred_check_branch
    %19 = sbr.rel (0) target = $region5
  $region4: #{tpu_custom_call.1} parent=0 // pred_region
    _
  $region5: #{tpu_custom_call.1} parent=0 // pred_fallthru
    _
  // Predicated region
  $region6: #{tpu_custom_call.1} parent=0 // pred_check
    _
  $region7: #{tpu_custom_call.1} parent=0 // pred_check_branch
    %21 = sbr.rel (0) target = $region9
  $region8: #{tpu_custom_call.1} parent=0 // pred_region
    _
  $region9: #{tpu_custom_call.1} parent=0 // pred_fallthru
    _
  // Predicated region
  $region10: #{tpu_custom_call.1} parent=0 // pred_check
    _
  $region11: #{tpu_custom_call.1} parent=0 // pred_check_branch
    %23 = sbr.rel (0) target = $region13
  $region12: #{tpu_custom_call.1} parent=0 // pred_region
    _
  $region13: #{tpu_custom_call.1} parent=0 // pred_fallthru
    _
  // Predicated region
  $region14: #{tpu_custom_call.1} parent=0 // pred_check
    _
  $region15: #{tpu_custom_call.1} parent=0 // pred_check_branch
    %25 = sbr.rel (0) target = $region17
  $region16: #{tpu_custom_call.1} parent=0 // pred_region
    _
  $region17: #{tpu_custom_call.1} parent=0 // pred_fallthru
    _
  // Predicated region
  $region18: #{tpu_custom_call.1} parent=0 // pred_check
    _
  $region19: #{tpu_custom_call.1} parent=0 // pred_check_branch
    %27 = sbr.rel (0) target = $region21
  $region20: #{tpu_custom_call.1} parent=0 // pred_region
    _
  $region21: #{tpu_custom_call.1} parent=0 // pred_fallthru
    _
  // Predicated region
  $region22: #{tpu_custom_call.1} parent=0 // pred_check
    _
  $region23: #{tpu_custom_call.1} parent=0 // pred_check_branch
    %29 = sbr.rel (0) target = $region25
  $region24: #{tpu_custom_call.1} parent=0 // pred_region
    _
  $region25: #{tpu_custom_call.1} parent=0 // pred_fallthru
    _
  // Predicated region
  $region26: #{tpu_custom_call.1} parent=0 // pred_check
    _
  $region27: #{tpu_custom_call.1} parent=0 // pred_check_branch
    %31 = sbr.rel (0) target = $region29
  $region28: #{tpu_custom_call.1} parent=0 // pred_region
    _
  $region29: #{tpu_custom_call.1} parent=0 // pred_fallthru
    _
  // Predicated region
  $region30: #{tpu_custom_call.1} parent=0 // pred_check
    _
  $region31: #{tpu_custom_call.1} parent=0 // pred_check_branch
    %33 = sbr.rel (0) target = $region33
  $region32: #{tpu_custom_call.1} parent=0 // pred_region
    _
  $region33: #{tpu_custom_call.1} parent=0 // pred_fallthru
    _
  // Predicated region
  $region34: #{tpu_custom_call.1} parent=0 // pred_check
    _
  $region35: #{tpu_custom_call.1} parent=0 // pred_check_branch
    %35 = sbr.rel (0) target = $region37
  $region36: #{tpu_custom_call.1} parent=0 // pred_region
    _
  $region37: #{tpu_custom_call.1} parent=0 // pred_fallthru
    _
  // Predicated region
  $region38: #{tpu_custom_call.1} parent=0 // pred_check
    _
  $region39: #{tpu_custom_call.1} parent=0 // pred_check_branch
    %37 = sbr.rel (0) target = $region41
  $region40: #{tpu_custom_call.1} parent=0 // pred_region
    _
  $region41: #{tpu_custom_call.1} parent=0 // pred_fallthru
    _
  // Predicated region
  $region42: #{tpu_custom_call.1} parent=0 // pred_check
    _
  $region43: #{tpu_custom_call.1} parent=0 // pred_check_branch
    %39 = sbr.rel (0) target = $region45
  $region44: #{tpu_custom_call.1} parent=0 // pred_region
    _
  $region45: #{tpu_custom_call.1} parent=0 // pred_fallthru
    _
  %v41 = vld [vmem:[%s1] sm:$0xf]
  %v42 = vld [vmem:[%s1 + $0x4] sm:$0xf]
  %v43 = vunpack.c.l.bf16 %v41
  %v44 = vunpack.c.l.bf16 %v42
  %v45 = vsub.f32 %v43, 1.0
  %v46 = vsub.f32 %v44, 1.0
  %v47 = vmul.f32 %v45, 1e+30
  %v48 = vmul.f32 %v46, 1e+30
  %v49 = vld [vmem:[%s0] sm:$0xff]
  %v50 = vld [vmem:[%s0 + $0x8] sm:$0xff]
  %v51 = vpack.c.bf16 %v50, %v49
  %v52 = vld [vmem:[%s2] sm:$0xf]
  %v53 = vld [vmem:[%s2 + $0x4] sm:$0xf]
  %v56 = vunpack.c.l.b16 %v52
  %v57 = vunpack.c.l.b16 %v53
  %v58 = vpack.c.b16 %v57, %v56
  %vm60 = vcmask 130048
  %v62 = vsel %vm60, %v51, 0
  %64 = vmatprep.subr.bf16.mxu0 0
  %65 = vmatpush1.bf16.msra.mxu0 %v58
  %66 = vmatprep.subr.bf16.mxu0 0
  %67 = vmatpush1.bf16.msra.mxu0 0
  %68 = vmatprep.subr.bf16.mxu0 0
  %69 = vmatpush1.bf16.msra.mxu0 0
  %70 = vmatprep.subr.bf16.mxu0 0
  %71 = vmatpush1.bf16.msra.mxu0 0
  %72 = vmatprep.subr.bf16.mxu0 0
  %73 = vmatpush1.bf16.msra.mxu0 0
  %74 = vmatprep.subr.bf16.mxu0 0
  %75 = vmatpush1.bf16.msra.mxu0 0
  %76 = vmatprep.subr.bf16.mxu0 0
  %77 = vmatpush1.bf16.msra.mxu0 0
  %78 = vmatprep.subr.bf16.mxu0 0
  %79 = vmatpush1.bf16.msra.mxu0 0
  %80 = vmatprep.subr.bf16.mxu0 0
  %81 = vmatpush1.bf16.msra.mxu0 0
  %82 = vmatprep.subr.bf16.mxu0 0
  %83 = vmatpush1.bf16.msra.mxu0 0
  %84 = vmatprep.subr.bf16.mxu0 0
  %85 = vmatpush1.bf16.msra.mxu0 0
  %86 = vmatprep.subr.bf16.mxu0 0
  %87 = vmatpush1.bf16.msra.mxu0 0
  %88 = vmatprep.subr.bf16.mxu0 0
  %89 = vmatpush1.bf16.msra.mxu0 0
  %90 = vmatprep.subr.bf16.mxu0 0
  %91 = vmatpush1.bf16.msra.mxu0 0
  %92 = vmatprep.subr.bf16.mxu0 0
  %93 = vmatpush1.bf16.msra.mxu0 0
  %94 = vmatprep.subr.bf16.mxu0 0
  %95 = vmatpush1.bf16.msra.mxu0 0
  %96 = vmatprep.mubr.bf16.mxu0 0
  %97 = vmatmul.mubr.bf16.gmra.mrb[0].mxu0 %v62
  %v98 = vpop.f32.mrb[0].mxu0
  %v99 = vadd.f32 0.0, %v98
  %v100 = vpop.f32.mrb[0].mxu0
  %v101 = vpop.f32.mrb[0].mxu0
  %v102 = vadd.f32 0.0, %v101
  %v103 = vpop.f32.mrb[0].mxu0
  %104 = vdwg.mxu0
  %v105 = vpack.c.bf16 %v102, %v99
  %v106 = vld [vmem:[%s3] sm:$0xf]
  %v107 = vld [vmem:[%s3 + $0x4] sm:$0xf]
  %v108 = vld [vmem:[%s3 + $0x8] sm:$0xf]
  %v109 = vld [vmem:[%s3 + $0xc] sm:$0xf]
  %v110 = vld [vmem:[%s3 + $0x10] sm:$0xf]
  %v111 = vld [vmem:[%s3 + $0x14] sm:$0xf]
  %v112 = vld [vmem:[%s3 + $0x18] sm:$0xf]
  %v113 = vld [vmem:[%s3 + $0x1c] sm:$0xf]
  %v122 = vunpack.c.l.b16 %v106
  %v123 = vunpack.c.l.b16 %v107
  %v124 = vunpack.c.l.b16 %v108
  %v125 = vunpack.c.l.b16 %v109
  %v126 = vunpack.c.l.b16 %v110
  %v127 = vunpack.c.l.b16 %v111
  %v128 = vunpack.c.l.b16 %v112
  %v129 = vunpack.c.l.b16 %v113
  %v130 = vpack.c.b16 %v123, %v122
  %v131 = vpack.c.b16 %v125, %v124
  %v132 = vpack.c.b16 %v127, %v126
  %v133 = vpack.c.b16 %v129, %v128
  %vm138 = vcmask 523264
  %v140 = vsel %vm138, %v105, 0
  %142 = vmatprep.subr.bf16.mxu0 0
  %143 = vmatpush1.bf16.msra.mxu0 %v130
  %144 = vmatprep.subr.bf16.mxu0 0
  %145 = vmatpush1.bf16.msra.mxu0 %v131
  %146 = vmatprep.subr.bf16.mxu0 0
  %147 = vmatpush1.bf16.msra.mxu0 %v132
  %148 = vmatprep.subr.bf16.mxu0 0
  %149 = vmatpush1.bf16.msra.mxu0 %v133
  %150 = vmatprep.subr.bf16.mxu0 0
  %151 = vmatpush1.bf16.msra.mxu0 0
  %152 = vmatprep.subr.bf16.mxu0 0
  %153 = vmatpush1.bf16.msra.mxu0 0
  %154 = vmatprep.subr.bf16.mxu0 0
  %155 = vmatpush1.bf16.msra.mxu0 0
  %156 = vmatprep.subr.bf16.mxu0 0
  %157 = vmatpush1.bf16.msra.mxu0 0
  %158 = vmatprep.subr.bf16.mxu0 0
  %159 = vmatpush1.bf16.msra.mxu0 0
  %160 = vmatprep.subr.bf16.mxu0 0
  %161 = vmatpush1.bf16.msra.mxu0 0
  %162 = vmatprep.subr.bf16.mxu0 0
  %163 = vmatpush1.bf16.msra.mxu0 0
  %164 = vmatprep.subr.bf16.mxu0 0
  %165 = vmatpush1.bf16.msra.mxu0 0
  %166 = vmatprep.subr.bf16.mxu0 0
  %167 = vmatpush1.bf16.msra.mxu0 0
  %168 = vmatprep.subr.bf16.mxu0 0
  %169 = vmatpush1.bf16.msra.mxu0 0
  %170 = vmatprep.subr.bf16.mxu0 0
  %171 = vmatpush1.bf16.msra.mxu0 0
  %172 = vmatprep.subr.bf16.mxu0 0
  %173 = vmatpush1.bf16.msra.mxu0 0
  %174 = vmatprep.mubr.bf16.mxu0 0
  %175 = vmatmul.mubr.bf16.gmra.mrb[0].mxu0 %v140
  %v176 = vpop.f32.mrb[0].mxu0
  %v177 = vadd.f32 0.0, %v176
  %v178 = vpop.f32.mrb[0].mxu0
  %v179 = vpop.f32.mrb[0].mxu0
  %v180 = vadd.f32 0.0, %v179
  %v181 = vpop.f32.mrb[0].mxu0
  %182 = vdwg.mxu0
  %185 = vrot.lane.b32.xlu0 %v177, 120
  %v186 = vpop.permute.xlu0 %185
  %187 = vrot.lane.b32.xlu0 %v180, 120
  %v188 = vpop.permute.xlu0 %187
  %191 = vxpose.xlu0.b32.start [1/16] %v186, 128
  %192 = vxpose.xlu0.b32.cont [2/16] %v188, 128
  %193 = vxpose.xlu0.b32.cont [3/16] 0.0, 128
  %194 = vxpose.xlu0.b32.cont [4/16] 0.0, 128
  %195 = vxpose.xlu0.b32.cont [5/16] 0.0, 128
  %196 = vxpose.xlu0.b32.cont [6/16] 0.0, 128
  %197 = vxpose.xlu0.b32.cont [7/16] 0.0, 128
  %198 = vxpose.xlu0.b32.cont [8/16] 0.0, 128
  %199 = vxpose.xlu0.b32.cont [9/16] 0.0, 128
  %200 = vxpose.xlu0.b32.cont [10/16] 0.0, 128
  %201 = vxpose.xlu0.b32.cont [11/16] 0.0, 128
  %202 = vxpose.xlu0.b32.cont [12/16] 0.0, 128
  %203 = vxpose.xlu0.b32.cont [13/16] 0.0, 128
  %204 = vxpose.xlu0.b32.cont [14/16] 0.0, 128
  %205 = vxpose.xlu0.b32.cont [15/16] 0.0, 128
  %206 = vxpose.xlu0.b32.end [16/16] 0.0, 128
  %v207 = vpop.trf.xlu0
  %v208 = vpop.trf.xlu0
  %v209 = vpop.trf.xlu0
  %v210 = vpop.trf.xlu0
  %v211 = vpop.trf.xlu0
  %v212 = vpop.trf.xlu0
  %v213 = vpop.trf.xlu0
  %v214 = vpop.trf.xlu0
  %v215 = vpop.trf.xlu0
  %v216 = vpop.trf.xlu0
  %v217 = vpop.trf.xlu0
  %v218 = vpop.trf.xlu0
  %v219 = vpop.trf.xlu0
  %v220 = vpop.trf.xlu0
  %v221 = vpop.trf.xlu0
  %v222 = vpop.trf.xlu0
  %223 = vset.pattern.permute.xlu0 0
  %224 = vperm.xlu0 %223, %v177
  %v225 = vpop.permute.xlu0 %224
  %227 = vset.pattern.permute.xlu0 0
  %228 = vperm.xlu0 %227, %v180
  %v229 = vpop.permute.xlu0 %228
  %v231 = vlaneseq
  %v232 = vshrl.u32 %v231, 7
  %v233 = vsub.s32 0, %v232
  %v234 = vrot.slane %v207, %v233
  %v235 = vadd.f32 %v225, %v234
  %v236 = vadd.f32 %v229, %v234
  %v237 = vmul.f32 %v235, 0.2
  %v238 = vmul.f32 %v236, 0.2
  %v239 = vmax.f32 %v235, %v237
  %v240 = vmax.f32 %v236, %v238
  %v241 = vadd.f32 %v239, %v47
  %v242 = vadd.f32 %v240, %v48
  %v243 = vsel %vm60, %v241, -inf
  %244 = vmax.xlane.f32.xlu0 %v243
  %v245 = vpop.xlane.xlu0 %244
  %v246 = vsel %vm60, %v242, -inf
  %247 = vmax.xlane.f32.xlu0 %v246
  %v248 = vpop.xlane.xlu0 %247
  %v249 = vsub.f32 %v241, %v245
  %v250 = vsub.f32 %v242, %v248
  %v251 = vmul.f32 %v249, 1.442695
  %v252 = vpow.pop %v251
  %v253 = vmul.f32 %v250, 1.442695
  %v254 = vpow.pop %v253
  %v255 = vsel %vm60, %v252, 0.0
  %256 = vadd.xlane.f32.xlu0 %v255
  %v257 = vpop.xlane.xlu0 %256
  %v258 = vsel %vm60, %v254, 0.0
  %259 = vadd.xlane.f32.xlu0 %v258
  %v260 = vpop.xlane.xlu0 %259
  %v261 = vrcp.pop %v257
  %v262 = vrcp.pop %v260
  %v263 = vmul.f32 %v252, %v261
  %v264 = vmul.f32 %v254, %v262
  %v265 = vpack.c.bf16 %v264, %v263
  %v267 = vsel %vm60, %v265, 0
  %269 = vmatprep.subr.bf16.mxu0 0
  %270 = vmatpush1.bf16.msra.mxu0 %v105
  %271 = vmatprep.subr.bf16.mxu0 0
  %272 = vmatpush1.bf16.msra.mxu0 0
  %273 = vmatprep.subr.bf16.mxu0 0
  %274 = vmatpush1.bf16.msra.mxu0 0
  %275 = vmatprep.subr.bf16.mxu0 0
  %276 = vmatpush1.bf16.msra.mxu0 0
  %277 = vmatprep.subr.bf16.mxu0 0
  %278 = vmatpush1.bf16.msra.mxu0 0
  %279 = vmatprep.subr.bf16.mxu0 0
  %280 = vmatpush1.bf16.msra.mxu0 0
  %281 = vmatprep.subr.bf16.mxu0 0
  %282 = vmatpush1.bf16.msra.mxu0 0
  %283 = vmatprep.subr.bf16.mxu0 0
  %284 = vmatpush1.bf16.msra.mxu0 0
  %285 = vmatprep.subr.bf16.mxu0 0
  %286 = vmatpush1.bf16.msra.mxu0 0
  %287 = vmatprep.subr.bf16.mxu0 0
  %288 = vmatpush1.bf16.msra.mxu0 0
  %289 = vmatprep.subr.bf16.mxu0 0
  %290 = vmatpush1.bf16.msra.mxu0 0
  %291 = vmatprep.subr.bf16.mxu0 0
  %292 = vmatpush1.bf16.msra.mxu0 0
  %293 = vmatprep.subr.bf16.mxu0 0
  %294 = vmatpush1.bf16.msra.mxu0 0
  %295 = vmatprep.subr.bf16.mxu0 0
  %296 = vmatpush1.bf16.msra.mxu0 0
  %297 = vmatprep.subr.bf16.mxu0 0
  %298 = vmatpush1.bf16.msra.mxu0 0
  %299 = vmatprep.subr.bf16.mxu0 0
  %300 = vmatpush1.bf16.msra.mxu0 0
  %301 = vmatprep.mubr.bf16.mxu0 0
  %302 = vmatmul.mubr.bf16.gmra.mrb[0].mxu0 %v267
  %v303 = vpop.f32.mrb[0].mxu0
  %v304 = vadd.f32 0.0, %v303
  %v305 = vpop.f32.mrb[0].mxu0
  %v306 = vpop.f32.mrb[0].mxu0
  %v307 = vadd.f32 0.0, %v306
  %v308 = vpop.f32.mrb[0].mxu0
  %309 = vdwg.mxu0
  %vm310 = vcmask 64512
  %311 = vst.msk [vmem:[#allocation2] sm:$0xff] %vm310, %v304
  %312 = vst.msk [vmem:[#allocation2 + $0x8] sm:$0xff] %vm310, %v307
  %313 = vset.pattern.permute.xlu0 1
  %314 = vperm.xlu0 %313, %v177
  %v315 = vpop.permute.xlu0 %314
  %317 = vset.pattern.permute.xlu0 1
  %318 = vperm.xlu0 %317, %v180
  %v319 = vpop.permute.xlu0 %318
  %v321 = vlaneseq
  %v322 = vshrl.u32 %v321, 7
  %v323 = vsub.s32 1, %v322
  %v324 = vrot.slane %v207, %v323
  %v325 = vadd.f32 %v315, %v324
  %v326 = vadd.f32 %v319, %v324
  %v327 = vmul.f32 %v325, 0.2
  %v328 = vmul.f32 %v326, 0.2
  %v329 = vmax.f32 %v325, %v327
  %v330 = vmax.f32 %v326, %v328
  %v331 = vadd.f32 %v329, %v47
  %v332 = vadd.f32 %v330, %v48
  %v333 = vsel %vm60, %v331, -inf
  %334 = vmax.xlane.f32.xlu0 %v333
  %v335 = vpop.xlane.xlu0 %334
  %v336 = vsel %vm60, %v332, -inf
  %337 = vmax.xlane.f32.xlu0 %v336
  %v338 = vpop.xlane.xlu0 %337
  %v339 = vsub.f32 %v331, %v335
  %v340 = vsub.f32 %v332, %v338
  %v341 = vmul.f32 %v339, 1.442695
  %v342 = vpow.pop %v341
  %v343 = vmul.f32 %v340, 1.442695
  %v344 = vpow.pop %v343
  %v345 = vsel %vm60, %v342, 0.0
  %346 = vadd.xlane.f32.xlu0 %v345
  %v347 = vpop.xlane.xlu0 %346
  %v348 = vsel %vm60, %v344, 0.0
  %349 = vadd.xlane.f32.xlu0 %v348
  %v350 = vpop.xlane.xlu0 %349
  %v351 = vrcp.pop %v347
  %v352 = vrcp.pop %v350
  %v353 = vmul.f32 %v342, %v351
  %v354 = vmul.f32 %v344, %v352
  %v355 = vpack.c.bf16 %v354, %v353
  %357 = vrot.lane.b32.xlu0 %v105, 120
  %v358 = vpop.permute.xlu0 %357
  %v361 = vsel %vm60, %v355, 0
  %363 = vmatprep.subr.bf16.mxu0 0
  %364 = vmatpush1.bf16.msra.mxu0 %v358
  %365 = vmatprep.subr.bf16.mxu0 0
  %366 = vmatpush1.bf16.msra.mxu0 0
  %367 = vmatprep.subr.bf16.mxu0 0
  %368 = vmatpush1.bf16.msra.mxu0 0
  %369 = vmatprep.subr.bf16.mxu0 0
  %370 = vmatpush1.bf16.msra.mxu0 0
  %371 = vmatprep.subr.bf16.mxu0 0
  %372 = vmatpush1.bf16.msra.mxu0 0
  %373 = vmatprep.subr.bf16.mxu0 0
  %374 = vmatpush1.bf16.msra.mxu0 0
  %375 = vmatprep.subr.bf16.mxu0 0
  %376 = vmatpush1.bf16.msra.mxu0 0
  %377 = vmatprep.subr.bf16.mxu0 0
  %378 = vmatpush1.bf16.msra.mxu0 0
  %379 = vmatprep.subr.bf16.mxu0 0
  %380 = vmatpush1.bf16.msra.mxu0 0
  %381 = vmatprep.subr.bf16.mxu0 0
  %382 = vmatpush1.bf16.msra.mxu0 0
  %383 = vmatprep.subr.bf16.mxu0 0
  %384 = vmatpush1.bf16.msra.mxu0 0
  %385 = vmatprep.subr.bf16.mxu0 0
  %386 = vmatpush1.bf16.msra.mxu0 0
  %387 = vmatprep.subr.bf16.mxu0 0
  %388 = vmatpush1.bf16.msra.mxu0 0
  %389 = vmatprep.subr.bf16.mxu0 0
  %390 = vmatpush1.bf16.msra.mxu0 0
  %391 = vmatprep.subr.bf16.mxu0 0
  %392 = vmatpush1.bf16.msra.mxu0 0
  %393 = vmatprep.subr.bf16.mxu0 0
  %394 = vmatpush1.bf16.msra.mxu0 0
  %395 = vmatprep.mubr.bf16.mxu0 0
  %396 = vmatmul.mubr.bf16.gmra.mrb[0].mxu0 %v361
  %v397 = vpop.f32.mrb[0].mxu0
  %v398 = vadd.f32 0.0, %v397
  %v399 = vpop.f32.mrb[0].mxu0
  %v400 = vpop.f32.mrb[0].mxu0
  %v401 = vadd.f32 0.0, %v400
  %v402 = vpop.f32.mrb[0].mxu0
  %403 = vdwg.mxu0
  %406 = vrot.lane.b32.xlu0 %v398, 8
  %v407 = vpop.permute.xlu0 %406
  %408 = vrot.lane.b32.xlu0 %v401, 8
  %v409 = vpop.permute.xlu0 %408
  %vm412 = vcmask 130112
  %413 = vst.msk [vmem:[#allocation2] sm:$0xff] %vm412, %v407
  %414 = vst.msk [vmem:[#allocation2 + $0x8] sm:$0xff] %vm412, %v409
  %415 = vset.pattern.permute.xlu0 2
  %416 = vperm.xlu0 %415, %v177
  %v417 = vpop.permute.xlu0 %416
  %419 = vset.pattern.permute.xlu0 2
  %420 = vperm.xlu0 %419, %v180
  %v421 = vpop.permute.xlu0 %420
  %v423 = vlaneseq
  %v424 = vshrl.u32 %v423, 7
  %v425 = vsub.s32 2, %v424
  %v426 = vrot.slane %v207, %v425
  %v427 = vadd.f32 %v417, %v426
  %v428 = vadd.f32 %v421, %v426
  %v429 = vmul.f32 %v427, 0.2
  %v430 = vmul.f32 %v428, 0.2
  %v431 = vmax.f32 %v427, %v429
  %v432 = vmax.f32 %v428, %v430
  %v433 = vadd.f32 %v431, %v47
  %v434 = vadd.f32 %v432, %v48
  %v435 = vsel %vm60, %v433, -inf
  %436 = vmax.xlane.f32.xlu0 %v435
  %v437 = vpop.xlane.xlu0 %436
  %v438 = vsel %vm60, %v434, -inf
  %439 = vmax.xlane.f32.xlu0 %v438
  %v440 = vpop.xlane.xlu0 %439
  %v441 = vsub.f32 %v433, %v437
  %v442 = vsub.f32 %v434, %v440
  %v443 = vmul.f32 %v441, 1.442695
  %v444 = vpow.pop %v443
  %v445 = vmul.f32 %v442, 1.442695
  %v446 = vpow.pop %v445
  %v447 = vsel %vm60, %v444, 0.0
  %448 = vadd.xlane.f32.xlu0 %v447
  %v449 = vpop.xlane.xlu0 %448
  %v450 = vsel %vm60, %v446, 0.0
  %451 = vadd.xlane.f32.xlu0 %v450
  %v452 = vpop.xlane.xlu0 %451
  %v453 = vrcp.pop %v449
  %v454 = vrcp.pop %v452
  %v455 = vmul.f32 %v444, %v453
  %v456 = vmul.f32 %v446, %v454
  %v457 = vpack.c.bf16 %v456, %v455
  %458 = vrot.lane.b32.xlu0 %v105, 112
  %v459 = vpop.permute.xlu0 %458
  %v462 = vsel %vm60, %v457, 0
  %464 = vmatprep.subr.bf16.mxu0 0
  %465 = vmatpush1.bf16.msra.mxu0 %v459
  %466 = vmatprep.subr.bf16.mxu0 0
  %467 = vmatpush1.bf16.msra.mxu0 0
  %468 = vmatprep.subr.bf16.mxu0 0
  %469 = vmatpush1.bf16.msra.mxu0 0
  %470 = vmatprep.subr.bf16.mxu0 0
  %471 = vmatpush1.bf16.msra.mxu0 0
  %472 = vmatprep.subr.bf16.mxu0 0
  %473 = vmatpush1.bf16.msra.mxu0 0
  %474 = vmatprep.subr.bf16.mxu0 0
  %475 = vmatpush1.bf16.msra.mxu0 0
  %476 = vmatprep.subr.bf16.mxu0 0
  %477 = vmatpush1.bf16.msra.mxu0 0
  %478 = vmatprep.subr.bf16.mxu0 0
  %479 = vmatpush1.bf16.msra.mxu0 0
  %480 = vmatprep.subr.bf16.mxu0 0
  %481 = vmatpush1.bf16.msra.mxu0 0
  %482 = vmatprep.subr.bf16.mxu0 0
  %483 = vmatpush1.bf16.msra.mxu0 0
  %484 = vmatprep.subr.bf16.mxu0 0
  %485 = vmatpush1.bf16.msra.mxu0 0
  %486 = vmatprep.subr.bf16.mxu0 0
  %487 = vmatpush1.bf16.msra.mxu0 0
  %488 = vmatprep.subr.bf16.mxu0 0
  %489 = vmatpush1.bf16.msra.mxu0 0
  %490 = vmatprep.subr.bf16.mxu0 0
  %491 = vmatpush1.bf16.msra.mxu0 0
  %492 = vmatprep.subr.bf16.mxu0 0
  %493 = vmatpush1.bf16.msra.mxu0 0
  %494 = vmatprep.subr.bf16.mxu0 0
  %495 = vmatpush1.bf16.msra.mxu0 0
  %496 = vmatprep.mubr.bf16.mxu0 0
  %497 = vmatmul.mubr.bf16.gmra.mrb[0].mxu0 %v462
  %v498 = vpop.f32.mrb[0].mxu0
  %v499 = vadd.f32 0.0, %v498
  %v500 = vpop.f32.mrb[0].mxu0
  %v501 = vpop.f32.mrb[0].mxu0
  %v502 = vadd.f32 0.0, %v501
  %v503 = vpop.f32.mrb[0].mxu0
  %504 = vdwg.mxu0
  %507 = vrot.lane.b32.xlu0 %v499, 16
  %v508 = vpop.permute.xlu0 %507
  %509 = vrot.lane.b32.xlu0 %v502, 16
  %v510 = vpop.permute.xlu0 %509
  %vm513 = vcmask 195712
  %514 = vst.msk [vmem:[#allocation2] sm:$0xff] %vm513, %v508
  %515 = vst.msk [vmem:[#allocation2 + $0x8] sm:$0xff] %vm513, %v510
  %516 = vset.pattern.permute.xlu0 3
  %517 = vperm.xlu0 %516, %v177
  %v518 = vpop.permute.xlu0 %517
  %520 = vset.pattern.permute.xlu0 3
  %521 = vperm.xlu0 %520, %v180
  %v522 = vpop.permute.xlu0 %521
  %v524 = vlaneseq
  %v525 = vshrl.u32 %v524, 7
  %v526 = vsub.s32 3, %v525
  %v527 = vrot.slane %v207, %v526
  %v528 = vadd.f32 %v518, %v527
  %v529 = vadd.f32 %v522, %v527
  %v530 = vmul.f32 %v528, 0.2
  %v531 = vmul.f32 %v529, 0.2
  %v532 = vmax.f32 %v528, %v530
  %v533 = vmax.f32 %v529, %v531
  %v534 = vadd.f32 %v532, %v47
  %v535 = vadd.f32 %v533, %v48
  %v536 = vsel %vm60, %v534, -inf
  %537 = vmax.xlane.f32.xlu0 %v536
  %v538 = vpop.xlane.xlu0 %537
  %v539 = vsel %vm60, %v535, -inf
  %540 = vmax.xlane.f32.xlu0 %v539
  %v541 = vpop.xlane.xlu0 %540
  %v542 = vsub.f32 %v534, %v538
  %v543 = vsub.f32 %v535, %v541
  %v544 = vmul.f32 %v542, 1.442695
  %v545 = vpow.pop %v544
  %v546 = vmul.f32 %v543, 1.442695
  %v547 = vpow.pop %v546
  %v548 = vsel %vm60, %v545, 0.0
  %549 = vadd.xlane.f32.xlu0 %v548
  %v550 = vpop.xlane.xlu0 %549
  %v551 = vsel %vm60, %v547, 0.0
  %552 = vadd.xlane.f32.xlu0 %v551
  %v553 = vpop.xlane.xlu0 %552
  %v554 = vrcp.pop %v550
  %v555 = vrcp.pop %v553
  %v556 = vmul.f32 %v545, %v554
  %v557 = vmul.f32 %v547, %v555
  %v558 = vpack.c.bf16 %v557, %v556
  %559 = vrot.lane.b32.xlu0 %v105, 104
  %v560 = vpop.permute.xlu0 %559
  %v563 = vsel %vm60, %v558, 0
  %565 = vmatprep.subr.bf16.mxu0 0
  %566 = vmatpush1.bf16.msra.mxu0 %v560
  %567 = vmatprep.subr.bf16.mxu0 0
  %568 = vmatpush1.bf16.msra.mxu0 0
  %569 = vmatprep.subr.bf16.mxu0 0
  %570 = vmatpush1.bf16.msra.mxu0 0
  %571 = vmatprep.subr.bf16.mxu0 0
  %572 = vmatpush1.bf16.msra.mxu0 0
  %573 = vmatprep.subr.bf16.mxu0 0
  %574 = vmatpush1.bf16.msra.mxu0 0
  %575 = vmatprep.subr.bf16.mxu0 0
  %576 = vmatpush1.bf16.msra.mxu0 0
  %577 = vmatprep.subr.bf16.mxu0 0
  %578 = vmatpush1.bf16.msra.mxu0 0
  %579 = vmatprep.subr.bf16.mxu0 0
  %580 = vmatpush1.bf16.msra.mxu0 0
  %581 = vmatprep.subr.bf16.mxu0 0
  %582 = vmatpush1.bf16.msra.mxu0 0
  %583 = vmatprep.subr.bf16.mxu0 0
  %584 = vmatpush1.bf16.msra.mxu0 0
  %585 = vmatprep.subr.bf16.mxu0 0
  %586 = vmatpush1.bf16.msra.mxu0 0
  %587 = vmatprep.subr.bf16.mxu0 0
  %588 = vmatpush1.bf16.msra.mxu0 0
  %589 = vmatprep.subr.bf16.mxu0 0
  %590 = vmatpush1.bf16.msra.mxu0 0
  %591 = vmatprep.subr.bf16.mxu0 0
  %592 = vmatpush1.bf16.msra.mxu0 0
  %593 = vmatprep.subr.bf16.mxu0 0
  %594 = vmatpush1.bf16.msra.mxu0 0
  %595 = vmatprep.subr.bf16.mxu0 0
  %596 = vmatpush1.bf16.msra.mxu0 0
  %597 = vmatprep.mubr.bf16.mxu0 0
  %598 = vmatmul.mubr.bf16.gmra.mrb[0].mxu0 %v563
  %v599 = vpop.f32.mrb[0].mxu0
  %v600 = vadd.f32 0.0, %v599
  %v601 = vpop.f32.mrb[0].mxu0
  %v602 = vpop.f32.mrb[0].mxu0
  %v603 = vadd.f32 0.0, %v602
  %v604 = vpop.f32.mrb[0].mxu0
  %605 = vdwg.mxu0
  %608 = vrot.lane.b32.xlu0 %v600, 24
  %v609 = vpop.permute.xlu0 %608
  %610 = vrot.lane.b32.xlu0 %v603, 24
  %v611 = vpop.permute.xlu0 %610
  %vm614 = vcmask 261312
  %615 = vst.msk [vmem:[#allocation2] sm:$0xff] %vm614, %v609
  %616 = vst.msk [vmem:[#allocation2 + $0x8] sm:$0xff] %vm614, %v611
  %617 = vset.pattern.permute.xlu0 4
  %618 = vperm.xlu0 %617, %v177
  %v619 = vpop.permute.xlu0 %618
  %621 = vset.pattern.permute.xlu0 4
  %622 = vperm.xlu0 %621, %v180
  %v623 = vpop.permute.xlu0 %622
  %v625 = vlaneseq
  %v626 = vshrl.u32 %v625, 7
  %v627 = vsub.s32 4, %v626
  %v628 = vrot.slane %v207, %v627
  %v629 = vadd.f32 %v619, %v628
  %v630 = vadd.f32 %v623, %v628
  %v631 = vmul.f32 %v629, 0.2
  %v632 = vmul.f32 %v630, 0.2
  %v633 = vmax.f32 %v629, %v631
  %v634 = vmax.f32 %v630, %v632
  %v635 = vadd.f32 %v633, %v47
  %v636 = vadd.f32 %v634, %v48
  %v637 = vsel %vm60, %v635, -inf
  %638 = vmax.xlane.f32.xlu0 %v637
  %v639 = vpop.xlane.xlu0 %638
  %v640 = vsel %vm60, %v636, -inf
  %641 = vmax.xlane.f32.xlu0 %v640
  %v642 = vpop.xlane.xlu0 %641
  %v643 = vsub.f32 %v635, %v639
  %v644 = vsub.f32 %v636, %v642
  %v645 = vmul.f32 %v643, 1.442695
  %v646 = vpow.pop %v645
  %v647 = vmul.f32 %v644, 1.442695
  %v648 = vpow.pop %v647
  %v649 = vsel %vm60, %v646, 0.0
  %650 = vadd.xlane.f32.xlu0 %v649
  %v651 = vpop.xlane.xlu0 %650
  %v652 = vsel %vm60, %v648, 0.0
  %653 = vadd.xlane.f32.xlu0 %v652
  %v654 = vpop.xlane.xlu0 %653
  %v655 = vrcp.pop %v651
  %v656 = vrcp.pop %v654
  %v657 = vmul.f32 %v646, %v655
  %v658 = vmul.f32 %v648, %v656
  %v659 = vpack.c.bf16 %v658, %v657
  %660 = vrot.lane.b32.xlu0 %v105, 96
  %v661 = vpop.permute.xlu0 %660
  %v664 = vsel %vm60, %v659, 0
  %666 = vmatprep.subr.bf16.mxu0 0
  %667 = vmatpush1.bf16.msra.mxu0 %v661
  %668 = vmatprep.subr.bf16.mxu0 0
  %669 = vmatpush1.bf16.msra.mxu0 0
  %670 = vmatprep.subr.bf16.mxu0 0
  %671 = vmatpush1.bf16.msra.mxu0 0
  %672 = vmatprep.subr.bf16.mxu0 0
  %673 = vmatpush1.bf16.msra.mxu0 0
  %674 = vmatprep.subr.bf16.mxu0 0
  %675 = vmatpush1.bf16.msra.mxu0 0
  %676 = vmatprep.subr.bf16.mxu0 0
  %677 = vmatpush1.bf16.msra.mxu0 0
  %678 = vmatprep.subr.bf16.mxu0 0
  %679 = vmatpush1.bf16.msra.mxu0 0
  %680 = vmatprep.subr.bf16.mxu0 0
  %681 = vmatpush1.bf16.msra.mxu0 0
  %682 = vmatprep.subr.bf16.mxu0 0
  %683 = vmatpush1.bf16.msra.mxu0 0
  %684 = vmatprep.subr.bf16.mxu0 0
  %685 = vmatpush1.bf16.msra.mxu0 0
  %686 = vmatprep.subr.bf16.mxu0 0
  %687 = vmatpush1.bf16.msra.mxu0 0
  %688 = vmatprep.subr.bf16.mxu0 0
  %689 = vmatpush1.bf16.msra.mxu0 0
  %690 = vmatprep.subr.bf16.mxu0 0
  %691 = vmatpush1.bf16.msra.mxu0 0
  %692 = vmatprep.subr.bf16.mxu0 0
  %693 = vmatpush1.bf16.msra.mxu0 0
  %694 = vmatprep.subr.bf16.mxu0 0
  %695 = vmatpush1.bf16.msra.mxu0 0
  %696 = vmatprep.subr.bf16.mxu0 0
  %697 = vmatpush1.bf16.msra.mxu0 0
  %698 = vmatprep.mubr.bf16.mxu0 0
  %699 = vmatmul.mubr.bf16.gmra.mrb[0].mxu0 %v664
  %v700 = vpop.f32.mrb[0].mxu0
  %v701 = vadd.f32 0.0, %v700
  %v702 = vpop.f32.mrb[0].mxu0
  %v703 = vpop.f32.mrb[0].mxu0
  %v704 = vadd.f32 0.0, %v703
  %v705 = vpop.f32.mrb[0].mxu0
  %706 = vdwg.mxu0
  %709 = vrot.lane.b32.xlu0 %v701, 32
  %v710 = vpop.permute.xlu0 %709
  %711 = vrot.lane.b32.xlu0 %v704, 32
  %v712 = vpop.permute.xlu0 %711
  %vm715 = vcmask 326912
  %716 = vst.msk [vmem:[#allocation2] sm:$0xff] %vm715, %v710
  %717 = vst.msk [vmem:[#allocation2 + $0x8] sm:$0xff] %vm715, %v712
  %718 = vset.pattern.permute.xlu0 5
  %719 = vperm.xlu0 %718, %v177
  %v720 = vpop.permute.xlu0 %719
  %722 = vset.pattern.permute.xlu0 5
  %723 = vperm.xlu0 %722, %v180
  %v724 = vpop.permute.xlu0 %723
  %v726 = vlaneseq
  %v727 = vshrl.u32 %v726, 7
  %v728 = vsub.s32 5, %v727
  %v729 = vrot.slane %v207, %v728
  %v730 = vadd.f32 %v720, %v729
  %v731 = vadd.f32 %v724, %v729
  %v732 = vmul.f32 %v730, 0.2
  %v733 = vmul.f32 %v731, 0.2
  %v734 = vmax.f32 %v730, %v732
  %v735 = vmax.f32 %v731, %v733
  %v736 = vadd.f32 %v734, %v47
  %v737 = vadd.f32 %v735, %v48
  %v738 = vsel %vm60, %v736, -inf
  %739 = vmax.xlane.f32.xlu0 %v738
  %v740 = vpop.xlane.xlu0 %739
  %v741 = vsel %vm60, %v737, -inf
  %742 = vmax.xlane.f32.xlu0 %v741
  %v743 = vpop.xlane.xlu0 %742
  %v744 = vsub.f32 %v736, %v740
  %v745 = vsub.f32 %v737, %v743
  %v746 = vmul.f32 %v744, 1.442695
  %v747 = vpow.pop %v746
  %v748 = vmul.f32 %v745, 1.442695
  %v749 = vpow.pop %v748
  %v750 = vsel %vm60, %v747, 0.0
  %751 = vadd.xlane.f32.xlu0 %v750
  %v752 = vpop.xlane.xlu0 %751
  %v753 = vsel %vm60, %v749, 0.0
  %754 = vadd.xlane.f32.xlu0 %v753
  %v755 = vpop.xlane.xlu0 %754
  %v756 = vrcp.pop %v752
  %v757 = vrcp.pop %v755
  %v758 = vmul.f32 %v747, %v756
  %v759 = vmul.f32 %v749, %v757
  %v760 = vpack.c.bf16 %v759, %v758
  %761 = vrot.lane.b32.xlu0 %v105, 88
  %v762 = vpop.permute.xlu0 %761
  %v765 = vsel %vm60, %v760, 0
  %767 = vmatprep.subr.bf16.mxu0 0
  %768 = vmatpush1.bf16.msra.mxu0 %v762
  %769 = vmatprep.subr.bf16.mxu0 0
  %770 = vmatpush1.bf16.msra.mxu0 0
  %771 = vmatprep.subr.bf16.mxu0 0
  %772 = vmatpush1.bf16.msra.mxu0 0
  %773 = vmatprep.subr.bf16.mxu0 0
  %774 = vmatpush1.bf16.msra.mxu0 0
  %775 = vmatprep.subr.bf16.mxu0 0
  %776 = vmatpush1.bf16.msra.mxu0 0
  %777 = vmatprep.subr.bf16.mxu0 0
  %778 = vmatpush1.bf16.msra.mxu0 0
  %779 = vmatprep.subr.bf16.mxu0 0
  %780 = vmatpush1.bf16.msra.mxu0 0
  %781 = vmatprep.subr.bf16.mxu0 0
  %782 = vmatpush1.bf16.msra.mxu0 0
  %783 = vmatprep.subr.bf16.mxu0 0
  %784 = vmatpush1.bf16.msra.mxu0 0
  %785 = vmatprep.subr.bf16.mxu0 0
  %786 = vmatpush1.bf16.msra.mxu0 0
  %787 = vmatprep.subr.bf16.mxu0 0
  %788 = vmatpush1.bf16.msra.mxu0 0
  %789 = vmatprep.subr.bf16.mxu0 0
  %790 = vmatpush1.bf16.msra.mxu0 0
  %791 = vmatprep.subr.bf16.mxu0 0
  %792 = vmatpush1.bf16.msra.mxu0 0
  %793 = vmatprep.subr.bf16.mxu0 0
  %794 = vmatpush1.bf16.msra.mxu0 0
  %795 = vmatprep.subr.bf16.mxu0 0
  %796 = vmatpush1.bf16.msra.mxu0 0
  %797 = vmatprep.subr.bf16.mxu0 0
  %798 = vmatpush1.bf16.msra.mxu0 0
  %799 = vmatprep.mubr.bf16.mxu0 0
  %800 = vmatmul.mubr.bf16.gmra.mrb[0].mxu0 %v765
  %v801 = vpop.f32.mrb[0].mxu0
  %v802 = vadd.f32 0.0, %v801
  %v803 = vpop.f32.mrb[0].mxu0
  %v804 = vpop.f32.mrb[0].mxu0
  %v805 = vadd.f32 0.0, %v804
  %v806 = vpop.f32.mrb[0].mxu0
  %807 = vdwg.mxu0
  %810 = vrot.lane.b32.xlu0 %v802, 40
  %v811 = vpop.permute.xlu0 %810
  %812 = vrot.lane.b32.xlu0 %v805, 40
  %v813 = vpop.permute.xlu0 %812
  %vm816 = vcmask 392512
  %817 = vst.msk [vmem:[#allocation2] sm:$0xff] %vm816, %v811
  %818 = vst.msk [vmem:[#allocation2 + $0x8] sm:$0xff] %vm816, %v813
  %819 = vset.pattern.permute.xlu0 6
  %820 = vperm.xlu0 %819, %v177
  %v821 = vpop.permute.xlu0 %820
  %823 = vset.pattern.permute.xlu0 6
  %824 = vperm.xlu0 %823, %v180
  %v825 = vpop.permute.xlu0 %824
  %v827 = vlaneseq
  %v828 = vshrl.u32 %v827, 7
  %v829 = vsub.s32 6, %v828
  %v830 = vrot.slane %v207, %v829
  %v831 = vadd.f32 %v821, %v830
  %v832 = vadd.f32 %v825, %v830
  %v833 = vmul.f32 %v831, 0.2
  %v834 = vmul.f32 %v832, 0.2
  %v835 = vmax.f32 %v831, %v833
  %v836 = vmax.f32 %v832, %v834
  %v837 = vadd.f32 %v835, %v47
  %v838 = vadd.f32 %v836, %v48
  %v839 = vsel %vm60, %v837, -inf
  %840 = vmax.xlane.f32.xlu0 %v839
  %v841 = vpop.xlane.xlu0 %840
  %v842 = vsel %vm60, %v838, -inf
  %843 = vmax.xlane.f32.xlu0 %v842
  %v844 = vpop.xlane.xlu0 %843
  %v845 = vsub.f32 %v837, %v841
  %v846 = vsub.f32 %v838, %v844
  %v847 = vmul.f32 %v845, 1.442695
  %v848 = vpow.pop %v847
  %v849 = vmul.f32 %v846, 1.442695
  %v850 = vpow.pop %v849
  %v851 = vsel %vm60, %v848, 0.0
  %852 = vadd.xlane.f32.xlu0 %v851
  %v853 = vpop.xlane.xlu0 %852
  %v854 = vsel %vm60, %v850, 0.0
  %855 = vadd.xlane.f32.xlu0 %v854
  %v856 = vpop.xlane.xlu0 %855
  %v857 = vrcp.pop %v853
  %v858 = vrcp.pop %v856
  %v859 = vmul.f32 %v848, %v857
  %v860 = vmul.f32 %v850, %v858
  %v861 = vpack.c.bf16 %v860, %v859
  %862 = vrot.lane.b32.xlu0 %v105, 80
  %v863 = vpop.permute.xlu0 %862
  %v866 = vsel %vm60, %v861, 0
  %868 = vmatprep.subr.bf16.mxu0 0
  %869 = vmatpush1.bf16.msra.mxu0 %v863
  %870 = vmatprep.subr.bf16.mxu0 0
  %871 = vmatpush1.bf16.msra.mxu0 0
  %872 = vmatprep.subr.bf16.mxu0 0
  %873 = vmatpush1.bf16.msra.mxu0 0
  %874 = vmatprep.subr.bf16.mxu0 0
  %875 = vmatpush1.bf16.msra.mxu0 0
  %876 = vmatprep.subr.bf16.mxu0 0
  %877 = vmatpush1.bf16.msra.mxu0 0
  %878 = vmatprep.subr.bf16.mxu0 0
  %879 = vmatpush1.bf16.msra.mxu0 0
  %880 = vmatprep.subr.bf16.mxu0 0
  %881 = vmatpush1.bf16.msra.mxu0 0
  %882 = vmatprep.subr.bf16.mxu0 0
  %883 = vmatpush1.bf16.msra.mxu0 0
  %884 = vmatprep.subr.bf16.mxu0 0
  %885 = vmatpush1.bf16.msra.mxu0 0
  %886 = vmatprep.subr.bf16.mxu0 0
  %887 = vmatpush1.bf16.msra.mxu0 0
  %888 = vmatprep.subr.bf16.mxu0 0
  %889 = vmatpush1.bf16.msra.mxu0 0
  %890 = vmatprep.subr.bf16.mxu0 0
  %891 = vmatpush1.bf16.msra.mxu0 0
  %892 = vmatprep.subr.bf16.mxu0 0
  %893 = vmatpush1.bf16.msra.mxu0 0
  %894 = vmatprep.subr.bf16.mxu0 0
  %895 = vmatpush1.bf16.msra.mxu0 0
  %896 = vmatprep.subr.bf16.mxu0 0
  %897 = vmatpush1.bf16.msra.mxu0 0
  %898 = vmatprep.subr.bf16.mxu0 0
  %899 = vmatpush1.bf16.msra.mxu0 0
  %900 = vmatprep.mubr.bf16.mxu0 0
  %901 = vmatmul.mubr.bf16.gmra.mrb[0].mxu0 %v866
  %v902 = vpop.f32.mrb[0].mxu0
  %v903 = vadd.f32 0.0, %v902
  %v904 = vpop.f32.mrb[0].mxu0
  %v905 = vpop.f32.mrb[0].mxu0
  %v906 = vadd.f32 0.0, %v905
  %v907 = vpop.f32.mrb[0].mxu0
  %908 = vdwg.mxu0
  %911 = vrot.lane.b32.xlu0 %v903, 48
  %v912 = vpop.permute.xlu0 %911
  %913 = vrot.lane.b32.xlu0 %v906, 48
  %v914 = vpop.permute.xlu0 %913
  %vm917 = vcmask 458112
  %918 = vst.msk [vmem:[#allocation2] sm:$0xff] %vm917, %v912
  %919 = vst.msk [vmem:[#allocation2 + $0x8] sm:$0xff] %vm917, %v914
  %920 = vset.pattern.permute.xlu0 7
  %921 = vperm.xlu0 %920, %v177
  %v922 = vpop.permute.xlu0 %921
  %924 = vset.pattern.permute.xlu0 7
  %925 = vperm.xlu0 %924, %v180
  %v926 = vpop.permute.xlu0 %925
  %v928 = vlaneseq
  %v929 = vshrl.u32 %v928, 7
  %v930 = vsub.s32 7, %v929
  %v931 = vrot.slane %v207, %v930
  %v932 = vadd.f32 %v922, %v931
  %v933 = vadd.f32 %v926, %v931
  %v934 = vmul.f32 %v932, 0.2
  %v935 = vmul.f32 %v933, 0.2
  %v936 = vmax.f32 %v932, %v934
  %v937 = vmax.f32 %v933, %v935
  %v938 = vadd.f32 %v936, %v47
  %v939 = vadd.f32 %v937, %v48
  %v940 = vsel %vm60, %v938, -inf
  %941 = vmax.xlane.f32.xlu0 %v940
  %v942 = vpop.xlane.xlu0 %941
  %v943 = vsel %vm60, %v939, -inf
  %944 = vmax.xlane.f32.xlu0 %v943
  %v945 = vpop.xlane.xlu0 %944
  %v946 = vsub.f32 %v938, %v942
  %v947 = vsub.f32 %v939, %v945
  %v948 = vmul.f32 %v946, 1.442695
  %v949 = vpow.pop %v948
  %v950 = vmul.f32 %v947, 1.442695
  %v951 = vpow.pop %v950
  %v952 = vsel %vm60, %v949, 0.0
  %953 = vadd.xlane.f32.xlu0 %v952
  %v954 = vpop.xlane.xlu0 %953
  %v955 = vsel %vm60, %v951, 0.0
  %956 = vadd.xlane.f32.xlu0 %v955
  %v957 = vpop.xlane.xlu0 %956
  %v958 = vrcp.pop %v954
  %v959 = vrcp.pop %v957
  %v960 = vmul.f32 %v949, %v958
  %v961 = vmul.f32 %v951, %v959
  %v962 = vpack.c.bf16 %v961, %v960
  %963 = vrot.lane.b32.xlu0 %v105, 72
  %v964 = vpop.permute.xlu0 %963
  %v967 = vsel %vm60, %v962, 0
  %969 = vmatprep.subr.bf16.mxu0 0
  %970 = vmatpush1.bf16.msra.mxu0 %v964
  %971 = vmatprep.subr.bf16.mxu0 0
  %972 = vmatpush1.bf16.msra.mxu0 0
  %973 = vmatprep.subr.bf16.mxu0 0
  %974 = vmatpush1.bf16.msra.mxu0 0
  %975 = vmatprep.subr.bf16.mxu0 0
  %976 = vmatpush1.bf16.msra.mxu0 0
  %977 = vmatprep.subr.bf16.mxu0 0
  %978 = vmatpush1.bf16.msra.mxu0 0
  %979 = vmatprep.subr.bf16.mxu0 0
  %980 = vmatpush1.bf16.msra.mxu0 0
  %981 = vmatprep.subr.bf16.mxu0 0
  %982 = vmatpush1.bf16.msra.mxu0 0
  %983 = vmatprep.subr.bf16.mxu0 0
  %984 = vmatpush1.bf16.msra.mxu0 0
  %985 = vmatprep.subr.bf16.mxu0 0
  %986 = vmatpush1.bf16.msra.mxu0 0
  %987 = vmatprep.subr.bf16.mxu0 0
  %988 = vmatpush1.bf16.msra.mxu0 0
  %989 = vmatprep.subr.bf16.mxu0 0
  %990 = vmatpush1.bf16.msra.mxu0 0
  %991 = vmatprep.subr.bf16.mxu0 0
  %992 = vmatpush1.bf16.msra.mxu0 0
  %993 = vmatprep.subr.bf16.mxu0 0
  %994 = vmatpush1.bf16.msra.mxu0 0
  %995 = vmatprep.subr.bf16.mxu0 0
  %996 = vmatpush1.bf16.msra.mxu0 0
  %997 = vmatprep.subr.bf16.mxu0 0
  %998 = vmatpush1.bf16.msra.mxu0 0
  %999 = vmatprep.subr.bf16.mxu0 0
  %1000 = vmatpush1.bf16.msra.mxu0 0
  %1001 = vmatprep.mubr.bf16.mxu0 0
  %1002 = vmatmul.mubr.bf16.gmra.mrb[0].mxu0 %v967
  %v1003 = vpop.f32.mrb[0].mxu0
  %v1004 = vadd.f32 0.0, %v1003
  %v1005 = vpop.f32.mrb[0].mxu0
  %v1006 = vpop.f32.mrb[0].mxu0
  %v1007 = vadd.f32 0.0, %v1006
  %v1008 = vpop.f32.mrb[0].mxu0
  %1009 = vdwg.mxu0
  %1012 = vrot.lane.b32.xlu0 %v1004, 56
  %v1013 = vpop.permute.xlu0 %1012
  %1014 = vrot.lane.b32.xlu0 %v1007, 56
  %v1015 = vpop.permute.xlu0 %1014
  %vm1018 = vcmask 523712
  %1019 = vst.msk [vmem:[#allocation2] sm:$0xff] %vm1018, %v1013
  %1020 = vst.msk [vmem:[#allocation2 + $0x8] sm:$0xff] %vm1018, %v1015
  %v1021 = vld [vmem:[#allocation2] sm:$0xff]
  %v1022 = vld [vmem:[#allocation2 + $0x8] sm:$0xff]
  %v1023 = vld [vmem:[%s4] sm:$0x1]
  %v1025 = vlaneseq
  %v1026 = vshrl.u32 %v1025, 7
  %v1027 = vsub.s32 0, %v1026
  %v1028 = vrot.slane %v1023, %v1027
  %v1030 = vadd.f32 %v1021, %v1028
  %v1031 = vadd.f32 %v1022, %v1028
  %v1032 = vmax.f32 %v1030, 0.0
  %v1033 = vmax.f32 %v1031, 0.0
  %v1034 = vpack.c.bf16 %v1033, %v1032
  %v1035 = vld [vmem:[%s5] sm:$0xf]
  %v1036 = vld [vmem:[%s5 + $0x4] sm:$0xf]
  %v1037 = vld [vmem:[%s5 + $0x8] sm:$0xf]
  %v1038 = vld [vmem:[%s5 + $0xc] sm:$0xf]
  %v1039 = vld [vmem:[%s5 + $0x10] sm:$0xf]
  %v1040 = vld [vmem:[%s5 + $0x14] sm:$0xf]
  %v1041 = vld [vmem:[%s5 + $0x18] sm:$0xf]
  %v1042 = vld [vmem:[%s5 + $0x1c] sm:$0xf]
  %v1051 = vunpack.c.l.b16 %v1035
  %v1052 = vunpack.c.l.b16 %v1036
  %v1053 = vunpack.c.l.b16 %v1037
  %v1054 = vunpack.c.l.b16 %v1038
  %v1055 = vunpack.c.l.b16 %v1039
  %v1056 = vunpack.c.l.b16 %v1040
  %v1057 = vunpack.c.l.b16 %v1041
  %v1058 = vunpack.c.l.b16 %v1042
  %v1059 = vpack.c.b16 %v1052, %v1051
  %v1060 = vpack.c.b16 %v1054, %v1053
  %v1061 = vpack.c.b16 %v1056, %v1055
  %v1062 = vpack.c.b16 %v1058, %v1057
  %v1068 = vsel %vm138, %v1034, 0
  %1070 = vmatprep.subr.bf16.mxu0 0
  %1071 = vmatpush1.bf16.msra.mxu0 %v1059
  %1072 = vmatprep.subr.bf16.mxu0 0
  %1073 = vmatpush1.bf16.msra.mxu0 %v1060
  %1074 = vmatprep.subr.bf16.mxu0 0
  %1075 = vmatpush1.bf16.msra.mxu0 %v1061
  %1076 = vmatprep.subr.bf16.mxu0 0
  %1077 = vmatpush1.bf16.msra.mxu0 %v1062
  %1078 = vmatprep.subr.bf16.mxu0 0
  %1079 = vmatpush1.bf16.msra.mxu0 0
  %1080 = vmatprep.subr.bf16.mxu0 0
  %1081 = vmatpush1.bf16.msra.mxu0 0
  %1082 = vmatprep.subr.bf16.mxu0 0
  %1083 = vmatpush1.bf16.msra.mxu0 0
  %1084 = vmatprep.subr.bf16.mxu0 0
  %1085 = vmatpush1.bf16.msra.mxu0 0
  %1086 = vmatprep.subr.bf16.mxu0 0
  %1087 = vmatpush1.bf16.msra.mxu0 0
  %1088 = vmatprep.subr.bf16.mxu0 0
  %1089 = vmatpush1.bf16.msra.mxu0 0
  %1090 = vmatprep.subr.bf16.mxu0 0
  %1091 = vmatpush1.bf16.msra.mxu0 0
  %1092 = vmatprep.subr.bf16.mxu0 0
  %1093 = vmatpush1.bf16.msra.mxu0 0
  %1094 = vmatprep.subr.bf16.mxu0 0
  %1095 = vmatpush1.bf16.msra.mxu0 0
  %1096 = vmatprep.subr.bf16.mxu0 0
  %1097 = vmatpush1.bf16.msra.mxu0 0
  %1098 = vmatprep.subr.bf16.mxu0 0
  %1099 = vmatpush1.bf16.msra.mxu0 0
  %1100 = vmatprep.subr.bf16.mxu0 0
  %1101 = vmatpush1.bf16.msra.mxu0 0
  %1102 = vmatprep.mubr.bf16.mxu0 0
  %1103 = vmatmul.mubr.bf16.gmra.mrb[0].mxu0 %v1068
  %v1104 = vpop.f32.mrb[0].mxu0
  %v1105 = vadd.f32 0.0, %v1104
  %v1106 = vpop.f32.mrb[0].mxu0
  %v1107 = vpop.f32.mrb[0].mxu0
  %v1108 = vadd.f32 0.0, %v1107
  %v1109 = vpop.f32.mrb[0].mxu0
  %1110 = vdwg.mxu0
  %v1111 = vpack.c.bf16 %v1108, %v1105
  %v1112 = vld [vmem:[%s6] sm:$0xf]
  %v1113 = vld [vmem:[%s6 + $0x4] sm:$0xf]
  %v1114 = vld [vmem:[%s6 + $0x8] sm:$0xf]
  %v1115 = vld [vmem:[%s6 + $0xc] sm:$0xf]
  %v1116 = vld [vmem:[%s6 + $0x10] sm:$0xf]
  %v1117 = vld [vmem:[%s6 + $0x14] sm:$0xf]
  %v1118 = vld [vmem:[%s6 + $0x18] sm:$0xf]
  %v1119 = vld [vmem:[%s6 + $0x1c] sm:$0xf]
  %v1128 = vunpack.c.l.b16 %v1112
  %v1129 = vunpack.c.l.b16 %v1113
  %v1130 = vunpack.c.l.b16 %v1114
  %v1131 = vunpack.c.l.b16 %v1115
  %v1132 = vunpack.c.l.b16 %v1116
  %v1133 = vunpack.c.l.b16 %v1117
  %v1134 = vunpack.c.l.b16 %v1118
  %v1135 = vunpack.c.l.b16 %v1119
  %v1136 = vpack.c.b16 %v1129, %v1128
  %v1137 = vpack.c.b16 %v1131, %v1130
  %v1138 = vpack.c.b16 %v1133, %v1132
  %v1139 = vpack.c.b16 %v1135, %v1134
  %v1145 = vsel %vm138, %v1111, 0
  %1147 = vmatprep.subr.bf16.mxu0 0
  %1148 = vmatpush1.bf16.msra.mxu0 %v1136
  %1149 = vmatprep.subr.bf16.mxu0 0
  %1150 = vmatpush1.bf16.msra.mxu0 %v1137
  %1151 = vmatprep.subr.bf16.mxu0 0
  %1152 = vmatpush1.bf16.msra.mxu0 %v1138
  %1153 = vmatprep.subr.bf16.mxu0 0
  %1154 = vmatpush1.bf16.msra.mxu0 %v1139
  %1155 = vmatprep.subr.bf16.mxu0 0
  %1156 = vmatpush1.bf16.msra.mxu0 0
  %1157 = vmatprep.subr.bf16.mxu0 0
  %1158 = vmatpush1.bf16.msra.mxu0 0
  %1159 = vmatprep.subr.bf16.mxu0 0
  %1160 = vmatpush1.bf16.msra.mxu0 0
  %1161 = vmatprep.subr.bf16.mxu0 0
  %1162 = vmatpush1.bf16.msra.mxu0 0
  %1163 = vmatprep.subr.bf16.mxu0 0
  %1164 = vmatpush1.bf16.msra.mxu0 0
  %1165 = vmatprep.subr.bf16.mxu0 0
  %1166 = vmatpush1.bf16.msra.mxu0 0
  %1167 = vmatprep.subr.bf16.mxu0 0
  %1168 = vmatpush1.bf16.msra.mxu0 0
  %1169 = vmatprep.subr.bf16.mxu0 0
  %1170 = vmatpush1.bf16.msra.mxu0 0
  %1171 = vmatprep.subr.bf16.mxu0 0
  %1172 = vmatpush1.bf16.msra.mxu0 0
  %1173 = vmatprep.subr.bf16.mxu0 0
  %1174 = vmatpush1.bf16.msra.mxu0 0
  %1175 = vmatprep.subr.bf16.mxu0 0
  %1176 = vmatpush1.bf16.msra.mxu0 0
  %1177 = vmatprep.subr.bf16.mxu0 0
  %1178 = vmatpush1.bf16.msra.mxu0 0
  %1179 = vmatprep.mubr.bf16.mxu0 0
  %1180 = vmatmul.mubr.bf16.gmra.mrb[0].mxu0 %v1145
  %v1181 = vpop.f32.mrb[0].mxu0
  %v1182 = vadd.f32 0.0, %v1181
  %v1183 = vpop.f32.mrb[0].mxu0
  %v1184 = vpop.f32.mrb[0].mxu0
  %v1185 = vadd.f32 0.0, %v1184
  %v1186 = vpop.f32.mrb[0].mxu0
  %1187 = vdwg.mxu0
  %1190 = vrot.lane.b32.xlu0 %v1182, 120
  %v1191 = vpop.permute.xlu0 %1190
  %1192 = vrot.lane.b32.xlu0 %v1185, 120
  %v1193 = vpop.permute.xlu0 %1192
  %1196 = vxpose.xlu0.b32.start [1/16] %v1191, 128
  %1197 = vxpose.xlu0.b32.cont [2/16] %v1193, 128
  %1198 = vxpose.xlu0.b32.cont [3/16] 0.0, 128
  %1199 = vxpose.xlu0.b32.cont [4/16] 0.0, 128
  %1200 = vxpose.xlu0.b32.cont [5/16] 0.0, 128
  %1201 = vxpose.xlu0.b32.cont [6/16] 0.0, 128
  %1202 = vxpose.xlu0.b32.cont [7/16] 0.0, 128
  %1203 = vxpose.xlu0.b32.cont [8/16] 0.0, 128
  %1204 = vxpose.xlu0.b32.cont [9/16] 0.0, 128
  %1205 = vxpose.xlu0.b32.cont [10/16] 0.0, 128
  %1206 = vxpose.xlu0.b32.cont [11/16] 0.0, 128
  %1207 = vxpose.xlu0.b32.cont [12/16] 0.0, 128
  %1208 = vxpose.xlu0.b32.cont [13/16] 0.0, 128
  %1209 = vxpose.xlu0.b32.cont [14/16] 0.0, 128
  %1210 = vxpose.xlu0.b32.cont [15/16] 0.0, 128
  %1211 = vxpose.xlu0.b32.end [16/16] 0.0, 128
  %v1212 = vpop.trf.xlu0
  %v1213 = vpop.trf.xlu0
  %v1214 = vpop.trf.xlu0
  %v1215 = vpop.trf.xlu0
  %v1216 = vpop.trf.xlu0
  %v1217 = vpop.trf.xlu0
  %v1218 = vpop.trf.xlu0
  %v1219 = vpop.trf.xlu0
  %v1220 = vpop.trf.xlu0
  %v1221 = vpop.trf.xlu0
  %v1222 = vpop.trf.xlu0
  %v1223 = vpop.trf.xlu0
  %v1224 = vpop.trf.xlu0
  %v1225 = vpop.trf.xlu0
  %v1226 = vpop.trf.xlu0
  %v1227 = vpop.trf.xlu0
  %1228 = vset.pattern.permute.xlu0 0
  %1229 = vperm.xlu0 %1228, %v1182
  %v1230 = vpop.permute.xlu0 %1229
  %1232 = vset.pattern.permute.xlu0 0
  %1233 = vperm.xlu0 %1232, %v1185
  %v1234 = vpop.permute.xlu0 %1233
  %v1236 = vlaneseq
  %v1237 = vshrl.u32 %v1236, 7
  %v1238 = vsub.s32 0, %v1237
  %v1239 = vrot.slane %v1212, %v1238
  %v1240 = vadd.f32 %v1230, %v1239
  %v1241 = vadd.f32 %v1234, %v1239
  %v1242 = vmul.f32 %v1240, 0.2
  %v1243 = vmul.f32 %v1241, 0.2
  %v1244 = vmax.f32 %v1240, %v1242
  %v1245 = vmax.f32 %v1241, %v1243
  %v1246 = vadd.f32 %v1244, %v47
  %v1247 = vadd.f32 %v1245, %v48
  %v1248 = vsel %vm60, %v1246, -inf
  %1249 = vmax.xlane.f32.xlu0 %v1248
  %v1250 = vpop.xlane.xlu0 %1249
  %v1251 = vsel %vm60, %v1247, -inf
  %1252 = vmax.xlane.f32.xlu0 %v1251
  %v1253 = vpop.xlane.xlu0 %1252
  %v1254 = vsub.f32 %v1246, %v1250
  %v1255 = vsub.f32 %v1247, %v1253
  %v1256 = vmul.f32 %v1254, 1.442695
  %v1257 = vpow.pop %v1256
  %v1258 = vmul.f32 %v1255, 1.442695
  %v1259 = vpow.pop %v1258
  %v1260 = vsel %vm60, %v1257, 0.0
  %1261 = vadd.xlane.f32.xlu0 %v1260
  %v1262 = vpop.xlane.xlu0 %1261
  %v1263 = vsel %vm60, %v1259, 0.0
  %1264 = vadd.xlane.f32.xlu0 %v1263
  %v1265 = vpop.xlane.xlu0 %1264
  %v1266 = vrcp.pop %v1262
  %v1267 = vrcp.pop %v1265
  %v1268 = vmul.f32 %v1257, %v1266
  %v1269 = vmul.f32 %v1259, %v1267
  %v1270 = vpack.c.bf16 %v1269, %v1268
  %v1272 = vsel %vm60, %v1270, 0
  %1274 = vmatprep.subr.bf16.mxu0 0
  %1275 = vmatpush1.bf16.msra.mxu0 %v1111
  %1276 = vmatprep.subr.bf16.mxu0 0
  %1277 = vmatpush1.bf16.msra.mxu0 0
  %1278 = vmatprep.subr.bf16.mxu0 0
  %1279 = vmatpush1.bf16.msra.mxu0 0
  %1280 = vmatprep.subr.bf16.mxu0 0
  %1281 = vmatpush1.bf16.msra.mxu0 0
  %1282 = vmatprep.subr.bf16.mxu0 0
  %1283 = vmatpush1.bf16.msra.mxu0 0
  %1284 = vmatprep.subr.bf16.mxu0 0
  %1285 = vmatpush1.bf16.msra.mxu0 0
  %1286 = vmatprep.subr.bf16.mxu0 0
  %1287 = vmatpush1.bf16.msra.mxu0 0
  %1288 = vmatprep.subr.bf16.mxu0 0
  %1289 = vmatpush1.bf16.msra.mxu0 0
  %1290 = vmatprep.subr.bf16.mxu0 0
  %1291 = vmatpush1.bf16.msra.mxu0 0
  %1292 = vmatprep.subr.bf16.mxu0 0
  %1293 = vmatpush1.bf16.msra.mxu0 0
  %1294 = vmatprep.subr.bf16.mxu0 0
  %1295 = vmatpush1.bf16.msra.mxu0 0
  %1296 = vmatprep.subr.bf16.mxu0 0
  %1297 = vmatpush1.bf16.msra.mxu0 0
  %1298 = vmatprep.subr.bf16.mxu0 0
  %1299 = vmatpush1.bf16.msra.mxu0 0
  %1300 = vmatprep.subr.bf16.mxu0 0
  %1301 = vmatpush1.bf16.msra.mxu0 0
  %1302 = vmatprep.subr.bf16.mxu0 0
  %1303 = vmatpush1.bf16.msra.mxu0 0
  %1304 = vmatprep.subr.bf16.mxu0 0
  %1305 = vmatpush1.bf16.msra.mxu0 0
  %1306 = vmatprep.mubr.bf16.mxu0 0
  %1307 = vmatmul.mubr.bf16.gmra.mrb[0].mxu0 %v1272
  %v1308 = vpop.f32.mrb[0].mxu0
  %v1309 = vadd.f32 0.0, %v1308
  %v1310 = vpop.f32.mrb[0].mxu0
  %v1311 = vpop.f32.mrb[0].mxu0
  %v1312 = vadd.f32 0.0, %v1311
  %v1313 = vpop.f32.mrb[0].mxu0
  %1314 = vdwg.mxu0
  %1315 = vst.msk [vmem:[#allocation2] sm:$0xff] %vm310, %v1309
  %1316 = vst.msk [vmem:[#allocation2 + $0x8] sm:$0xff] %vm310, %v1312
  %1317 = vset.pattern.permute.xlu0 1
  %1318 = vperm.xlu0 %1317, %v1182
  %v1319 = vpop.permute.xlu0 %1318
  %1321 = vset.pattern.permute.xlu0 1
  %1322 = vperm.xlu0 %1321, %v1185
  %v1323 = vpop.permute.xlu0 %1322
  %v1325 = vlaneseq
  %v1326 = vshrl.u32 %v1325, 7
  %v1327 = vsub.s32 1, %v1326
  %v1328 = vrot.slane %v1212, %v1327
  %v1329 = vadd.f32 %v1319, %v1328
  %v1330 = vadd.f32 %v1323, %v1328
  %v1331 = vmul.f32 %v1329, 0.2
  %v1332 = vmul.f32 %v1330, 0.2
  %v1333 = vmax.f32 %v1329, %v1331
  %v1334 = vmax.f32 %v1330, %v1332
  %v1335 = vadd.f32 %v1333, %v47
  %v1336 = vadd.f32 %v1334, %v48
  %v1337 = vsel %vm60, %v1335, -inf
  %1338 = vmax.xlane.f32.xlu0 %v1337
  %v1339 = vpop.xlane.xlu0 %1338
  %v1340 = vsel %vm60, %v1336, -inf
  %1341 = vmax.xlane.f32.xlu0 %v1340
  %v1342 = vpop.xlane.xlu0 %1341
  %v1343 = vsub.f32 %v1335, %v1339
  %v1344 = vsub.f32 %v1336, %v1342
  %v1345 = vmul.f32 %v1343, 1.442695
  %v1346 = vpow.pop %v1345
  %v1347 = vmul.f32 %v1344, 1.442695
  %v1348 = vpow.pop %v1347
  %v1349 = vsel %vm60, %v1346, 0.0
  %1350 = vadd.xlane.f32.xlu0 %v1349
  %v1351 = vpop.xlane.xlu0 %1350
  %v1352 = vsel %vm60, %v1348, 0.0
  %1353 = vadd.xlane.f32.xlu0 %v1352
  %v1354 = vpop.xlane.xlu0 %1353
  %v1355 = vrcp.pop %v1351
  %v1356 = vrcp.pop %v1354
  %v1357 = vmul.f32 %v1346, %v1355
  %v1358 = vmul.f32 %v1348, %v1356
  %v1359 = vpack.c.bf16 %v1358, %v1357
  %1361 = vrot.lane.b32.xlu0 %v1111, 120
  %v1362 = vpop.permute.xlu0 %1361
  %v1365 = vsel %vm60, %v1359, 0
  %1367 = vmatprep.subr.bf16.mxu0 0
  %1368 = vmatpush1.bf16.msra.mxu0 %v1362
  %1369 = vmatprep.subr.bf16.mxu0 0
  %1370 = vmatpush1.bf16.msra.mxu0 0
  %1371 = vmatprep.subr.bf16.mxu0 0
  %1372 = vmatpush1.bf16.msra.mxu0 0
  %1373 = vmatprep.subr.bf16.mxu0 0
  %1374 = vmatpush1.bf16.msra.mxu0 0
  %1375 = vmatprep.subr.bf16.mxu0 0
  %1376 = vmatpush1.bf16.msra.mxu0 0
  %1377 = vmatprep.subr.bf16.mxu0 0
  %1378 = vmatpush1.bf16.msra.mxu0 0
  %1379 = vmatprep.subr.bf16.mxu0 0
  %1380 = vmatpush1.bf16.msra.mxu0 0
  %1381 = vmatprep.subr.bf16.mxu0 0
  %1382 = vmatpush1.bf16.msra.mxu0 0
  %1383 = vmatprep.subr.bf16.mxu0 0
  %1384 = vmatpush1.bf16.msra.mxu0 0
  %1385 = vmatprep.subr.bf16.mxu0 0
  %1386 = vmatpush1.bf16.msra.mxu0 0
  %1387 = vmatprep.subr.bf16.mxu0 0
  %1388 = vmatpush1.bf16.msra.mxu0 0
  %1389 = vmatprep.subr.bf16.mxu0 0
  %1390 = vmatpush1.bf16.msra.mxu0 0
  %1391 = vmatprep.subr.bf16.mxu0 0
  %1392 = vmatpush1.bf16.msra.mxu0 0
  %1393 = vmatprep.subr.bf16.mxu0 0
  %1394 = vmatpush1.bf16.msra.mxu0 0
  %1395 = vmatprep.subr.bf16.mxu0 0
  %1396 = vmatpush1.bf16.msra.mxu0 0
  %1397 = vmatprep.subr.bf16.mxu0 0
  %1398 = vmatpush1.bf16.msra.mxu0 0
  %1399 = vmatprep.mubr.bf16.mxu0 0
  %1400 = vmatmul.mubr.bf16.gmra.mrb[0].mxu0 %v1365
  %v1401 = vpop.f32.mrb[0].mxu0
  %v1402 = vadd.f32 0.0, %v1401
  %v1403 = vpop.f32.mrb[0].mxu0
  %v1404 = vpop.f32.mrb[0].mxu0
  %v1405 = vadd.f32 0.0, %v1404
  %v1406 = vpop.f32.mrb[0].mxu0
  %1407 = vdwg.mxu0
  %1410 = vrot.lane.b32.xlu0 %v1402, 8
  %v1411 = vpop.permute.xlu0 %1410
  %1412 = vrot.lane.b32.xlu0 %v1405, 8
  %v1413 = vpop.permute.xlu0 %1412
  %1416 = vst.msk [vmem:[#allocation2] sm:$0xff] %vm412, %v1411
  %1417 = vst.msk [vmem:[#allocation2 + $0x8] sm:$0xff] %vm412, %v1413
  %1418 = vset.pattern.permute.xlu0 2
  %1419 = vperm.xlu0 %1418, %v1182
  %v1420 = vpop.permute.xlu0 %1419
  %1422 = vset.pattern.permute.xlu0 2
  %1423 = vperm.xlu0 %1422, %v1185
  %v1424 = vpop.permute.xlu0 %1423
  %v1426 = vlaneseq
  %v1427 = vshrl.u32 %v1426, 7
  %v1428 = vsub.s32 2, %v1427
  %v1429 = vrot.slane %v1212, %v1428
  %v1430 = vadd.f32 %v1420, %v1429
  %v1431 = vadd.f32 %v1424, %v1429
  %v1432 = vmul.f32 %v1430, 0.2
  %v1433 = vmul.f32 %v1431, 0.2
  %v1434 = vmax.f32 %v1430, %v1432
  %v1435 = vmax.f32 %v1431, %v1433
  %v1436 = vadd.f32 %v1434, %v47
  %v1437 = vadd.f32 %v1435, %v48
  %v1438 = vsel %vm60, %v1436, -inf
  %1439 = vmax.xlane.f32.xlu0 %v1438
  %v1440 = vpop.xlane.xlu0 %1439
  %v1441 = vsel %vm60, %v1437, -inf
  %1442 = vmax.xlane.f32.xlu0 %v1441
  %v1443 = vpop.xlane.xlu0 %1442
  %v1444 = vsub.f32 %v1436, %v1440
  %v1445 = vsub.f32 %v1437, %v1443
  %v1446 = vmul.f32 %v1444, 1.442695
  %v1447 = vpow.pop %v1446
  %v1448 = vmul.f32 %v1445, 1.442695
  %v1449 = vpow.pop %v1448
  %v1450 = vsel %vm60, %v1447, 0.0
  %1451 = vadd.xlane.f32.xlu0 %v1450
  %v1452 = vpop.xlane.xlu0 %1451
  %v1453 = vsel %vm60, %v1449, 0.0
  %1454 = vadd.xlane.f32.xlu0 %v1453
  %v1455 = vpop.xlane.xlu0 %1454
  %v1456 = vrcp.pop %v1452
  %v1457 = vrcp.pop %v1455
  %v1458 = vmul.f32 %v1447, %v1456
  %v1459 = vmul.f32 %v1449, %v1457
  %v1460 = vpack.c.bf16 %v1459, %v1458
  %1461 = vrot.lane.b32.xlu0 %v1111, 112
  %v1462 = vpop.permute.xlu0 %1461
  %v1465 = vsel %vm60, %v1460, 0
  %1467 = vmatprep.subr.bf16.mxu0 0
  %1468 = vmatpush1.bf16.msra.mxu0 %v1462
  %1469 = vmatprep.subr.bf16.mxu0 0
  %1470 = vmatpush1.bf16.msra.mxu0 0
  %1471 = vmatprep.subr.bf16.mxu0 0
  %1472 = vmatpush1.bf16.msra.mxu0 0
  %1473 = vmatprep.subr.bf16.mxu0 0
  %1474 = vmatpush1.bf16.msra.mxu0 0
  %1475 = vmatprep.subr.bf16.mxu0 0
  %1476 = vmatpush1.bf16.msra.mxu0 0
  %1477 = vmatprep.subr.bf16.mxu0 0
  %1478 = vmatpush1.bf16.msra.mxu0 0
  %1479 = vmatprep.subr.bf16.mxu0 0
  %1480 = vmatpush1.bf16.msra.mxu0 0
  %1481 = vmatprep.subr.bf16.mxu0 0
  %1482 = vmatpush1.bf16.msra.mxu0 0
  %1483 = vmatprep.subr.bf16.mxu0 0
  %1484 = vmatpush1.bf16.msra.mxu0 0
  %1485 = vmatprep.subr.bf16.mxu0 0
  %1486 = vmatpush1.bf16.msra.mxu0 0
  %1487 = vmatprep.subr.bf16.mxu0 0
  %1488 = vmatpush1.bf16.msra.mxu0 0
  %1489 = vmatprep.subr.bf16.mxu0 0
  %1490 = vmatpush1.bf16.msra.mxu0 0
  %1491 = vmatprep.subr.bf16.mxu0 0
  %1492 = vmatpush1.bf16.msra.mxu0 0
  %1493 = vmatprep.subr.bf16.mxu0 0
  %1494 = vmatpush1.bf16.msra.mxu0 0
  %1495 = vmatprep.subr.bf16.mxu0 0
  %1496 = vmatpush1.bf16.msra.mxu0 0
  %1497 = vmatprep.subr.bf16.mxu0 0
  %1498 = vmatpush1.bf16.msra.mxu0 0
  %1499 = vmatprep.mubr.bf16.mxu0 0
  %1500 = vmatmul.mubr.bf16.gmra.mrb[0].mxu0 %v1465
  %v1501 = vpop.f32.mrb[0].mxu0
  %v1502 = vadd.f32 0.0, %v1501
  %v1503 = vpop.f32.mrb[0].mxu0
  %v1504 = vpop.f32.mrb[0].mxu0
  %v1505 = vadd.f32 0.0, %v1504
  %v1506 = vpop.f32.mrb[0].mxu0
  %1507 = vdwg.mxu0
  %1510 = vrot.lane.b32.xlu0 %v1502, 16
  %v1511 = vpop.permute.xlu0 %1510
  %1512 = vrot.lane.b32.xlu0 %v1505, 16
  %v1513 = vpop.permute.xlu0 %1512
  %1516 = vst.msk [vmem:[#allocation2] sm:$0xff] %vm513, %v1511
  %1517 = vst.msk [vmem:[#allocation2 + $0x8] sm:$0xff] %vm513, %v1513
  %1518 = vset.pattern.permute.xlu0 3
  %1519 = vperm.xlu0 %1518, %v1182
  %v1520 = vpop.permute.xlu0 %1519
  %1522 = vset.pattern.permute.xlu0 3
  %1523 = vperm.xlu0 %1522, %v1185
  %v1524 = vpop.permute.xlu0 %1523
  %v1526 = vlaneseq
  %v1527 = vshrl.u32 %v1526, 7
  %v1528 = vsub.s32 3, %v1527
  %v1529 = vrot.slane %v1212, %v1528
  %v1530 = vadd.f32 %v1520, %v1529
  %v1531 = vadd.f32 %v1524, %v1529
  %v1532 = vmul.f32 %v1530, 0.2
  %v1533 = vmul.f32 %v1531, 0.2
  %v1534 = vmax.f32 %v1530, %v1532
  %v1535 = vmax.f32 %v1531, %v1533
  %v1536 = vadd.f32 %v1534, %v47
  %v1537 = vadd.f32 %v1535, %v48
  %v1538 = vsel %vm60, %v1536, -inf
  %1539 = vmax.xlane.f32.xlu0 %v1538
  %v1540 = vpop.xlane.xlu0 %1539
  %v1541 = vsel %vm60, %v1537, -inf
  %1542 = vmax.xlane.f32.xlu0 %v1541
  %v1543 = vpop.xlane.xlu0 %1542
  %v1544 = vsub.f32 %v1536, %v1540
  %v1545 = vsub.f32 %v1537, %v1543
  %v1546 = vmul.f32 %v1544, 1.442695
  %v1547 = vpow.pop %v1546
  %v1548 = vmul.f32 %v1545, 1.442695
  %v1549 = vpow.pop %v1548
  %v1550 = vsel %vm60, %v1547, 0.0
  %1551 = vadd.xlane.f32.xlu0 %v1550
  %v1552 = vpop.xlane.xlu0 %1551
  %v1553 = vsel %vm60, %v1549, 0.0
  %1554 = vadd.xlane.f32.xlu0 %v1553
  %v1555 = vpop.xlane.xlu0 %1554
  %v1556 = vrcp.pop %v1552
  %v1557 = vrcp.pop %v1555
  %v1558 = vmul.f32 %v1547, %v1556
  %v1559 = vmul.f32 %v1549, %v1557
  %v1560 = vpack.c.bf16 %v1559, %v1558
  %1561 = vrot.lane.b32.xlu0 %v1111, 104
  %v1562 = vpop.permute.xlu0 %1561
  %v1565 = vsel %vm60, %v1560, 0
  %1567 = vmatprep.subr.bf16.mxu0 0
  %1568 = vmatpush1.bf16.msra.mxu0 %v1562
  %1569 = vmatprep.subr.bf16.mxu0 0
  %1570 = vmatpush1.bf16.msra.mxu0 0
  %1571 = vmatprep.subr.bf16.mxu0 0
  %1572 = vmatpush1.bf16.msra.mxu0 0
  %1573 = vmatprep.subr.bf16.mxu0 0
  %1574 = vmatpush1.bf16.msra.mxu0 0
  %1575 = vmatprep.subr.bf16.mxu0 0
  %1576 = vmatpush1.bf16.msra.mxu0 0
  %1577 = vmatprep.subr.bf16.mxu0 0
  %1578 = vmatpush1.bf16.msra.mxu0 0
  %1579 = vmatprep.subr.bf16.mxu0 0
  %1580 = vmatpush1.bf16.msra.mxu0 0
  %1581 = vmatprep.subr.bf16.mxu0 0
  %1582 = vmatpush1.bf16.msra.mxu0 0
  %1583 = vmatprep.subr.bf16.mxu0 0
  %1584 = vmatpush1.bf16.msra.mxu0 0
  %1585 = vmatprep.subr.bf16.mxu0 0
  %1586 = vmatpush1.bf16.msra.mxu0 0
  %1587 = vmatprep.subr.bf16.mxu0 0
  %1588 = vmatpush1.bf16.msra.mxu0 0
  %1589 = vmatprep.subr.bf16.mxu0 0
  %1590 = vmatpush1.bf16.msra.mxu0 0
  %1591 = vmatprep.subr.bf16.mxu0 0
  %1592 = vmatpush1.bf16.msra.mxu0 0
  %1593 = vmatprep.subr.bf16.mxu0 0
  %1594 = vmatpush1.bf16.msra.mxu0 0
  %1595 = vmatprep.subr.bf16.mxu0 0
  %1596 = vmatpush1.bf16.msra.mxu0 0
  %1597 = vmatprep.subr.bf16.mxu0 0
  %1598 = vmatpush1.bf16.msra.mxu0 0
  %1599 = vmatprep.mubr.bf16.mxu0 0
  %1600 = vmatmul.mubr.bf16.gmra.mrb[0].mxu0 %v1565
  %v1601 = vpop.f32.mrb[0].mxu0
  %v1602 = vadd.f32 0.0, %v1601
  %v1603 = vpop.f32.mrb[0].mxu0
  %v1604 = vpop.f32.mrb[0].mxu0
  %v1605 = vadd.f32 0.0, %v1604
  %v1606 = vpop.f32.mrb[0].mxu0
  %1607 = vdwg.mxu0
  %1610 = vrot.lane.b32.xlu0 %v1602, 24
  %v1611 = vpop.permute.xlu0 %1610
  %1612 = vrot.lane.b32.xlu0 %v1605, 24
  %v1613 = vpop.permute.xlu0 %1612
  %1616 = vst.msk [vmem:[#allocation2] sm:$0xff] %vm614, %v1611
  %1617 = vst.msk [vmem:[#allocation2 + $0x8] sm:$0xff] %vm614, %v1613
  %1618 = vset.pattern.permute.xlu0 4
  %1619 = vperm.xlu0 %1618, %v1182
  %v1620 = vpop.permute.xlu0 %1619
  %1622 = vset.pattern.permute.xlu0 4
  %1623 = vperm.xlu0 %1622, %v1185
  %v1624 = vpop.permute.xlu0 %1623
  %v1626 = vlaneseq
  %v1627 = vshrl.u32 %v1626, 7
  %v1628 = vsub.s32 4, %v1627
  %v1629 = vrot.slane %v1212, %v1628
  %v1630 = vadd.f32 %v1620, %v1629
  %v1631 = vadd.f32 %v1624, %v1629
  %v1632 = vmul.f32 %v1630, 0.2
  %v1633 = vmul.f32 %v1631, 0.2
  %v1634 = vmax.f32 %v1630, %v1632
  %v1635 = vmax.f32 %v1631, %v1633
  %v1636 = vadd.f32 %v1634, %v47
  %v1637 = vadd.f32 %v1635, %v48
  %v1638 = vsel %vm60, %v1636, -inf
  %1639 = vmax.xlane.f32.xlu0 %v1638
  %v1640 = vpop.xlane.xlu0 %1639
  %v1641 = vsel %vm60, %v1637, -inf
  %1642 = vmax.xlane.f32.xlu0 %v1641
  %v1643 = vpop.xlane.xlu0 %1642
  %v1644 = vsub.f32 %v1636, %v1640
  %v1645 = vsub.f32 %v1637, %v1643
  %v1646 = vmul.f32 %v1644, 1.442695
  %v1647 = vpow.pop %v1646
  %v1648 = vmul.f32 %v1645, 1.442695
  %v1649 = vpow.pop %v1648
  %v1650 = vsel %vm60, %v1647, 0.0
  %1651 = vadd.xlane.f32.xlu0 %v1650
  %v1652 = vpop.xlane.xlu0 %1651
  %v1653 = vsel %vm60, %v1649, 0.0
  %1654 = vadd.xlane.f32.xlu0 %v1653
  %v1655 = vpop.xlane.xlu0 %1654
  %v1656 = vrcp.pop %v1652
  %v1657 = vrcp.pop %v1655
  %v1658 = vmul.f32 %v1647, %v1656
  %v1659 = vmul.f32 %v1649, %v1657
  %v1660 = vpack.c.bf16 %v1659, %v1658
  %1661 = vrot.lane.b32.xlu0 %v1111, 96
  %v1662 = vpop.permute.xlu0 %1661
  %v1665 = vsel %vm60, %v1660, 0
  %1667 = vmatprep.subr.bf16.mxu0 0
  %1668 = vmatpush1.bf16.msra.mxu0 %v1662
  %1669 = vmatprep.subr.bf16.mxu0 0
  %1670 = vmatpush1.bf16.msra.mxu0 0
  %1671 = vmatprep.subr.bf16.mxu0 0
  %1672 = vmatpush1.bf16.msra.mxu0 0
  %1673 = vmatprep.subr.bf16.mxu0 0
  %1674 = vmatpush1.bf16.msra.mxu0 0
  %1675 = vmatprep.subr.bf16.mxu0 0
  %1676 = vmatpush1.bf16.msra.mxu0 0
  %1677 = vmatprep.subr.bf16.mxu0 0
  %1678 = vmatpush1.bf16.msra.mxu0 0
  %1679 = vmatprep.subr.bf16.mxu0 0
  %1680 = vmatpush1.bf16.msra.mxu0 0
  %1681 = vmatprep.subr.bf16.mxu0 0
  %1682 = vmatpush1.bf16.msra.mxu0 0
  %1683 = vmatprep.subr.bf16.mxu0 0
  %1684 = vmatpush1.bf16.msra.mxu0 0
  %1685 = vmatprep.subr.bf16.mxu0 0
  %1686 = vmatpush1.bf16.msra.mxu0 0
  %1687 = vmatprep.subr.bf16.mxu0 0
  %1688 = vmatpush1.bf16.msra.mxu0 0
  %1689 = vmatprep.subr.bf16.mxu0 0
  %1690 = vmatpush1.bf16.msra.mxu0 0
  %1691 = vmatprep.subr.bf16.mxu0 0
  %1692 = vmatpush1.bf16.msra.mxu0 0
  %1693 = vmatprep.subr.bf16.mxu0 0
  %1694 = vmatpush1.bf16.msra.mxu0 0
  %1695 = vmatprep.subr.bf16.mxu0 0
  %1696 = vmatpush1.bf16.msra.mxu0 0
  %1697 = vmatprep.subr.bf16.mxu0 0
  %1698 = vmatpush1.bf16.msra.mxu0 0
  %1699 = vmatprep.mubr.bf16.mxu0 0
  %1700 = vmatmul.mubr.bf16.gmra.mrb[0].mxu0 %v1665
  %v1701 = vpop.f32.mrb[0].mxu0
  %v1702 = vadd.f32 0.0, %v1701
  %v1703 = vpop.f32.mrb[0].mxu0
  %v1704 = vpop.f32.mrb[0].mxu0
  %v1705 = vadd.f32 0.0, %v1704
  %v1706 = vpop.f32.mrb[0].mxu0
  %1707 = vdwg.mxu0
  %1710 = vrot.lane.b32.xlu0 %v1702, 32
  %v1711 = vpop.permute.xlu0 %1710
  %1712 = vrot.lane.b32.xlu0 %v1705, 32
  %v1713 = vpop.permute.xlu0 %1712
  %1716 = vst.msk [vmem:[#allocation2] sm:$0xff] %vm715, %v1711
  %1717 = vst.msk [vmem:[#allocation2 + $0x8] sm:$0xff] %vm715, %v1713
  %1718 = vset.pattern.permute.xlu0 5
  %1719 = vperm.xlu0 %1718, %v1182
  %v1720 = vpop.permute.xlu0 %1719
  %1722 = vset.pattern.permute.xlu0 5
  %1723 = vperm.xlu0 %1722, %v1185
  %v1724 = vpop.permute.xlu0 %1723
  %v1726 = vlaneseq
  %v1727 = vshrl.u32 %v1726, 7
  %v1728 = vsub.s32 5, %v1727
  %v1729 = vrot.slane %v1212, %v1728
  %v1730 = vadd.f32 %v1720, %v1729
  %v1731 = vadd.f32 %v1724, %v1729
  %v1732 = vmul.f32 %v1730, 0.2
  %v1733 = vmul.f32 %v1731, 0.2
  %v1734 = vmax.f32 %v1730, %v1732
  %v1735 = vmax.f32 %v1731, %v1733
  %v1736 = vadd.f32 %v1734, %v47
  %v1737 = vadd.f32 %v1735, %v48
  %v1738 = vsel %vm60, %v1736, -inf
  %1739 = vmax.xlane.f32.xlu0 %v1738
  %v1740 = vpop.xlane.xlu0 %1739
  %v1741 = vsel %vm60, %v1737, -inf
  %1742 = vmax.xlane.f32.xlu0 %v1741
  %v1743 = vpop.xlane.xlu0 %1742
  %v1744 = vsub.f32 %v1736, %v1740
  %v1745 = vsub.f32 %v1737, %v1743
  %v1746 = vmul.f32 %v1744, 1.442695
  %v1747 = vpow.pop %v1746
  %v1748 = vmul.f32 %v1745, 1.442695
  %v1749 = vpow.pop %v1748
  %v1750 = vsel %vm60, %v1747, 0.0
  %1751 = vadd.xlane.f32.xlu0 %v1750
  %v1752 = vpop.xlane.xlu0 %1751
  %v1753 = vsel %vm60, %v1749, 0.0
  %1754 = vadd.xlane.f32.xlu0 %v1753
  %v1755 = vpop.xlane.xlu0 %1754
  %v1756 = vrcp.pop %v1752
  %v1757 = vrcp.pop %v1755
  %v1758 = vmul.f32 %v1747, %v1756
  %v1759 = vmul.f32 %v1749, %v1757
  %v1760 = vpack.c.bf16 %v1759, %v1758
  %1761 = vrot.lane.b32.xlu0 %v1111, 88
  %v1762 = vpop.permute.xlu0 %1761
  %v1765 = vsel %vm60, %v1760, 0
  %1767 = vmatprep.subr.bf16.mxu0 0
  %1768 = vmatpush1.bf16.msra.mxu0 %v1762
  %1769 = vmatprep.subr.bf16.mxu0 0
  %1770 = vmatpush1.bf16.msra.mxu0 0
  %1771 = vmatprep.subr.bf16.mxu0 0
  %1772 = vmatpush1.bf16.msra.mxu0 0
  %1773 = vmatprep.subr.bf16.mxu0 0
  %1774 = vmatpush1.bf16.msra.mxu0 0
  %1775 = vmatprep.subr.bf16.mxu0 0
  %1776 = vmatpush1.bf16.msra.mxu0 0
  %1777 = vmatprep.subr.bf16.mxu0 0
  %1778 = vmatpush1.bf16.msra.mxu0 0
  %1779 = vmatprep.subr.bf16.mxu0 0
  %1780 = vmatpush1.bf16.msra.mxu0 0
  %1781 = vmatprep.subr.bf16.mxu0 0
  %1782 = vmatpush1.bf16.msra.mxu0 0
  %1783 = vmatprep.subr.bf16.mxu0 0
  %1784 = vmatpush1.bf16.msra.mxu0 0
  %1785 = vmatprep.subr.bf16.mxu0 0
  %1786 = vmatpush1.bf16.msra.mxu0 0
  %1787 = vmatprep.subr.bf16.mxu0 0
  %1788 = vmatpush1.bf16.msra.mxu0 0
  %1789 = vmatprep.subr.bf16.mxu0 0
  %1790 = vmatpush1.bf16.msra.mxu0 0
  %1791 = vmatprep.subr.bf16.mxu0 0
  %1792 = vmatpush1.bf16.msra.mxu0 0
  %1793 = vmatprep.subr.bf16.mxu0 0
  %1794 = vmatpush1.bf16.msra.mxu0 0
  %1795 = vmatprep.subr.bf16.mxu0 0
  %1796 = vmatpush1.bf16.msra.mxu0 0
  %1797 = vmatprep.subr.bf16.mxu0 0
  %1798 = vmatpush1.bf16.msra.mxu0 0
  %1799 = vmatprep.mubr.bf16.mxu0 0
  %1800 = vmatmul.mubr.bf16.gmra.mrb[0].mxu0 %v1765
  %v1801 = vpop.f32.mrb[0].mxu0
  %v1802 = vadd.f32 0.0, %v1801
  %v1803 = vpop.f32.mrb[0].mxu0
  %v1804 = vpop.f32.mrb[0].mxu0
  %v1805 = vadd.f32 0.0, %v1804
  %v1806 = vpop.f32.mrb[0].mxu0
  %1807 = vdwg.mxu0
  %1810 = vrot.lane.b32.xlu0 %v1802, 40
  %v1811 = vpop.permute.xlu0 %1810
  %1812 = vrot.lane.b32.xlu0 %v1805, 40
  %v1813 = vpop.permute.xlu0 %1812
  %1816 = vst.msk [vmem:[#allocation2] sm:$0xff] %vm816, %v1811
  %1817 = vst.msk [vmem:[#allocation2 + $0x8] sm:$0xff] %vm816, %v1813
  %1818 = vset.pattern.permute.xlu0 6
  %1819 = vperm.xlu0 %1818, %v1182
  %v1820 = vpop.permute.xlu0 %1819
  %1822 = vset.pattern.permute.xlu0 6
  %1823 = vperm.xlu0 %1822, %v1185
  %v1824 = vpop.permute.xlu0 %1823
  %v1826 = vlaneseq
  %v1827 = vshrl.u32 %v1826, 7
  %v1828 = vsub.s32 6, %v1827
  %v1829 = vrot.slane %v1212, %v1828
  %v1830 = vadd.f32 %v1820, %v1829
  %v1831 = vadd.f32 %v1824, %v1829
  %v1832 = vmul.f32 %v1830, 0.2
  %v1833 = vmul.f32 %v1831, 0.2
  %v1834 = vmax.f32 %v1830, %v1832
  %v1835 = vmax.f32 %v1831, %v1833
  %v1836 = vadd.f32 %v1834, %v47
  %v1837 = vadd.f32 %v1835, %v48
  %v1838 = vsel %vm60, %v1836, -inf
  %1839 = vmax.xlane.f32.xlu0 %v1838
  %v1840 = vpop.xlane.xlu0 %1839
  %v1841 = vsel %vm60, %v1837, -inf
  %1842 = vmax.xlane.f32.xlu0 %v1841
  %v1843 = vpop.xlane.xlu0 %1842
  %v1844 = vsub.f32 %v1836, %v1840
  %v1845 = vsub.f32 %v1837, %v1843
  %v1846 = vmul.f32 %v1844, 1.442695
  %v1847 = vpow.pop %v1846
  %v1848 = vmul.f32 %v1845, 1.442695
  %v1849 = vpow.pop %v1848
  %v1850 = vsel %vm60, %v1847, 0.0
  %1851 = vadd.xlane.f32.xlu0 %v1850
  %v1852 = vpop.xlane.xlu0 %1851
  %v1853 = vsel %vm60, %v1849, 0.0
  %1854 = vadd.xlane.f32.xlu0 %v1853
  %v1855 = vpop.xlane.xlu0 %1854
  %v1856 = vrcp.pop %v1852
  %v1857 = vrcp.pop %v1855
  %v1858 = vmul.f32 %v1847, %v1856
  %v1859 = vmul.f32 %v1849, %v1857
  %v1860 = vpack.c.bf16 %v1859, %v1858
  %1861 = vrot.lane.b32.xlu0 %v1111, 80
  %v1862 = vpop.permute.xlu0 %1861
  %v1865 = vsel %vm60, %v1860, 0
  %1867 = vmatprep.subr.bf16.mxu0 0
  %1868 = vmatpush1.bf16.msra.mxu0 %v1862
  %1869 = vmatprep.subr.bf16.mxu0 0
  %1870 = vmatpush1.bf16.msra.mxu0 0
  %1871 = vmatprep.subr.bf16.mxu0 0
  %1872 = vmatpush1.bf16.msra.mxu0 0
  %1873 = vmatprep.subr.bf16.mxu0 0
  %1874 = vmatpush1.bf16.msra.mxu0 0
  %1875 = vmatprep.subr.bf16.mxu0 0
  %1876 = vmatpush1.bf16.msra.mxu0 0
  %1877 = vmatprep.subr.bf16.mxu0 0
  %1878 = vmatpush1.bf16.msra.mxu0 0
  %1879 = vmatprep.subr.bf16.mxu0 0
  %1880 = vmatpush1.bf16.msra.mxu0 0
  %1881 = vmatprep.subr.bf16.mxu0 0
  %1882 = vmatpush1.bf16.msra.mxu0 0
  %1883 = vmatprep.subr.bf16.mxu0 0
  %1884 = vmatpush1.bf16.msra.mxu0 0
  %1885 = vmatprep.subr.bf16.mxu0 0
  %1886 = vmatpush1.bf16.msra.mxu0 0
  %1887 = vmatprep.subr.bf16.mxu0 0
  %1888 = vmatpush1.bf16.msra.mxu0 0
  %1889 = vmatprep.subr.bf16.mxu0 0
  %1890 = vmatpush1.bf16.msra.mxu0 0
  %1891 = vmatprep.subr.bf16.mxu0 0
  %1892 = vmatpush1.bf16.msra.mxu0 0
  %1893 = vmatprep.subr.bf16.mxu0 0
  %1894 = vmatpush1.bf16.msra.mxu0 0
  %1895 = vmatprep.subr.bf16.mxu0 0
  %1896 = vmatpush1.bf16.msra.mxu0 0
  %1897 = vmatprep.subr.bf16.mxu0 0
  %1898 = vmatpush1.bf16.msra.mxu0 0
  %1899 = vmatprep.mubr.bf16.mxu0 0
  %1900 = vmatmul.mubr.bf16.gmra.mrb[0].mxu0 %v1865
  %v1901 = vpop.f32.mrb[0].mxu0
  %v1902 = vadd.f32 0.0, %v1901
  %v1903 = vpop.f32.mrb[0].mxu0
  %v1904 = vpop.f32.mrb[0].mxu0
  %v1905 = vadd.f32 0.0, %v1904
  %v1906 = vpop.f32.mrb[0].mxu0
  %1907 = vdwg.mxu0
  %1910 = vrot.lane.b32.xlu0 %v1902, 48
  %v1911 = vpop.permute.xlu0 %1910
  %1912 = vrot.lane.b32.xlu0 %v1905, 48
  %v1913 = vpop.permute.xlu0 %1912
  %1916 = vst.msk [vmem:[#allocation2] sm:$0xff] %vm917, %v1911
  %1917 = vst.msk [vmem:[#allocation2 + $0x8] sm:$0xff] %vm917, %v1913
  %1918 = vset.pattern.permute.xlu0 7
  %1919 = vperm.xlu0 %1918, %v1182
  %v1920 = vpop.permute.xlu0 %1919
  %1922 = vset.pattern.permute.xlu0 7
  %1923 = vperm.xlu0 %1922, %v1185
  %v1924 = vpop.permute.xlu0 %1923
  %v1926 = vlaneseq
  %v1927 = vshrl.u32 %v1926, 7
  %v1928 = vsub.s32 7, %v1927
  %v1929 = vrot.slane %v1212, %v1928
  %v1930 = vadd.f32 %v1920, %v1929
  %v1931 = vadd.f32 %v1924, %v1929
  %v1932 = vmul.f32 %v1930, 0.2
  %v1933 = vmul.f32 %v1931, 0.2
  %v1934 = vmax.f32 %v1930, %v1932
  %v1935 = vmax.f32 %v1931, %v1933
  %v1936 = vadd.f32 %v1934, %v47
  %v1937 = vadd.f32 %v1935, %v48
  %v1938 = vsel %vm60, %v1936, -inf
  %1939 = vmax.xlane.f32.xlu0 %v1938
  %v1940 = vpop.xlane.xlu0 %1939
  %v1941 = vsel %vm60, %v1937, -inf
  %1942 = vmax.xlane.f32.xlu0 %v1941
  %v1943 = vpop.xlane.xlu0 %1942
  %v1944 = vsub.f32 %v1936, %v1940
  %v1945 = vsub.f32 %v1937, %v1943
  %v1946 = vmul.f32 %v1944, 1.442695
  %v1947 = vpow.pop %v1946
  %v1948 = vmul.f32 %v1945, 1.442695
  %v1949 = vpow.pop %v1948
  %v1950 = vsel %vm60, %v1947, 0.0
  %1951 = vadd.xlane.f32.xlu0 %v1950
  %v1952 = vpop.xlane.xlu0 %1951
  %v1953 = vsel %vm60, %v1949, 0.0
  %1954 = vadd.xlane.f32.xlu0 %v1953
  %v1955 = vpop.xlane.xlu0 %1954
  %v1956 = vrcp.pop %v1952
  %v1957 = vrcp.pop %v1955
  %v1958 = vmul.f32 %v1947, %v1956
  %v1959 = vmul.f32 %v1949, %v1957
  %v1960 = vpack.c.bf16 %v1959, %v1958
  %1961 = vrot.lane.b32.xlu0 %v1111, 72
  %v1962 = vpop.permute.xlu0 %1961
  %v1965 = vsel %vm60, %v1960, 0
  %1967 = vmatprep.subr.bf16.mxu0 0
  %1968 = vmatpush1.bf16.msra.mxu0 %v1962
  %1969 = vmatprep.subr.bf16.mxu0 0
  %1970 = vmatpush1.bf16.msra.mxu0 0
  %1971 = vmatprep.subr.bf16.mxu0 0
  %1972 = vmatpush1.bf16.msra.mxu0 0
  %1973 = vmatprep.subr.bf16.mxu0 0
  %1974 = vmatpush1.bf16.msra.mxu0 0
  %1975 = vmatprep.subr.bf16.mxu0 0
  %1976 = vmatpush1.bf16.msra.mxu0 0
  %1977 = vmatprep.subr.bf16.mxu0 0
  %1978 = vmatpush1.bf16.msra.mxu0 0
  %1979 = vmatprep.subr.bf16.mxu0 0
  %1980 = vmatpush1.bf16.msra.mxu0 0
  %1981 = vmatprep.subr.bf16.mxu0 0
  %1982 = vmatpush1.bf16.msra.mxu0 0
  %1983 = vmatprep.subr.bf16.mxu0 0
  %1984 = vmatpush1.bf16.msra.mxu0 0
  %1985 = vmatprep.subr.bf16.mxu0 0
  %1986 = vmatpush1.bf16.msra.mxu0 0
  %1987 = vmatprep.subr.bf16.mxu0 0
  %1988 = vmatpush1.bf16.msra.mxu0 0
  %1989 = vmatprep.subr.bf16.mxu0 0
  %1990 = vmatpush1.bf16.msra.mxu0 0
  %1991 = vmatprep.subr.bf16.mxu0 0
  %1992 = vmatpush1.bf16.msra.mxu0 0
  %1993 = vmatprep.subr.bf16.mxu0 0
  %1994 = vmatpush1.bf16.msra.mxu0 0
  %1995 = vmatprep.subr.bf16.mxu0 0
  %1996 = vmatpush1.bf16.msra.mxu0 0
  %1997 = vmatprep.subr.bf16.mxu0 0
  %1998 = vmatpush1.bf16.msra.mxu0 0
  %1999 = vmatprep.mubr.bf16.mxu0 0
  %2000 = vmatmul.mubr.bf16.gmra.mrb[0].mxu0 %v1965
  %v2001 = vpop.f32.mrb[0].mxu0
  %v2002 = vadd.f32 0.0, %v2001
  %v2003 = vpop.f32.mrb[0].mxu0
  %v2004 = vpop.f32.mrb[0].mxu0
  %v2005 = vadd.f32 0.0, %v2004
  %v2006 = vpop.f32.mrb[0].mxu0
  %2007 = vdwg.mxu0
  %2010 = vrot.lane.b32.xlu0 %v2002, 56
  %v2011 = vpop.permute.xlu0 %2010
  %2012 = vrot.lane.b32.xlu0 %v2005, 56
  %v2013 = vpop.permute.xlu0 %2012
  %2016 = vst.msk [vmem:[#allocation2] sm:$0xff] %vm1018, %v2011
  %2017 = vst.msk [vmem:[#allocation2 + $0x8] sm:$0xff] %vm1018, %v2013
  %v2018 = vld [vmem:[#allocation2] sm:$0xff]
  %v2019 = vld [vmem:[#allocation2 + $0x8] sm:$0xff]
  %v2020 = vld [vmem:[%s7] sm:$0x1]
  %v2022 = vlaneseq
  %v2023 = vshrl.u32 %v2022, 7
  %v2024 = vsub.s32 0, %v2023
  %v2025 = vrot.slane %v2020, %v2024
  %v2027 = vadd.f32 %v2018, %v2025
  %v2028 = vadd.f32 %v2019, %v2025
  %v2029 = vmax.f32 %v2027, 0.0
  %v2030 = vmax.f32 %v2028, 0.0
  %v2031 = vpack.c.bf16 %v2030, %v2029
  %v2032 = vld [vmem:[%s8] sm:$0xf]
  %v2033 = vld [vmem:[%s8 + $0x4] sm:$0xf]
  %v2034 = vld [vmem:[%s8 + $0x8] sm:$0xf]
  %v2035 = vld [vmem:[%s8 + $0xc] sm:$0xf]
  %v2036 = vld [vmem:[%s8 + $0x10] sm:$0xf]
  %v2037 = vld [vmem:[%s8 + $0x14] sm:$0xf]
  %v2038 = vld [vmem:[%s8 + $0x18] sm:$0xf]
  %v2039 = vld [vmem:[%s8 + $0x1c] sm:$0xf]
  %v2048 = vunpack.c.l.b16 %v2032
  %v2049 = vunpack.c.l.b16 %v2033
  %v2050 = vunpack.c.l.b16 %v2034
  %v2051 = vunpack.c.l.b16 %v2035
  %v2052 = vunpack.c.l.b16 %v2036
  %v2053 = vunpack.c.l.b16 %v2037
  %v2054 = vunpack.c.l.b16 %v2038
  %v2055 = vunpack.c.l.b16 %v2039
  %v2056 = vpack.c.b16 %v2049, %v2048
  %v2057 = vpack.c.b16 %v2051, %v2050
  %v2058 = vpack.c.b16 %v2053, %v2052
  %v2059 = vpack.c.b16 %v2055, %v2054
  %v2065 = vsel %vm138, %v2031, 0
  %2067 = vmatprep.subr.bf16.mxu0 0
  %2068 = vmatpush1.bf16.msra.mxu0 %v2056
  %2069 = vmatprep.subr.bf16.mxu0 0
  %2070 = vmatpush1.bf16.msra.mxu0 %v2057
  %2071 = vmatprep.subr.bf16.mxu0 0
  %2072 = vmatpush1.bf16.msra.mxu0 %v2058
  %2073 = vmatprep.subr.bf16.mxu0 0
  %2074 = vmatpush1.bf16.msra.mxu0 %v2059
  %2075 = vmatprep.subr.bf16.mxu0 0
  %2076 = vmatpush1.bf16.msra.mxu0 0
  %2077 = vmatprep.subr.bf16.mxu0 0
  %2078 = vmatpush1.bf16.msra.mxu0 0
  %2079 = vmatprep.subr.bf16.mxu0 0
  %2080 = vmatpush1.bf16.msra.mxu0 0
  %2081 = vmatprep.subr.bf16.mxu0 0
  %2082 = vmatpush1.bf16.msra.mxu0 0
  %2083 = vmatprep.subr.bf16.mxu0 0
  %2084 = vmatpush1.bf16.msra.mxu0 0
  %2085 = vmatprep.subr.bf16.mxu0 0
  %2086 = vmatpush1.bf16.msra.mxu0 0
  %2087 = vmatprep.subr.bf16.mxu0 0
  %2088 = vmatpush1.bf16.msra.mxu0 0
  %2089 = vmatprep.subr.bf16.mxu0 0
  %2090 = vmatpush1.bf16.msra.mxu0 0
  %2091 = vmatprep.subr.bf16.mxu0 0
  %2092 = vmatpush1.bf16.msra.mxu0 0
  %2093 = vmatprep.subr.bf16.mxu0 0
  %2094 = vmatpush1.bf16.msra.mxu0 0
  %2095 = vmatprep.subr.bf16.mxu0 0
  %2096 = vmatpush1.bf16.msra.mxu0 0
  %2097 = vmatprep.subr.bf16.mxu0 0
  %2098 = vmatpush1.bf16.msra.mxu0 0
  %2099 = vmatprep.mubr.bf16.mxu0 0
  %2100 = vmatmul.mubr.bf16.gmra.mrb[0].mxu0 %v2065
  %v2101 = vpop.f32.mrb[0].mxu0
  %v2102 = vadd.f32 0.0, %v2101
  %v2103 = vpop.f32.mrb[0].mxu0
  %v2104 = vpop.f32.mrb[0].mxu0
  %v2105 = vadd.f32 0.0, %v2104
  %v2106 = vpop.f32.mrb[0].mxu0
  %2107 = vdwg.mxu0
  %v2108 = vpack.c.bf16 %v2105, %v2102
  %v2109 = vld [vmem:[%s9] sm:$0xf]
  %v2111 = vsel %vm310, %v2108, 0
  %vm2113 = vcmask 1043456
  %v2115 = vsel %vm2113, %v2109, 0
  %2117 = vmatprep.subr.bf16.mxu0 0
  %2118 = vmatpush1.bf16.msra.mxu0 %v2115
  %2119 = vmatprep.subr.bf16.mxu0 0
  %2120 = vmatpush1.bf16.msra.mxu0 0
  %2121 = vmatprep.subr.bf16.mxu0 0
  %2122 = vmatpush1.bf16.msra.mxu0 0
  %2123 = vmatprep.subr.bf16.mxu0 0
  %2124 = vmatpush1.bf16.msra.mxu0 0
  %2125 = vmatprep.subr.bf16.mxu0 0
  %2126 = vmatpush1.bf16.msra.mxu0 0
  %2127 = vmatprep.subr.bf16.mxu0 0
  %2128 = vmatpush1.bf16.msra.mxu0 0
  %2129 = vmatprep.subr.bf16.mxu0 0
  %2130 = vmatpush1.bf16.msra.mxu0 0
  %2131 = vmatprep.subr.bf16.mxu0 0
  %2132 = vmatpush1.bf16.msra.mxu0 0
  %2133 = vmatprep.subr.bf16.mxu0 0
  %2134 = vmatpush1.bf16.msra.mxu0 0
  %2135 = vmatprep.subr.bf16.mxu0 0
  %2136 = vmatpush1.bf16.msra.mxu0 0
  %2137 = vmatprep.subr.bf16.mxu0 0
  %2138 = vmatpush1.bf16.msra.mxu0 0
  %2139 = vmatprep.subr.bf16.mxu0 0
  %2140 = vmatpush1.bf16.msra.mxu0 0
  %2141 = vmatprep.subr.bf16.mxu0 0
  %2142 = vmatpush1.bf16.msra.mxu0 0
  %2143 = vmatprep.subr.bf16.mxu0 0
  %2144 = vmatpush1.bf16.msra.mxu0 0
  %2145 = vmatprep.subr.bf16.mxu0 0
  %2146 = vmatpush1.bf16.msra.mxu0 0
  %2147 = vmatprep.subr.bf16.mxu0 0
  %2148 = vmatpush1.bf16.msra.mxu0 0
  %2149 = vmatprep.mubr.bf16.mxu0 0
  %2150 = vmatmul.mubr.bf16.gmra.mrb[0].mxu0 %v2111
  %v2151 = vpop.f32.mrb[0].mxu0
  %v2152 = vadd.f32 0.0, %v2151
  %v2153 = vpop.f32.mrb[0].mxu0
  %v2154 = vpop.f32.mrb[0].mxu0
  %v2155 = vadd.f32 0.0, %v2154
  %v2156 = vpop.f32.mrb[0].mxu0
  %2157 = vdwg.mxu0
  %2160 = vrot.lane.b32.xlu0 %v2152, 127
  %v2161 = vpop.permute.xlu0 %2160
  %2162 = vrot.lane.b32.xlu0 %v2155, 127
  %v2163 = vpop.permute.xlu0 %2162
  %2166 = vxpose.xlu0.b32.start [1/16] %v2161, 128
  %2167 = vxpose.xlu0.b32.cont [2/16] %v2163, 128
  %2168 = vxpose.xlu0.b32.cont [3/16] 0.0, 128
  %2169 = vxpose.xlu0.b32.cont [4/16] 0.0, 128
  %2170 = vxpose.xlu0.b32.cont [5/16] 0.0, 128
  %2171 = vxpose.xlu0.b32.cont [6/16] 0.0, 128
  %2172 = vxpose.xlu0.b32.cont [7/16] 0.0, 128
  %2173 = vxpose.xlu0.b32.cont [8/16] 0.0, 128
  %2174 = vxpose.xlu0.b32.cont [9/16] 0.0, 128
  %2175 = vxpose.xlu0.b32.cont [10/16] 0.0, 128
  %2176 = vxpose.xlu0.b32.cont [11/16] 0.0, 128
  %2177 = vxpose.xlu0.b32.cont [12/16] 0.0, 128
  %2178 = vxpose.xlu0.b32.cont [13/16] 0.0, 128
  %2179 = vxpose.xlu0.b32.cont [14/16] 0.0, 128
  %2180 = vxpose.xlu0.b32.cont [15/16] 0.0, 128
  %2181 = vxpose.xlu0.b32.end [16/16] 0.0, 128
  %v2182 = vpop.trf.xlu0
  %v2183 = vpop.trf.xlu0
  %v2184 = vpop.trf.xlu0
  %v2185 = vpop.trf.xlu0
  %v2186 = vpop.trf.xlu0
  %v2187 = vpop.trf.xlu0
  %v2188 = vpop.trf.xlu0
  %v2189 = vpop.trf.xlu0
  %v2190 = vpop.trf.xlu0
  %v2191 = vpop.trf.xlu0
  %v2192 = vpop.trf.xlu0
  %v2193 = vpop.trf.xlu0
  %v2194 = vpop.trf.xlu0
  %v2195 = vpop.trf.xlu0
  %v2196 = vpop.trf.xlu0
  %v2197 = vpop.trf.xlu0
  %2198 = vset.pattern.permute.xlu0 0
  %2199 = vperm.xlu0 %2198, %v2152
  %v2200 = vpop.permute.xlu0 %2199
  %2202 = vset.pattern.permute.xlu0 0
  %2203 = vperm.xlu0 %2202, %v2155
  %v2204 = vpop.permute.xlu0 %2203
  %v2206 = vlaneseq
  %v2207 = vshrl.u32 %v2206, 7
  %v2208 = vsub.s32 0, %v2207
  %v2209 = vrot.slane %v2182, %v2208
  %v2210 = vadd.f32 %v2200, %v2209
  %v2211 = vadd.f32 %v2204, %v2209
  %v2212 = vmul.f32 %v2210, 0.2
  %v2213 = vmul.f32 %v2211, 0.2
  %v2214 = vmax.f32 %v2210, %v2212
  %v2215 = vmax.f32 %v2211, %v2213
  %v2216 = vadd.f32 %v2214, %v47
  %v2217 = vadd.f32 %v2215, %v48
  %v2218 = vsel %vm60, %v2216, -inf
  %2219 = vmax.xlane.f32.xlu0 %v2218
  %v2220 = vpop.xlane.xlu0 %2219
  %v2221 = vsel %vm60, %v2217, -inf
  %2222 = vmax.xlane.f32.xlu0 %v2221
  %v2223 = vpop.xlane.xlu0 %2222
  %v2224 = vsub.f32 %v2216, %v2220
  %v2225 = vsub.f32 %v2217, %v2223
  %v2226 = vmul.f32 %v2224, 1.442695
  %v2227 = vpow.pop %v2226
  %v2228 = vmul.f32 %v2225, 1.442695
  %v2229 = vpow.pop %v2228
  %v2230 = vsel %vm60, %v2227, 0.0
  %2231 = vadd.xlane.f32.xlu0 %v2230
  %v2232 = vpop.xlane.xlu0 %2231
  %v2233 = vsel %vm60, %v2229, 0.0
  %2234 = vadd.xlane.f32.xlu0 %v2233
  %v2235 = vpop.xlane.xlu0 %2234
  %v2236 = vrcp.pop %v2232
  %v2237 = vrcp.pop %v2235
  %v2238 = vmul.f32 %v2227, %v2236
  %v2239 = vmul.f32 %v2229, %v2237
  %v2240 = vpack.c.bf16 %v2239, %v2238
  %v2241 = vld [vmem:[%s10] sm:$0x1]
  %v2243 = vlaneseq
  %v2244 = vshrl.u32 %v2243, 7
  %v2245 = vsub.s32 0, %v2244
  %v2246 = vrot.slane %v2241, %v2245
  %v2249 = vsel %vm60, %v2240, 0
  %2251 = vmatprep.subr.bf16.mxu0 0
  %2252 = vmatpush1.bf16.msra.mxu0 %v2108
  %2253 = vmatprep.subr.bf16.mxu0 0
  %2254 = vmatpush1.bf16.msra.mxu0 0
  %2255 = vmatprep.subr.bf16.mxu0 0
  %2256 = vmatpush1.bf16.msra.mxu0 0
  %2257 = vmatprep.subr.bf16.mxu0 0
  %2258 = vmatpush1.bf16.msra.mxu0 0
  %2259 = vmatprep.subr.bf16.mxu0 0
  %2260 = vmatpush1.bf16.msra.mxu0 0
  %2261 = vmatprep.subr.bf16.mxu0 0
  %2262 = vmatpush1.bf16.msra.mxu0 0
  %2263 = vmatprep.subr.bf16.mxu0 0
  %2264 = vmatpush1.bf16.msra.mxu0 0
  %2265 = vmatprep.subr.bf16.mxu0 0
  %2266 = vmatpush1.bf16.msra.mxu0 0
  %2267 = vmatprep.subr.bf16.mxu0 0
  %2268 = vmatpush1.bf16.msra.mxu0 0
  %2269 = vmatprep.subr.bf16.mxu0 0
  %2270 = vmatpush1.bf16.msra.mxu0 0
  %2271 = vmatprep.subr.bf16.mxu0 0
  %2272 = vmatpush1.bf16.msra.mxu0 0
  %2273 = vmatprep.subr.bf16.mxu0 0
  %2274 = vmatpush1.bf16.msra.mxu0 0
  %2275 = vmatprep.subr.bf16.mxu0 0
  %2276 = vmatpush1.bf16.msra.mxu0 0
  %2277 = vmatprep.subr.bf16.mxu0 0
  %2278 = vmatpush1.bf16.msra.mxu0 0
  %2279 = vmatprep.subr.bf16.mxu0 0
  %2280 = vmatpush1.bf16.msra.mxu0 0
  %2281 = vmatprep.subr.bf16.mxu0 0
  %2282 = vmatpush1.bf16.msra.mxu0 0
  %2283 = vmatprep.mubr.bf16.mxu0 0
  %2284 = vmatmul.mubr.bf16.gmra.mrb[0].mxu0 %v2249
  %v2285 = vpop.f32.mrb[0].mxu0
  %v2286 = vadd.f32 %v2246, %v2285
  %v2287 = vpop.f32.mrb[0].mxu0
  %v2288 = vpop.f32.mrb[0].mxu0
  %v2289 = vadd.f32 %v2246, %v2288
  %v2290 = vpop.f32.mrb[0].mxu0
  %2291 = vdwg.mxu0
  %v2292 = vmax.f32 %v2286, 0.0
  %v2293 = vmax.f32 %v2289, 0.0
  %2296 = vrot.lane.b32.xlu0 %v2292, 124
  %v2297 = vpop.permute.xlu0 %2296
  %2298 = vrot.lane.b32.xlu0 %v2293, 124
  %v2299 = vpop.permute.xlu0 %2298
  %v2302 = vmax.f32 %v2292, %v2297
  %v2303 = vmax.f32 %v2293, %v2299
  %v2304 = vsub.f32 %v2292, %v2302
  %v2305 = vsub.f32 %v2293, %v2303
  %v2306 = vmul.f32 %v2304, 1.442695
  %v2307 = vpow.pop %v2306
  %v2308 = vmul.f32 %v2305, 1.442695
  %v2309 = vpow.pop %v2308
  %2312 = vrot.lane.b32.xlu0 %v2302, 4
  %v2313 = vpop.permute.xlu0 %2312
  %2314 = vrot.lane.b32.xlu0 %v2303, 4
  %v2315 = vpop.permute.xlu0 %2314
  %v2318 = vsub.f32 %v2292, %v2313
  %v2319 = vsub.f32 %v2293, %v2315
  %v2320 = vmul.f32 %v2318, 1.442695
  %v2321 = vpow.pop %v2320
  %v2322 = vmul.f32 %v2319, 1.442695
  %v2323 = vpow.pop %v2322
  %2326 = vrot.lane.b32.xlu0 %v2321, 124
  %v2327 = vpop.permute.xlu0 %2326
  %2328 = vrot.lane.b32.xlu0 %v2323, 124
  %v2329 = vpop.permute.xlu0 %2328
  %v2332 = vadd.f32 %v2307, %v2327
  %v2333 = vadd.f32 %v2309, %v2329
  %v2334 = vrcp.pop %v2332
  %v2335 = vmul.f32 %v2307, %v2334
  %v2336 = vrcp.pop %v2333
  %v2337 = vmul.f32 %v2309, %v2336
  %vm2338 = vcmask 31744
  %2339 = vst.msk [vmem:[%s11] sm:$0xff] %vm2338, %v2335
  %2340 = vst.msk [vmem:[%s11 + $0x8] sm:$0xff] %vm2338, %v2337
  %2343 = vrot.lane.b32.xlu0 %v2332, 4
  %v2344 = vpop.permute.xlu0 %2343
  %2345 = vrot.lane.b32.xlu0 %v2333, 4
  %v2346 = vpop.permute.xlu0 %2345
  %v2349 = vrcp.pop %v2344
  %v2350 = vmul.f32 %v2321, %v2349
  %v2351 = vrcp.pop %v2346
  %v2352 = vmul.f32 %v2323, %v2351
  %2355 = vrot.lane.b32.xlu0 %v2350, 124
  %v2356 = vpop.permute.xlu0 %2355
  %2357 = vrot.lane.b32.xlu0 %v2352, 124
  %v2358 = vpop.permute.xlu0 %2357
  %2361 = vst.msk [vmem:[%s12] sm:$0xff] %vm2338, %v2356
  %2362 = vst.msk [vmem:[%s12 + $0x8] sm:$0xff] %vm2338, %v2358
  // Predicated region
  $region46: #{tpu_custom_call.1} parent=0 // pred_check
    _
  $region47: #{tpu_custom_call.1} parent=0 // pred_check_branch
    %2364 = sbr.rel (0) target = $region49
  $region48: #{tpu_custom_call.1} parent=0 // pred_region
    _
  $region49: #{tpu_custom_call.1} parent=0 // pred_fallthru
    _
  // Predicated region
  $region50: #{tpu_custom_call.1} parent=0 // pred_check
    _
  $region51: #{tpu_custom_call.1} parent=0 // pred_check_branch
    %2366 = sbr.rel (0) target = $region53
  $region52: #{tpu_custom_call.1} parent=0 // pred_region
    _
  $region53: #{tpu_custom_call.1} parent=0 // pred_fallthru
    _
  // Predicated region
  $region54: #{tpu_custom_call.1} parent=0 // pred_check
    _
  $region55: #{tpu_custom_call.1} parent=0 // pred_check_branch
    %2368 = sbr.rel (0) target = $region57
  $region56: #{tpu_custom_call.1} parent=0 // pred_region
    _
  $region57: #{tpu_custom_call.1} parent=0 // pred_fallthru
    _
  // Predicated region
  $region58: #{tpu_custom_call.1} parent=0 // pred_check
    _
  $region59: #{tpu_custom_call.1} parent=0 // pred_check_branch
    %2370 = sbr.rel (0) target = $region61
  $region60: #{tpu_custom_call.1} parent=0 // pred_region
    _
  $region61: #{tpu_custom_call.1} parent=0 // pred_fallthru
    _

</llo_original>
